<compile_context>
chip_gen: v5e
topology: v5e:2x2
jax: 0.10.0
libtpu: 0.0.40
codegen_flags: <defaults>
</compile_context>

<pallas_src>
import functools
import math

import jax
import jax.numpy as jnp
import numpy as np
from jax import lax
from jax.experimental import pallas as pl
from jax.experimental.pallas import tpu as pltpu


# ---------------------------------------------------------------------------
# Kernel: full 8-layer MLP on one tile of points.
#   pts_ref : [tile_n, in_dim]  f32   (points, in_dim == 3)
#   w0_ref  : [8, D]            f32   (layer 0 weight, zero-padded rows)
#   wh_ref  : [L-2, D, D]       bf16  (hidden layers 1..L-2 weights)
#   bh_ref  : [pad, D]          epi   (biases for layers 0..L-2, sublane padded)
#   wl_ref  : [8, D]            bf16  (final layer weight in row 0, rest zero)
#   bl_ref  : [1, 1]            f32   (final layer bias)
#   out_ref : [1, tile_n]       f32   (lane-dense output row)
# ---------------------------------------------------------------------------
def sdf_kernel(pts_ref, w0_ref, wh_ref, bh_ref, wl_ref, bl_ref, out_ref, *,
               in_dim, n_mid, epi_dtype):
    # ---- Layer 0 (K = in_dim = 3, degenerate for the MXU): f32 VPU broadcast MACs.
    acc0 = pts_ref[:, 0:1] * w0_ref[0:1, :]
    for j in range(1, in_dim):
        acc0 = acc0 + pts_ref[:, j:j + 1] * w0_ref[j:j + 1, :]
    x = jnp.maximum(acc0.astype(epi_dtype) + bh_ref[0:1, :], 0)

    # ---- Hidden layers 1..L-2: bf16 MXU matmul, f32 accumulate, epilogue in epi_dtype.
    for l in range(n_mid):
        acc = jnp.dot(x.astype(jnp.bfloat16), wh_ref[l],
                      preferred_element_type=jnp.float32)
        x = jnp.maximum(acc.astype(epi_dtype) + bh_ref[l + 1:l + 2, :], 0)

    # ---- Final layer (output_dim == 1): wl @ x^T -> lane-dense rows, then Tanh (EUP).
    # Contract over the feature dim of both operands; output is [8, tile_n], row 0 is
    # the real result (wl_ref rows 1..7 are zero padding), so no transpose is needed.
    hrow = lax.dot_general(wl_ref[...], x.astype(jnp.bfloat16),
                           dimension_numbers=(((1,), (1,)), ((), ())),
                           preferred_element_type=jnp.float32)
    out_ref[...] = jnp.tanh(hrow[0:1, :] + bl_ref[...])


# ---------------------------------------------------------------------------
# Epilogue dtype selection: bf16 on bf16-capable VPU/EUP (v6e / v7x), f32 otherwise
# (v5e and older emulate bf16 elementwise, so f32 is the right choice there).
# ---------------------------------------------------------------------------
def _default_epilogue_dtype():
    try:
        kind = jax.devices()[0].device_kind.lower()
    except Exception:
        return jnp.float32
    if "v6" in kind or "v7" in kind or "trillium" in kind:
        return jnp.bfloat16
    return jnp.float32


# ---------------------------------------------------------------------------
# Tile-size selection:
#   * multiple of 128 rows (MXU-friendly M, lane-dense output rows),
#   * large by default (amortize per-grid-step overhead),
#   * capped so the grid has >= 2 steps when the batch allows it, so that
#     dimension_semantics=("parallel",) actually uses both v7x TensorCores.
# ---------------------------------------------------------------------------
def _pick_tile_n(n_rows, requested):
    t = max(128, (int(requested) // 128) * 128)
    if n_rows > 128:
        cap = (((n_rows + 1) // 2) + 127) // 128 * 128  # ~half the batch, 128-aligned
        t = min(t, max(128, cap))
    else:
        t = 128
    return t


# ---------------------------------------------------------------------------
# Wrapper: pick a batch tile, pad N, pack/cast parameters, launch the kernel with
# all (small) parameters resident in VMEM every grid step.
# ---------------------------------------------------------------------------
def sdf_forward(points, params, *, tile_n=1024, epilogue_dtype=None):
    """params: list of (w_eff [in, out] f32, b [out] f32), weight-norm already folded."""
    n_layers = len(params)
    assert n_layers >= 3
    N, in_dim = points.shape
    D = params[0][0].shape[1]
    out_dim = params[-1][0].shape[1]
    assert out_dim == 1, "kernel is specialised for output_dim == 1"
    n_mid = n_layers - 2

    if epilogue_dtype is None:
        epilogue_dtype = _default_epilogue_dtype()
    is_bf16_epi = np.dtype(epilogue_dtype) == np.dtype(jnp.bfloat16)

    tile = _pick_tile_n(N, tile_n)
    n_pad = pl.cdiv(N, tile) * tile
    grid = n_pad // tile

    # ---- host-side parameter prep (one-time; weight-norm already folded) ----
    w0 = jnp.zeros((8, D), jnp.float32).at[:in_dim, :].set(
        params[0][0].astype(jnp.float32))                                  # [8, D]
    wh = jnp.stack([w for (w, _) in params[1:-1]], 0).astype(jnp.bfloat16)  # [L-2,D,D]
    sub = 16 if is_bf16_epi else 8
    row_pad = ((n_layers - 1 + sub - 1) // sub) * sub
    bh = jnp.zeros((row_pad, D), epilogue_dtype).at[:n_layers - 1, :].set(
        jnp.stack([b for (_, b) in params[:-1]], 0).astype(epilogue_dtype))  # [pad, D]
    wl = jnp.zeros((8, D), jnp.bfloat16).at[0, :].set(
        params[-1][0][:, 0].astype(jnp.bfloat16))                          # [8, D]
    bl = params[-1][1].reshape(1, 1).astype(jnp.float32)                   # [1, 1]

    # ---- pad batch to a multiple of the tile (padded tail is sliced off below) ----
    pts = jnp.zeros((n_pad, in_dim), jnp.float32).at[:N, :].set(
        points.astype(jnp.float32))

    in_specs = [
        pl.BlockSpec((tile, in_dim), lambda i: (i, 0)),   # points tile
        pl.BlockSpec(w0.shape, lambda i: (0, 0)),         # resident constants
        pl.BlockSpec(wh.shape, lambda i: (0, 0, 0)),
        pl.BlockSpec(bh.shape, lambda i: (0, 0)),
        pl.BlockSpec(wl.shape, lambda i: (0, 0)),
        pl.BlockSpec(bl.shape, lambda i: (0, 0)),
    ]

    flops = 2 * n_pad * (in_dim * D + n_mid * D * D + 8 * D)
    bytes_accessed = (pts.size * 4 + w0.size * 4 + wh.size * 2
                      + bh.size * (2 if is_bf16_epi else 4)
                      + wl.size * 2 + bl.size * 4 + n_pad * 4)
    cost = pl.CostEstimate(flops=int(flops), transcendentals=int(n_pad),
                           bytes_accessed=int(bytes_accessed))

    kernel = functools.partial(sdf_kernel, in_dim=in_dim, n_mid=n_mid,
                               epi_dtype=epilogue_dtype)

    out = pl.pallas_call(
        kernel,
        out_shape=jax.ShapeDtypeStruct((1, n_pad), jnp.float32),
        grid_spec=pltpu.PrefetchScalarGridSpec(
            num_scalar_prefetch=0,
            grid=(grid,),
            in_specs=in_specs,
            out_specs=pl.BlockSpec((1, tile), lambda i: (0, i)),  # lane-dense rows
        ),
        compiler_params=pltpu.CompilerParams(
            dimension_semantics=("parallel",),   # shards the batch across TCs on v7x
        ),
        cost_estimate=cost,
    )(pts, w0, wh, bh, wl, bl)

    # (1, n_pad) -> (N, 1); padded tail rows carry tanh(bias-only) garbage and are dropped.
    return out.reshape(n_pad, 1)[:N]


# ---------------------------------------------------------------------------
# Deterministic parameter init mimicking nn.Linear + nn.utils.weight_norm.
#   PyTorch Linear init: U(-1/sqrt(in), 1/sqrt(in)) for weight and bias.
#   weight_norm(dim=0):  W_eff[i, :] = g[i] * v[i, :] / ||v[i, :]||,  g init = ||v[i, :]||.
# ---------------------------------------------------------------------------
def init_weight_norm_linear(key, in_dim, out_dim):
    kw, kb = jax.random.split(key)
    bound = 1.0 / math.sqrt(in_dim)
    v = jax.random.uniform(kw, (out_dim, in_dim), jnp.float32, -bound, bound)
    b = jax.random.uniform(kb, (out_dim,), jnp.float32, -bound, bound)
    row_norm = jnp.sqrt(jnp.sum(v * v, axis=1, keepdims=True))  # [out, 1]
    g = row_norm                                                # weight_norm's g init
    w_eff = g * v / row_norm                                    # reparam (host-side fold)
    return w_eff.T, b                                           # [in, out], [out]


def build_sdf_params(key, input_dim=3, inner_dim=128, output_dim=1):
    params = []
    d_in = input_dim
    for _ in range(7):
        key, sub = jax.random.split(key)
        params.append(init_weight_norm_linear(sub, d_in, inner_dim))
        d_in = inner_dim
    key, sub = jax.random.split(key)
    params.append(init_weight_norm_linear(sub, d_in, output_dim))
    return params


# Pure-JAX f32 reference for correctness checking.
def sdf_reference(points, params):
    x = points.astype(jnp.float32)
    for l, (w, b) in enumerate(params):
        h = x @ w + b
        x = jnp.maximum(h, 0.0) if l < len(params) - 1 else jnp.tanh(h)
    return x


if __name__ == "__main__":
    key = jax.random.PRNGKey(0)
    k_pts, k_par = jax.random.split(key)

    N, INPUT_DIM, INNER_DIM, OUTPUT_DIM = 1000, 3, 128, 1
    points = jax.random.normal(k_pts, (N, INPUT_DIM), jnp.float32)
    params = build_sdf_params(k_par, INPUT_DIM, INNER_DIM, OUTPUT_DIM)

    sdf = sdf_forward(points, params)          # tile auto-picked: 512 rows, grid = 2
    sdf = jax.block_until_ready(sdf)
    assert sdf.shape == (N, OUTPUT_DIM)

    ref = sdf_reference(points, params)
    # bf16 matmul inputs (f32 accumulation) compound across 8 layers -> loose compare.
    np.testing.assert_allclose(np.asarray(sdf), np.asarray(ref), rtol=2e-2, atol=1e-2)

    print("KERNEL_OK")
</pallas_src>

<mosaic_0001>
module attributes {stable_mosaic.version = 11 : i64} {
  func.func @sdf_kernel(%arg0: i32, %arg1: memref<512x3xf32, #tpu.memory_space<vmem>>, %arg2: memref<8x128xf32, #tpu.memory_space<vmem>>, %arg3: memref<6x128x128xbf16, #tpu.memory_space<vmem>>, %arg4: memref<8x128xf32, #tpu.memory_space<vmem>>, %arg5: memref<8x128xbf16, #tpu.memory_space<vmem>>, %arg6: memref<1x1xf32, #tpu.memory_space<vmem>>, %arg7: memref<1x512xf32, #tpu.memory_space<vmem>>) attributes {dimension_semantics = [#tpu.dimension_semantics<parallel>], iteration_bounds = array<i64: 2>, scalar_prefetch = 0 : i64, scratch_operands = 0 : i64, tpu.core_type = #tpu.core_type<tc>, window_params = [{transform_indices = @transform_0, window_bounds = array<i64: 512, 3>}, {pipeline_mode = #tpu.pipeline_mode<synchronous>, transform_indices = @transform_1, window_bounds = array<i64: 8, 128>}, {pipeline_mode = #tpu.pipeline_mode<synchronous>, transform_indices = @transform_2, window_bounds = array<i64: 6, 128, 128>}, {pipeline_mode = #tpu.pipeline_mode<synchronous>, transform_indices = @transform_3, window_bounds = array<i64: 8, 128>}, {pipeline_mode = #tpu.pipeline_mode<synchronous>, transform_indices = @transform_4, window_bounds = array<i64: 8, 128>}, {pipeline_mode = #tpu.pipeline_mode<synchronous>, transform_indices = @transform_5, window_bounds = array<i64: 1, 1>}, {transform_indices = @transform_6, window_bounds = array<i64: 1, 512>}]} {
    %c0 = arith.constant 0 : index
    %c0_0 = arith.constant 0 : index
    %0 = vector.load %arg1[%c0, %c0_0] : memref<512x3xf32, #tpu.memory_space<vmem>>, vector<512x1xf32>
    %c0_1 = arith.constant 0 : index
    %c0_2 = arith.constant 0 : index
    %1 = vector.load %arg2[%c0_1, %c0_2] : memref<8x128xf32, #tpu.memory_space<vmem>>, vector<1x128xf32>
    %2 = vector.broadcast %0 : vector<512x1xf32> to vector<512x128xf32>
    %3 = vector.broadcast %1 : vector<1x128xf32> to vector<512x128xf32>
    %4 = arith.mulf %2, %3 : vector<512x128xf32>
    %c0_3 = arith.constant 0 : index
    %c1 = arith.constant 1 : index
    %5 = vector.load %arg1[%c0_3, %c1] : memref<512x3xf32, #tpu.memory_space<vmem>>, vector<512x1xf32>
    %c1_4 = arith.constant 1 : index
    %c0_5 = arith.constant 0 : index
    %6 = vector.load %arg2[%c1_4, %c0_5] : memref<8x128xf32, #tpu.memory_space<vmem>>, vector<1x128xf32>
    %7 = vector.broadcast %5 : vector<512x1xf32> to vector<512x128xf32>
    %8 = vector.broadcast %6 : vector<1x128xf32> to vector<512x128xf32>
    %9 = arith.mulf %7, %8 : vector<512x128xf32>
    %10 = arith.addf %4, %9 : vector<512x128xf32>
    %c0_6 = arith.constant 0 : index
    %c2 = arith.constant 2 : index
    %11 = vector.load %arg1[%c0_6, %c2] : memref<512x3xf32, #tpu.memory_space<vmem>>, vector<512x1xf32>
    %c2_7 = arith.constant 2 : index
    %c0_8 = arith.constant 0 : index
    %12 = vector.load %arg2[%c2_7, %c0_8] : memref<8x128xf32, #tpu.memory_space<vmem>>, vector<1x128xf32>
    %13 = vector.broadcast %11 : vector<512x1xf32> to vector<512x128xf32>
    %14 = vector.broadcast %12 : vector<1x128xf32> to vector<512x128xf32>
    %15 = arith.mulf %13, %14 : vector<512x128xf32>
    %16 = arith.addf %10, %15 : vector<512x128xf32>
    %c0_9 = arith.constant 0 : index
    %c0_10 = arith.constant 0 : index
    %17 = vector.load %arg4[%c0_9, %c0_10] : memref<8x128xf32, #tpu.memory_space<vmem>>, vector<1x128xf32>
    %18 = vector.broadcast %17 : vector<1x128xf32> to vector<512x128xf32>
    %19 = arith.addf %16, %18 : vector<512x128xf32>
    %cst = arith.constant 0.000000e+00 : f32
    %20 = vector.broadcast %cst : f32 to vector<512x128xf32>
    %21 = arith.maximumf %19, %20 : vector<512x128xf32>
    %22 = arith.truncf %21 : vector<512x128xf32> to vector<512x128xbf16>
    %c0_11 = arith.constant 0 : index
    %c0_12 = arith.constant 0 : index
    %c0_13 = arith.constant 0 : index
    %23 = vector.load %arg3[%c0_11, %c0_12, %c0_13] : memref<6x128x128xbf16, #tpu.memory_space<vmem>>, vector<1x128x128xbf16>
    %24 = vector.shape_cast %23 : vector<1x128x128xbf16> to vector<128x128xbf16>
    %cst_14 = arith.constant dense<0.000000e+00> : vector<512x128xf32>
    %25 = tpu.matmul %22, %24, %cst_14 {dimension_numbers = #tpu.dot_dimension_numbers<[1], [0], [0], [1], [0, 0, 1, 1], [], []>} : vector<512x128xbf16>, vector<128x128xbf16>, vector<512x128xf32> -> vector<512x128xf32>
    %c1_15 = arith.constant 1 : index
    %c0_16 = arith.constant 0 : index
    %26 = vector.load %arg4[%c1_15, %c0_16] : memref<8x128xf32, #tpu.memory_space<vmem>>, vector<1x128xf32>
    %27 = vector.broadcast %26 : vector<1x128xf32> to vector<512x128xf32>
    %28 = arith.addf %25, %27 : vector<512x128xf32>
    %cst_17 = arith.constant 0.000000e+00 : f32
    %29 = vector.broadcast %cst_17 : f32 to vector<512x128xf32>
    %30 = arith.maximumf %28, %29 : vector<512x128xf32>
    %31 = arith.truncf %30 : vector<512x128xf32> to vector<512x128xbf16>
    %c1_18 = arith.constant 1 : index
    %c0_19 = arith.constant 0 : index
    %c0_20 = arith.constant 0 : index
    %32 = vector.load %arg3[%c1_18, %c0_19, %c0_20] : memref<6x128x128xbf16, #tpu.memory_space<vmem>>, vector<1x128x128xbf16>
    %33 = vector.shape_cast %32 : vector<1x128x128xbf16> to vector<128x128xbf16>
    %cst_21 = arith.constant dense<0.000000e+00> : vector<512x128xf32>
    %34 = tpu.matmul %31, %33, %cst_21 {dimension_numbers = #tpu.dot_dimension_numbers<[1], [0], [0], [1], [0, 0, 1, 1], [], []>} : vector<512x128xbf16>, vector<128x128xbf16>, vector<512x128xf32> -> vector<512x128xf32>
    %c2_22 = arith.constant 2 : index
    %c0_23 = arith.constant 0 : index
    %35 = vector.load %arg4[%c2_22, %c0_23] : memref<8x128xf32, #tpu.memory_space<vmem>>, vector<1x128xf32>
    %36 = vector.broadcast %35 : vector<1x128xf32> to vector<512x128xf32>
    %37 = arith.addf %34, %36 : vector<512x128xf32>
    %cst_24 = arith.constant 0.000000e+00 : f32
    %38 = vector.broadcast %cst_24 : f32 to vector<512x128xf32>
    %39 = arith.maximumf %37, %38 : vector<512x128xf32>
    %40 = arith.truncf %39 : vector<512x128xf32> to vector<512x128xbf16>
    %c2_25 = arith.constant 2 : index
    %c0_26 = arith.constant 0 : index
    %c0_27 = arith.constant 0 : index
    %41 = vector.load %arg3[%c2_25, %c0_26, %c0_27] : memref<6x128x128xbf16, #tpu.memory_space<vmem>>, vector<1x128x128xbf16>
    %42 = vector.shape_cast %41 : vector<1x128x128xbf16> to vector<128x128xbf16>
    %cst_28 = arith.constant dense<0.000000e+00> : vector<512x128xf32>
    %43 = tpu.matmul %40, %42, %cst_28 {dimension_numbers = #tpu.dot_dimension_numbers<[1], [0], [0], [1], [0, 0, 1, 1], [], []>} : vector<512x128xbf16>, vector<128x128xbf16>, vector<512x128xf32> -> vector<512x128xf32>
    %c3 = arith.constant 3 : index
    %c0_29 = arith.constant 0 : index
    %44 = vector.load %arg4[%c3, %c0_29] : memref<8x128xf32, #tpu.memory_space<vmem>>, vector<1x128xf32>
    %45 = vector.broadcast %44 : vector<1x128xf32> to vector<512x128xf32>
    %46 = arith.addf %43, %45 : vector<512x128xf32>
    %cst_30 = arith.constant 0.000000e+00 : f32
    %47 = vector.broadcast %cst_30 : f32 to vector<512x128xf32>
    %48 = arith.maximumf %46, %47 : vector<512x128xf32>
    %49 = arith.truncf %48 : vector<512x128xf32> to vector<512x128xbf16>
    %c3_31 = arith.constant 3 : index
    %c0_32 = arith.constant 0 : index
    %c0_33 = arith.constant 0 : index
    %50 = vector.load %arg3[%c3_31, %c0_32, %c0_33] : memref<6x128x128xbf16, #tpu.memory_space<vmem>>, vector<1x128x128xbf16>
    %51 = vector.shape_cast %50 : vector<1x128x128xbf16> to vector<128x128xbf16>
    %cst_34 = arith.constant dense<0.000000e+00> : vector<512x128xf32>
    %52 = tpu.matmul %49, %51, %cst_34 {dimension_numbers = #tpu.dot_dimension_numbers<[1], [0], [0], [1], [0, 0, 1, 1], [], []>} : vector<512x128xbf16>, vector<128x128xbf16>, vector<512x128xf32> -> vector<512x128xf32>
    %c4 = arith.constant 4 : index
    %c0_35 = arith.constant 0 : index
    %53 = vector.load %arg4[%c4, %c0_35] : memref<8x128xf32, #tpu.memory_space<vmem>>, vector<1x128xf32>
    %54 = vector.broadcast %53 : vector<1x128xf32> to vector<512x128xf32>
    %55 = arith.addf %52, %54 : vector<512x128xf32>
    %cst_36 = arith.constant 0.000000e+00 : f32
    %56 = vector.broadcast %cst_36 : f32 to vector<512x128xf32>
    %57 = arith.maximumf %55, %56 : vector<512x128xf32>
    %58 = arith.truncf %57 : vector<512x128xf32> to vector<512x128xbf16>
    %c4_37 = arith.constant 4 : index
    %c0_38 = arith.constant 0 : index
    %c0_39 = arith.constant 0 : index
    %59 = vector.load %arg3[%c4_37, %c0_38, %c0_39] : memref<6x128x128xbf16, #tpu.memory_space<vmem>>, vector<1x128x128xbf16>
    %60 = vector.shape_cast %59 : vector<1x128x128xbf16> to vector<128x128xbf16>
    %cst_40 = arith.constant dense<0.000000e+00> : vector<512x128xf32>
    %61 = tpu.matmul %58, %60, %cst_40 {dimension_numbers = #tpu.dot_dimension_numbers<[1], [0], [0], [1], [0, 0, 1, 1], [], []>} : vector<512x128xbf16>, vector<128x128xbf16>, vector<512x128xf32> -> vector<512x128xf32>
    %c5 = arith.constant 5 : index
    %c0_41 = arith.constant 0 : index
    %62 = vector.load %arg4[%c5, %c0_41] : memref<8x128xf32, #tpu.memory_space<vmem>>, vector<1x128xf32>
    %63 = vector.broadcast %62 : vector<1x128xf32> to vector<512x128xf32>
    %64 = arith.addf %61, %63 : vector<512x128xf32>
    %cst_42 = arith.constant 0.000000e+00 : f32
    %65 = vector.broadcast %cst_42 : f32 to vector<512x128xf32>
    %66 = arith.maximumf %64, %65 : vector<512x128xf32>
    %67 = arith.truncf %66 : vector<512x128xf32> to vector<512x128xbf16>
    %c5_43 = arith.constant 5 : index
    %c0_44 = arith.constant 0 : index
    %c0_45 = arith.constant 0 : index
    %68 = vector.load %arg3[%c5_43, %c0_44, %c0_45] : memref<6x128x128xbf16, #tpu.memory_space<vmem>>, vector<1x128x128xbf16>
    %69 = vector.shape_cast %68 : vector<1x128x128xbf16> to vector<128x128xbf16>
    %cst_46 = arith.constant dense<0.000000e+00> : vector<512x128xf32>
    %70 = tpu.matmul %67, %69, %cst_46 {dimension_numbers = #tpu.dot_dimension_numbers<[1], [0], [0], [1], [0, 0, 1, 1], [], []>} : vector<512x128xbf16>, vector<128x128xbf16>, vector<512x128xf32> -> vector<512x128xf32>
    %c6 = arith.constant 6 : index
    %c0_47 = arith.constant 0 : index
    %71 = vector.load %arg4[%c6, %c0_47] : memref<8x128xf32, #tpu.memory_space<vmem>>, vector<1x128xf32>
    %72 = vector.broadcast %71 : vector<1x128xf32> to vector<512x128xf32>
    %73 = arith.addf %70, %72 : vector<512x128xf32>
    %cst_48 = arith.constant 0.000000e+00 : f32
    %74 = vector.broadcast %cst_48 : f32 to vector<512x128xf32>
    %75 = arith.maximumf %73, %74 : vector<512x128xf32>
    %c0_49 = arith.constant 0 : index
    %c0_50 = arith.constant 0 : index
    %76 = vector.load %arg5[%c0_49, %c0_50] : memref<8x128xbf16, #tpu.memory_space<vmem>>, vector<8x128xbf16>
    %77 = arith.truncf %75 : vector<512x128xf32> to vector<512x128xbf16>
    %cst_51 = arith.constant dense<0.000000e+00> : vector<8x512xf32>
    %78 = tpu.matmul %76, %77, %cst_51 {dimension_numbers = #tpu.dot_dimension_numbers<[1], [1], [0], [0], [0, 0, 1, 0], [], []>} : vector<8x128xbf16>, vector<512x128xbf16>, vector<8x512xf32> -> vector<8x512xf32>
    %79 = vector.extract_strided_slice %78 {offsets = [0, 0], sizes = [1, 512], strides = [1, 1]} : vector<8x512xf32> to vector<1x512xf32>
    %c0_52 = arith.constant 0 : index
    %c0_53 = arith.constant 0 : index
    %80 = vector.load %arg6[%c0_52, %c0_53] : memref<1x1xf32, #tpu.memory_space<vmem>>, vector<1x1xf32>
    %81 = vector.broadcast %80 : vector<1x1xf32> to vector<1x512xf32>
    %82 = arith.addf %79, %81 : vector<1x512xf32>
    %83 = math.tanh %82 : vector<1x512xf32>
    %c0_54 = arith.constant 0 : index
    %c0_55 = arith.constant 0 : index
    %84 = vector.load %arg7[%c0_54, %c0_55] : memref<1x512xf32, #tpu.memory_space<vmem>>, vector<1x512xf32>
    tpu.vector_store %arg7[%c0_54, %c0_55], %83 {strides = array<i32>} : memref<1x512xf32, #tpu.memory_space<vmem>>, vector<1x512xf32>,
    return
  }
  func.func @transform_0(%arg0: i32) -> (i32, i32) {
    %c0_i32 = arith.constant 0 : i32
    %c0_i32_0 = arith.constant 0 : i32
    return %arg0, %c0_i32 : i32, i32
  }
  func.func @transform_1(%arg0: i32) -> (i32, i32) {
    %c0_i32 = arith.constant 0 : i32
    %c0_i32_0 = arith.constant 0 : i32
    %c0_i32_1 = arith.constant 0 : i32
    return %c0_i32, %c0_i32_0 : i32, i32
  }
  func.func @transform_2(%arg0: i32) -> (i32, i32, i32) {
    %c0_i32 = arith.constant 0 : i32
    %c0_i32_0 = arith.constant 0 : i32
    %c0_i32_1 = arith.constant 0 : i32
    %c0_i32_2 = arith.constant 0 : i32
    return %c0_i32, %c0_i32_0, %c0_i32_1 : i32, i32, i32
  }
  func.func @transform_3(%arg0: i32) -> (i32, i32) {
    %c0_i32 = arith.constant 0 : i32
    %c0_i32_0 = arith.constant 0 : i32
    %c0_i32_1 = arith.constant 0 : i32
    return %c0_i32, %c0_i32_0 : i32, i32
  }
  func.func @transform_4(%arg0: i32) -> (i32, i32) {
    %c0_i32 = arith.constant 0 : i32
    %c0_i32_0 = arith.constant 0 : i32
    %c0_i32_1 = arith.constant 0 : i32
    return %c0_i32, %c0_i32_0 : i32, i32
  }
  func.func @transform_5(%arg0: i32) -> (i32, i32) {
    %c0_i32 = arith.constant 0 : i32
    %c0_i32_0 = arith.constant 0 : i32
    %c0_i32_1 = arith.constant 0 : i32
    return %c0_i32, %c0_i32_0 : i32, i32
  }
  func.func @transform_6(%arg0: i32) -> (i32, i32) {
    %c0_i32 = arith.constant 0 : i32
    %c0_i32_0 = arith.constant 0 : i32
    return %c0_i32, %arg0 : i32, i32
  }
}

</mosaic_0001>

<llo_original>
// kernel: tpu_custom_call.1
$region0: #{tpu_custom_call.1}
  #allocation0 [shape = 'u32[]', space=smem, size = 0x4, offset = 0x4, fixed_abs, tag = 'smem constant byte address 0x4 - core index']
  #allocation1 [shape = 'u32[72,128]{1,0:T(1,128)}', space=vmem, size = 0x9000, scoped, tag = 'internal scratch']
  #allocation2 [shape = 'f32[1,1]{1,0:T(1,128)S(1)}', space=vmem, size = 0x200, scoped, tag = 'scoped memory for tpu_custom_call.1']
  %s0 = inlined_call_operand.vmem [shape: f32[1024,3], index: 0, kind: input, shape index: {}]
  %s1 = inlined_call_operand.vmem [shape: f32[8,128], index: 1, kind: input, shape index: {}]
  %s2 = inlined_call_operand.vmem [shape: bf16[6,128,128], index: 2, kind: input, shape index: {}]
  %s3 = inlined_call_operand.vmem [shape: f32[8,128], index: 3, kind: input, shape index: {}]
  %s4 = inlined_call_operand.vmem [shape: bf16[8,128], index: 4, kind: input, shape index: {}]
  %s5 = inlined_call_operand.<no memory space> [shape: f32[1,1], index: 5, kind: input, shape index: {}]
  %s6 = inlined_call_operand.hbm [shape: f32[1,1024], index: 6, kind: output, shape index: {}]
  %s7 = sld [smem:[#allocation0]]
  $region57: #{tpu_custom_call.1} parent=0
    _
  %s9 = ssub.s32 1, %s7
  %s10 = scalar_select 0, %s9, %s7
  %v11 = vstv %s5
  %12 = vst [vmem:[#allocation2] sm:$0x1] %v11
  $region1: #{tpu_custom_call.1} parent=0
    #allocation3 [shape = 'u8[4096]{0}', space=vmem, size = 0x1000, scoped, tag = 'output window, operand 0']
    #allocation4 [shape = 's32[2]{0}', space=sflag, size = 0x8, scoped, tag = 'scoped memory for tpu_custom_call.1']
    %13 = vsyncpa [#allocation4], 0
    %s14 = scalar_lea.sflag [#allocation4], 1
    %15 = vsyncpa %s14, 0
    loop: start=0, step=1, limit=4
    $region2: #{tpu_custom_call.1} parent=1 // loop_pre_header
      _
    $region3: #{tpu_custom_call.1} parent=1 // loop_header
      %s17 = sphi 0, %s21
      %p18 = scmp.ge.s32.totalorder %s17, 4
      %s27 = sphi 0, %s29
      %s30 = sphi 0, %s27
      %s31 = sphi 0, %s30
      %s47 = sphi 0, %s31
      %s51 = sphi 0, %s51
      %s53 = sphi 0, %s51
      %s54 = sphi 0, %s53
      %s68 = sphi 0, %s54
      %s72 = sphi 0, %s72
      %s74 = sphi 0, %s72
      %s75 = sphi 0, %s74
      %s89 = sphi 0, %s75
      %s93 = sphi 0, %s93
      %s95 = sphi 0, %s93
      %s96 = sphi 0, %s95
      %s110 = sphi 0, %s96
      %s114 = sphi 0, %s114
      %s116 = sphi 0, %s114
      %s117 = sphi 0, %s116
      %s131 = sphi 0, %s117
      %s135 = sphi 0, %s135
      %s137 = sphi 0, %s135
      %s138 = sphi 0, %s137
      %s152 = sphi 0, %s138
      %s158 = sphi 0, %s160
      %s161 = sphi 0, %s158
      %s162 = sphi 0, %s161
      %s178 = sphi 0, %s162
    $region4: #{tpu_custom_call.1} parent=1 // loop_header_branch
      %20 = sbr.rel (%p18) target = $region8
    $region5: #{tpu_custom_call.1} parent=1 // loop_body
      %s22 = ssub.s32 %s17, 1
      %s23 = ssub.s32 %s17, 2
      %s24 = sadd.s32 %s17, 1
      %s25 = ssub.s32 %s17, %s24
      %p26 = scmp.eq.s32.totalorder %s25, 0
      %s28 = sadd.s32 %s27, 1
      %s29 = scalar_select %p26, %s27, %s28
      %p32 = pneg %p26
      %p33 = scmp.eq.s32.totalorder %s17, 1
      %p34 = por %p32, %p33
      %p35 = scmp.ne.s32.totalorder %s27, %s30
      %p36 = scmp.eq.s32.totalorder %s17, 0
      %p37 = por %p35, %p36
      %p38 = scmp.ne.s32.totalorder %s27, %s30
      %p39 = scmp.eq.s32.totalorder %s22, 1
      %p40 = por %p38, %p39
      %p41 = scmp.ne.s32.totalorder %s30, %s31
      %p42 = scmp.eq.s32.totalorder %s22, 0
      %p43 = por %p41, %p42
      %p44 = scmp.ne.s32.totalorder %s30, %s31
      %p45 = scmp.eq.s32.totalorder %s23, 1
      %p46 = por %p44, %p45
      %p48 = scmp.ne.s32.totalorder %s31, %s47
      %p49 = scmp.eq.s32.totalorder %s23, 0
      %p50 = por %p48, %p49
      %s52 = sadd.s32 %s51, 1
      %p55 = scmp.eq.s32.totalorder %s17, 1
      %p56 = scmp.ne.s32.totalorder %s51, %s53
      %p57 = scmp.eq.s32.totalorder %s17, 0
      %p58 = por %p56, %p57
      %p59 = scmp.ne.s32.totalorder %s51, %s53
      %p60 = scmp.eq.s32.totalorder %s22, 1
      %p61 = por %p59, %p60
      %p62 = scmp.ne.s32.totalorder %s53, %s54
      %p63 = scmp.eq.s32.totalorder %s22, 0
      %p64 = por %p62, %p63
      %p65 = scmp.ne.s32.totalorder %s53, %s54
      %p66 = scmp.eq.s32.totalorder %s23, 1
      %p67 = por %p65, %p66
      %p69 = scmp.ne.s32.totalorder %s54, %s68
      %p70 = scmp.eq.s32.totalorder %s23, 0
      %p71 = por %p69, %p70
      %s73 = sadd.s32 %s72, 1
      %p76 = scmp.eq.s32.totalorder %s17, 1
      %p77 = scmp.ne.s32.totalorder %s72, %s74
      %p78 = scmp.eq.s32.totalorder %s17, 0
      %p79 = por %p77, %p78
      %p80 = scmp.ne.s32.totalorder %s72, %s74
      %p81 = scmp.eq.s32.totalorder %s22, 1
      %p82 = por %p80, %p81
      %p83 = scmp.ne.s32.totalorder %s74, %s75
      %p84 = scmp.eq.s32.totalorder %s22, 0
      %p85 = por %p83, %p84
      %p86 = scmp.ne.s32.totalorder %s74, %s75
      %p87 = scmp.eq.s32.totalorder %s23, 1
      %p88 = por %p86, %p87
      %p90 = scmp.ne.s32.totalorder %s75, %s89
      %p91 = scmp.eq.s32.totalorder %s23, 0
      %p92 = por %p90, %p91
      %s94 = sadd.s32 %s93, 1
      %p97 = scmp.eq.s32.totalorder %s17, 1
      %p98 = scmp.ne.s32.totalorder %s93, %s95
      %p99 = scmp.eq.s32.totalorder %s17, 0
      %p100 = por %p98, %p99
      %p101 = scmp.ne.s32.totalorder %s93, %s95
      %p102 = scmp.eq.s32.totalorder %s22, 1
      %p103 = por %p101, %p102
      %p104 = scmp.ne.s32.totalorder %s95, %s96
      %p105 = scmp.eq.s32.totalorder %s22, 0
      %p106 = por %p104, %p105
      %p107 = scmp.ne.s32.totalorder %s95, %s96
      %p108 = scmp.eq.s32.totalorder %s23, 1
      %p109 = por %p107, %p108
      %p111 = scmp.ne.s32.totalorder %s96, %s110
      %p112 = scmp.eq.s32.totalorder %s23, 0
      %p113 = por %p111, %p112
      %s115 = sadd.s32 %s114, 1
      %p118 = scmp.eq.s32.totalorder %s17, 1
      %p119 = scmp.ne.s32.totalorder %s114, %s116
      %p120 = scmp.eq.s32.totalorder %s17, 0
      %p121 = por %p119, %p120
      %p122 = scmp.ne.s32.totalorder %s114, %s116
      %p123 = scmp.eq.s32.totalorder %s22, 1
      %p124 = por %p122, %p123
      %p125 = scmp.ne.s32.totalorder %s116, %s117
      %p126 = scmp.eq.s32.totalorder %s22, 0
      %p127 = por %p125, %p126
      %p128 = scmp.ne.s32.totalorder %s116, %s117
      %p129 = scmp.eq.s32.totalorder %s23, 1
      %p130 = por %p128, %p129
      %p132 = scmp.ne.s32.totalorder %s117, %s131
      %p133 = scmp.eq.s32.totalorder %s23, 0
      %p134 = por %p132, %p133
      %s136 = sadd.s32 %s135, 1
      %p139 = scmp.eq.s32.totalorder %s17, 1
      %p140 = scmp.ne.s32.totalorder %s135, %s137
      %p141 = scmp.eq.s32.totalorder %s17, 0
      %p142 = por %p140, %p141
      %p143 = scmp.ne.s32.totalorder %s135, %s137
      %p144 = scmp.eq.s32.totalorder %s22, 1
      %p145 = por %p143, %p144
      %p146 = scmp.ne.s32.totalorder %s137, %s138
      %p147 = scmp.eq.s32.totalorder %s22, 0
      %p148 = por %p146, %p147
      %p149 = scmp.ne.s32.totalorder %s137, %s138
      %p150 = scmp.eq.s32.totalorder %s23, 1
      %p151 = por %p149, %p150
      %p153 = scmp.ne.s32.totalorder %s138, %s152
      %p154 = scmp.eq.s32.totalorder %s23, 0
      %p155 = por %p153, %p154
      %s156 = ssub.s32 %s17, %s24
      %p157 = scmp.eq.s32.totalorder %s156, 0
      %s159 = sadd.s32 %s158, 1
      %s160 = scalar_select %p157, %s158, %s159
      %p163 = pneg %p157
      %p164 = scmp.eq.s32.totalorder %s17, 1
      %p165 = por %p163, %p164
      %p166 = scmp.ne.s32.totalorder %s158, %s161
      %p167 = scmp.eq.s32.totalorder %s17, 0
      %p168 = por %p166, %p167
      %p169 = scmp.ne.s32.totalorder %s158, %s161
      %p170 = scmp.eq.s32.totalorder %s22, 1
      %p171 = por %p169, %p170
      %p172 = scmp.ne.s32.totalorder %s161, %s162
      %p173 = scmp.eq.s32.totalorder %s22, 0
      %p174 = por %p172, %p173
      %p175 = scmp.ne.s32.totalorder %s161, %s162
      %p176 = scmp.eq.s32.totalorder %s23, 1
      %p177 = por %p175, %p176
      %p179 = scmp.ne.s32.totalorder %s162, %s178
      %p180 = scmp.eq.s32.totalorder %s23, 0
      %p181 = por %p179, %p180
      %p182 = scmp.le.s32.totalorder 1, %s17
      %p183 = scmp.lt.s32.totalorder %s17, 3
      %p184 = pnand %p182, %p183
      %p185 = pneg %p184
      // Predicated region
      $region9: #{tpu_custom_call.1} parent=5 // pred_check
        _
      $region10: #{tpu_custom_call.1} parent=5 // pred_check_branch
        %187 = sbr.rel (%p184) target = $region12
      $region11: #{tpu_custom_call.1} parent=5 // pred_region
        %s188 = ssub.s32 %s17, 1
        // Predicated region
        $region13: #{tpu_custom_call.1} parent=11 // pred_check
          %p189 = pneg %p64
        $region14: #{tpu_custom_call.1} parent=11 // pred_check_branch
          %191 = sbr.rel (%p189) target = $region16
        $region15: #{tpu_custom_call.1} parent=11 // pred_region
          _
        $region16: #{tpu_custom_call.1} parent=11 // pred_fallthru
          _
        // Predicated region
        $region17: #{tpu_custom_call.1} parent=11 // pred_check
          %p192 = pneg %p85
        $region18: #{tpu_custom_call.1} parent=11 // pred_check_branch
          %194 = sbr.rel (%p192) target = $region20
        $region19: #{tpu_custom_call.1} parent=11 // pred_region
          _
        $region20: #{tpu_custom_call.1} parent=11 // pred_fallthru
          _
        // Predicated region
        $region21: #{tpu_custom_call.1} parent=11 // pred_check
          %p195 = pneg %p106
        $region22: #{tpu_custom_call.1} parent=11 // pred_check_branch
          %197 = sbr.rel (%p195) target = $region24
        $region23: #{tpu_custom_call.1} parent=11 // pred_region
          _
        $region24: #{tpu_custom_call.1} parent=11 // pred_fallthru
          _
        // Predicated region
        $region25: #{tpu_custom_call.1} parent=11 // pred_check
          %p198 = pneg %p127
        $region26: #{tpu_custom_call.1} parent=11 // pred_check_branch
          %200 = sbr.rel (%p198) target = $region28
        $region27: #{tpu_custom_call.1} parent=11 // pred_region
          _
        $region28: #{tpu_custom_call.1} parent=11 // pred_fallthru
          _
        // Predicated region
        $region29: #{tpu_custom_call.1} parent=11 // pred_check
          %p201 = pneg %p148
        $region30: #{tpu_custom_call.1} parent=11 // pred_check_branch
          %203 = sbr.rel (%p201) target = $region32
        $region31: #{tpu_custom_call.1} parent=11 // pred_region
          _
        $region32: #{tpu_custom_call.1} parent=11 // pred_fallthru
          _
      $region12: #{tpu_custom_call.1} parent=5 // pred_fallthru
        _
      %p204 = scmp.lt.s32.totalorder %s17, 2
      // Predicated region
      $region33: #{tpu_custom_call.1} parent=5 // pred_check
        %p205 = pneg %p204
      $region34: #{tpu_custom_call.1} parent=5 // pred_check_branch
        %207 = sbr.rel (%p205) target = $region36
      $region35: #{tpu_custom_call.1} parent=5 // pred_region
        // Predicated region
        $region37: #{tpu_custom_call.1} parent=35 // pred_check
          %p208 = pneg %p37
        $region38: #{tpu_custom_call.1} parent=35 // pred_check_branch
          %210 = sbr.rel (%p208) target = $region40
        $region39: #{tpu_custom_call.1} parent=35 // pred_region
          %s211 = smul.u32 64, %s17
          %p212 = scmp.lt.s32.totalorder %s211, 127
          %s213 = scalar_select %p212, %s211, 127
          %s214 = smul.addr %s213, 8
          %s215 = scalar_lea.vmem %s0, %s214
          %s216 = smul.u32 64, %s17
        $region40: #{tpu_custom_call.1} parent=35 // pred_fallthru
          _
      $region36: #{tpu_custom_call.1} parent=5 // pred_fallthru
        _
      %p217 = scmp.le.s32.totalorder 1, %s17
      %p218 = scmp.lt.s32.totalorder %s17, 3
      %p219 = pnand %p217, %p218
      %p220 = pneg %p219
      // Predicated region
      $region41: #{tpu_custom_call.1} parent=5 // pred_check
        _
      $region42: #{tpu_custom_call.1} parent=5 // pred_check_branch
        %222 = sbr.rel (%p219) target = $region44
      $region43: #{tpu_custom_call.1} parent=5 // pred_region
        %s223 = ssub.s32 %s17, 1
        %s224 = smul.u32 64, %s22
        %p225 = scmp.lt.s32.totalorder %s224, 127
        %s226 = scalar_select %p225, %s224, 127
        %s227 = smul.addr %s226, 8
        %s228 = scalar_lea.vmem %s0, %s227
        %p229 = pneg %p43
        %p230 = pneg %p40
        %p231 = pneg %p64
        %p232 = pneg %p61
        %p233 = pneg %p85
        %p234 = pneg %p82
        %p235 = pneg %p106
        %p236 = pneg %p103
        %p237 = pneg %p127
        %p238 = pneg %p124
        %p239 = pneg %p148
        %p240 = pneg %p145
        %p241 = pneg %p174
        %p242 = pneg %p171
        %s243 = sand.u32 %s161, 1
        %s244 = scalar_lea.sflag [#allocation4], %s243
        %s245 = sand.u32 %s161, 1
        %s246 = smul.addr %s245, 4
        %s247 = scalar_lea.vmem [#allocation3], %s246
        %s248 = smul.u32 64, %s22
        %p249 = scmp.lt.s32.totalorder %s248, 127
        %s250 = scalar_select %p249, %s248, 127
        %s251 = smul.addr %s250, 8
        %s252 = scalar_lea.vmem %s0, %s251
        %s253 = smul.u32 64, %s22
        %s254 = smul.u32 4, %s22
        %v255 = vld [vmem:[%s252] sm:$0xff]
        %v256 = vld [vmem:[%s252 + $0x8] sm:$0xff]
        %v257 = vld [vmem:[%s252 + $0x10] sm:$0xff]
        %v258 = vld [vmem:[%s252 + $0x18] sm:$0xff]
        %v259 = vld [vmem:[%s252 + $0x20] sm:$0xff]
        %v260 = vld [vmem:[%s252 + $0x28] sm:$0xff]
        %v261 = vld [vmem:[%s252 + $0x30] sm:$0xff]
        %v262 = vld [vmem:[%s252 + $0x38] sm:$0xff]
        %v263 = vld [vmem:[%s252 + $0x40] sm:$0xff]
        %v264 = vld [vmem:[%s252 + $0x48] sm:$0xff]
        %v265 = vld [vmem:[%s252 + $0x50] sm:$0xff]
        %v266 = vld [vmem:[%s252 + $0x58] sm:$0xff]
        %v267 = vld [vmem:[%s252 + $0x60] sm:$0xff]
        %v268 = vld [vmem:[%s252 + $0x68] sm:$0xff]
        %v269 = vld [vmem:[%s252 + $0x70] sm:$0xff]
        %v270 = vld [vmem:[%s252 + $0x78] sm:$0xff]
        %v271 = vld [vmem:[%s252 + $0x80] sm:$0xff]
        %v272 = vld [vmem:[%s252 + $0x88] sm:$0xff]
        %v273 = vld [vmem:[%s252 + $0x90] sm:$0xff]
        %v274 = vld [vmem:[%s252 + $0x98] sm:$0xff]
        %v275 = vld [vmem:[%s252 + $0xa0] sm:$0xff]
        %v276 = vld [vmem:[%s252 + $0xa8] sm:$0xff]
        %v277 = vld [vmem:[%s252 + $0xb0] sm:$0xff]
        %v278 = vld [vmem:[%s252 + $0xb8] sm:$0xff]
        %v279 = vld [vmem:[%s252 + $0xc0] sm:$0xff]
        %v280 = vld [vmem:[%s252 + $0xc8] sm:$0xff]
        %v281 = vld [vmem:[%s252 + $0xd0] sm:$0xff]
        %v282 = vld [vmem:[%s252 + $0xd8] sm:$0xff]
        %v283 = vld [vmem:[%s252 + $0xe0] sm:$0xff]
        %v284 = vld [vmem:[%s252 + $0xe8] sm:$0xff]
        %v285 = vld [vmem:[%s252 + $0xf0] sm:$0xff]
        %v286 = vld [vmem:[%s252 + $0xf8] sm:$0xff]
        %v287 = vld [vmem:[%s252 + $0x100] sm:$0xff]
        %v288 = vld [vmem:[%s252 + $0x108] sm:$0xff]
        %v289 = vld [vmem:[%s252 + $0x110] sm:$0xff]
        %v290 = vld [vmem:[%s252 + $0x118] sm:$0xff]
        %v291 = vld [vmem:[%s252 + $0x120] sm:$0xff]
        %v292 = vld [vmem:[%s252 + $0x128] sm:$0xff]
        %v293 = vld [vmem:[%s252 + $0x130] sm:$0xff]
        %v294 = vld [vmem:[%s252 + $0x138] sm:$0xff]
        %v295 = vld [vmem:[%s252 + $0x140] sm:$0xff]
        %v296 = vld [vmem:[%s252 + $0x148] sm:$0xff]
        %v297 = vld [vmem:[%s252 + $0x150] sm:$0xff]
        %v298 = vld [vmem:[%s252 + $0x158] sm:$0xff]
        %v299 = vld [vmem:[%s252 + $0x160] sm:$0xff]
        %v300 = vld [vmem:[%s252 + $0x168] sm:$0xff]
        %v301 = vld [vmem:[%s252 + $0x170] sm:$0xff]
        %v302 = vld [vmem:[%s252 + $0x178] sm:$0xff]
        %v303 = vld [vmem:[%s252 + $0x180] sm:$0xff]
        %v304 = vld [vmem:[%s252 + $0x188] sm:$0xff]
        %v305 = vld [vmem:[%s252 + $0x190] sm:$0xff]
        %v306 = vld [vmem:[%s252 + $0x198] sm:$0xff]
        %v307 = vld [vmem:[%s252 + $0x1a0] sm:$0xff]
        %v308 = vld [vmem:[%s252 + $0x1a8] sm:$0xff]
        %v309 = vld [vmem:[%s252 + $0x1b0] sm:$0xff]
        %v310 = vld [vmem:[%s252 + $0x1b8] sm:$0xff]
        %v311 = vld [vmem:[%s252 + $0x1c0] sm:$0xff]
        %v312 = vld [vmem:[%s252 + $0x1c8] sm:$0xff]
        %v313 = vld [vmem:[%s252 + $0x1d0] sm:$0xff]
        %v314 = vld [vmem:[%s252 + $0x1d8] sm:$0xff]
        %v315 = vld [vmem:[%s252 + $0x1e0] sm:$0xff]
        %v316 = vld [vmem:[%s252 + $0x1e8] sm:$0xff]
        %v317 = vld [vmem:[%s252 + $0x1f0] sm:$0xff]
        %v318 = vld [vmem:[%s252 + $0x1f8] sm:$0xff]
        %v319 = vld [vmem:[%s1] sm:$0x1]
        %321 = vset.pattern.permute.xlu0 0
        %322 = vperm.xlu0 %321, %v255
        %v323 = vpop.permute.xlu0 %322
        %326 = vset.pattern.permute.xlu0 0
        %327 = vperm.xlu0 %326, %v256
        %v328 = vpop.permute.xlu0 %327
        %331 = vset.pattern.permute.xlu0 0
        %332 = vperm.xlu0 %331, %v257
        %v333 = vpop.permute.xlu0 %332
        %336 = vset.pattern.permute.xlu0 0
        %337 = vperm.xlu0 %336, %v258
        %v338 = vpop.permute.xlu0 %337
        %341 = vset.pattern.permute.xlu0 0
        %342 = vperm.xlu0 %341, %v259
        %v343 = vpop.permute.xlu0 %342
        %346 = vset.pattern.permute.xlu0 0
        %347 = vperm.xlu0 %346, %v260
        %v348 = vpop.permute.xlu0 %347
        %351 = vset.pattern.permute.xlu0 0
        %352 = vperm.xlu0 %351, %v261
        %v353 = vpop.permute.xlu0 %352
        %356 = vset.pattern.permute.xlu0 0
        %357 = vperm.xlu0 %356, %v262
        %v358 = vpop.permute.xlu0 %357
        %361 = vset.pattern.permute.xlu0 0
        %362 = vperm.xlu0 %361, %v263
        %v363 = vpop.permute.xlu0 %362
        %366 = vset.pattern.permute.xlu0 0
        %367 = vperm.xlu0 %366, %v264
        %v368 = vpop.permute.xlu0 %367
        %371 = vset.pattern.permute.xlu0 0
        %372 = vperm.xlu0 %371, %v265
        %v373 = vpop.permute.xlu0 %372
        %376 = vset.pattern.permute.xlu0 0
        %377 = vperm.xlu0 %376, %v266
        %v378 = vpop.permute.xlu0 %377
        %381 = vset.pattern.permute.xlu0 0
        %382 = vperm.xlu0 %381, %v267
        %v383 = vpop.permute.xlu0 %382
        %386 = vset.pattern.permute.xlu0 0
        %387 = vperm.xlu0 %386, %v268
        %v388 = vpop.permute.xlu0 %387
        %391 = vset.pattern.permute.xlu0 0
        %392 = vperm.xlu0 %391, %v269
        %v393 = vpop.permute.xlu0 %392
        %396 = vset.pattern.permute.xlu0 0
        %397 = vperm.xlu0 %396, %v270
        %v398 = vpop.permute.xlu0 %397
        %401 = vset.pattern.permute.xlu0 0
        %402 = vperm.xlu0 %401, %v271
        %v403 = vpop.permute.xlu0 %402
        %406 = vset.pattern.permute.xlu0 0
        %407 = vperm.xlu0 %406, %v272
        %v408 = vpop.permute.xlu0 %407
        %411 = vset.pattern.permute.xlu0 0
        %412 = vperm.xlu0 %411, %v273
        %v413 = vpop.permute.xlu0 %412
        %416 = vset.pattern.permute.xlu0 0
        %417 = vperm.xlu0 %416, %v274
        %v418 = vpop.permute.xlu0 %417
        %421 = vset.pattern.permute.xlu0 0
        %422 = vperm.xlu0 %421, %v275
        %v423 = vpop.permute.xlu0 %422
        %426 = vset.pattern.permute.xlu0 0
        %427 = vperm.xlu0 %426, %v276
        %v428 = vpop.permute.xlu0 %427
        %431 = vset.pattern.permute.xlu0 0
        %432 = vperm.xlu0 %431, %v277
        %v433 = vpop.permute.xlu0 %432
        %436 = vset.pattern.permute.xlu0 0
        %437 = vperm.xlu0 %436, %v278
        %v438 = vpop.permute.xlu0 %437
        %441 = vset.pattern.permute.xlu0 0
        %442 = vperm.xlu0 %441, %v279
        %v443 = vpop.permute.xlu0 %442
        %446 = vset.pattern.permute.xlu0 0
        %447 = vperm.xlu0 %446, %v280
        %v448 = vpop.permute.xlu0 %447
        %451 = vset.pattern.permute.xlu0 0
        %452 = vperm.xlu0 %451, %v281
        %v453 = vpop.permute.xlu0 %452
        %456 = vset.pattern.permute.xlu0 0
        %457 = vperm.xlu0 %456, %v282
        %v458 = vpop.permute.xlu0 %457
        %461 = vset.pattern.permute.xlu0 0
        %462 = vperm.xlu0 %461, %v283
        %v463 = vpop.permute.xlu0 %462
        %466 = vset.pattern.permute.xlu0 0
        %467 = vperm.xlu0 %466, %v284
        %v468 = vpop.permute.xlu0 %467
        %471 = vset.pattern.permute.xlu0 0
        %472 = vperm.xlu0 %471, %v285
        %v473 = vpop.permute.xlu0 %472
        %476 = vset.pattern.permute.xlu0 0
        %477 = vperm.xlu0 %476, %v286
        %v478 = vpop.permute.xlu0 %477
        %481 = vset.pattern.permute.xlu0 0
        %482 = vperm.xlu0 %481, %v287
        %v483 = vpop.permute.xlu0 %482
        %486 = vset.pattern.permute.xlu0 0
        %487 = vperm.xlu0 %486, %v288
        %v488 = vpop.permute.xlu0 %487
        %491 = vset.pattern.permute.xlu0 0
        %492 = vperm.xlu0 %491, %v289
        %v493 = vpop.permute.xlu0 %492
        %496 = vset.pattern.permute.xlu0 0
        %497 = vperm.xlu0 %496, %v290
        %v498 = vpop.permute.xlu0 %497
        %501 = vset.pattern.permute.xlu0 0
        %502 = vperm.xlu0 %501, %v291
        %v503 = vpop.permute.xlu0 %502
        %506 = vset.pattern.permute.xlu0 0
        %507 = vperm.xlu0 %506, %v292
        %v508 = vpop.permute.xlu0 %507
        %511 = vset.pattern.permute.xlu0 0
        %512 = vperm.xlu0 %511, %v293
        %v513 = vpop.permute.xlu0 %512
        %516 = vset.pattern.permute.xlu0 0
        %517 = vperm.xlu0 %516, %v294
        %v518 = vpop.permute.xlu0 %517
        %521 = vset.pattern.permute.xlu0 0
        %522 = vperm.xlu0 %521, %v295
        %v523 = vpop.permute.xlu0 %522
        %526 = vset.pattern.permute.xlu0 0
        %527 = vperm.xlu0 %526, %v296
        %v528 = vpop.permute.xlu0 %527
        %531 = vset.pattern.permute.xlu0 0
        %532 = vperm.xlu0 %531, %v297
        %v533 = vpop.permute.xlu0 %532
        %536 = vset.pattern.permute.xlu0 0
        %537 = vperm.xlu0 %536, %v298
        %v538 = vpop.permute.xlu0 %537
        %541 = vset.pattern.permute.xlu0 0
        %542 = vperm.xlu0 %541, %v299
        %v543 = vpop.permute.xlu0 %542
        %546 = vset.pattern.permute.xlu0 0
        %547 = vperm.xlu0 %546, %v300
        %v548 = vpop.permute.xlu0 %547
        %551 = vset.pattern.permute.xlu0 0
        %552 = vperm.xlu0 %551, %v301
        %v553 = vpop.permute.xlu0 %552
        %556 = vset.pattern.permute.xlu0 0
        %557 = vperm.xlu0 %556, %v302
        %v558 = vpop.permute.xlu0 %557
        %561 = vset.pattern.permute.xlu0 0
        %562 = vperm.xlu0 %561, %v303
        %v563 = vpop.permute.xlu0 %562
        %566 = vset.pattern.permute.xlu0 0
        %567 = vperm.xlu0 %566, %v304
        %v568 = vpop.permute.xlu0 %567
        %571 = vset.pattern.permute.xlu0 0
        %572 = vperm.xlu0 %571, %v305
        %v573 = vpop.permute.xlu0 %572
        %576 = vset.pattern.permute.xlu0 0
        %577 = vperm.xlu0 %576, %v306
        %v578 = vpop.permute.xlu0 %577
        %581 = vset.pattern.permute.xlu0 0
        %582 = vperm.xlu0 %581, %v307
        %v583 = vpop.permute.xlu0 %582
        %586 = vset.pattern.permute.xlu0 0
        %587 = vperm.xlu0 %586, %v308
        %v588 = vpop.permute.xlu0 %587
        %591 = vset.pattern.permute.xlu0 0
        %592 = vperm.xlu0 %591, %v309
        %v593 = vpop.permute.xlu0 %592
        %596 = vset.pattern.permute.xlu0 0
        %597 = vperm.xlu0 %596, %v310
        %v598 = vpop.permute.xlu0 %597
        %601 = vset.pattern.permute.xlu0 0
        %602 = vperm.xlu0 %601, %v311
        %v603 = vpop.permute.xlu0 %602
        %606 = vset.pattern.permute.xlu0 0
        %607 = vperm.xlu0 %606, %v312
        %v608 = vpop.permute.xlu0 %607
        %611 = vset.pattern.permute.xlu0 0
        %612 = vperm.xlu0 %611, %v313
        %v613 = vpop.permute.xlu0 %612
        %616 = vset.pattern.permute.xlu0 0
        %617 = vperm.xlu0 %616, %v314
        %v618 = vpop.permute.xlu0 %617
        %621 = vset.pattern.permute.xlu0 0
        %622 = vperm.xlu0 %621, %v315
        %v623 = vpop.permute.xlu0 %622
        %626 = vset.pattern.permute.xlu0 0
        %627 = vperm.xlu0 %626, %v316
        %v628 = vpop.permute.xlu0 %627
        %631 = vset.pattern.permute.xlu0 0
        %632 = vperm.xlu0 %631, %v317
        %v633 = vpop.permute.xlu0 %632
        %636 = vset.pattern.permute.xlu0 0
        %637 = vperm.xlu0 %636, %v318
        %v638 = vpop.permute.xlu0 %637
        %v640 = vperm.slane %v319, 0
        %v641 = vmul.f32 %v323, %v640
        %v642 = vmul.f32 %v328, %v640
        %v643 = vmul.f32 %v333, %v640
        %v644 = vmul.f32 %v338, %v640
        %v645 = vmul.f32 %v343, %v640
        %v646 = vmul.f32 %v348, %v640
        %v647 = vmul.f32 %v353, %v640
        %v648 = vmul.f32 %v358, %v640
        %v649 = vmul.f32 %v363, %v640
        %v650 = vmul.f32 %v368, %v640
        %v651 = vmul.f32 %v373, %v640
        %v652 = vmul.f32 %v378, %v640
        %v653 = vmul.f32 %v383, %v640
        %v654 = vmul.f32 %v388, %v640
        %v655 = vmul.f32 %v393, %v640
        %v656 = vmul.f32 %v398, %v640
        %v657 = vmul.f32 %v403, %v640
        %v658 = vmul.f32 %v408, %v640
        %v659 = vmul.f32 %v413, %v640
        %v660 = vmul.f32 %v418, %v640
        %v661 = vmul.f32 %v423, %v640
        %v662 = vmul.f32 %v428, %v640
        %v663 = vmul.f32 %v433, %v640
        %v664 = vmul.f32 %v438, %v640
        %v665 = vmul.f32 %v443, %v640
        %v666 = vmul.f32 %v448, %v640
        %v667 = vmul.f32 %v453, %v640
        %v668 = vmul.f32 %v458, %v640
        %v669 = vmul.f32 %v463, %v640
        %v670 = vmul.f32 %v468, %v640
        %v671 = vmul.f32 %v473, %v640
        %v672 = vmul.f32 %v478, %v640
        %v673 = vmul.f32 %v483, %v640
        %v674 = vmul.f32 %v488, %v640
        %v675 = vmul.f32 %v493, %v640
        %v676 = vmul.f32 %v498, %v640
        %v677 = vmul.f32 %v503, %v640
        %v678 = vmul.f32 %v508, %v640
        %v679 = vmul.f32 %v513, %v640
        %v680 = vmul.f32 %v518, %v640
        %v681 = vmul.f32 %v523, %v640
        %v682 = vmul.f32 %v528, %v640
        %v683 = vmul.f32 %v533, %v640
        %v684 = vmul.f32 %v538, %v640
        %v685 = vmul.f32 %v543, %v640
        %v686 = vmul.f32 %v548, %v640
        %v687 = vmul.f32 %v553, %v640
        %v688 = vmul.f32 %v558, %v640
        %v689 = vmul.f32 %v563, %v640
        %v690 = vmul.f32 %v568, %v640
        %v691 = vmul.f32 %v573, %v640
        %v692 = vmul.f32 %v578, %v640
        %v693 = vmul.f32 %v583, %v640
        %v694 = vmul.f32 %v588, %v640
        %v695 = vmul.f32 %v593, %v640
        %v696 = vmul.f32 %v598, %v640
        %v697 = vmul.f32 %v603, %v640
        %v698 = vmul.f32 %v608, %v640
        %v699 = vmul.f32 %v613, %v640
        %v700 = vmul.f32 %v618, %v640
        %v701 = vmul.f32 %v623, %v640
        %v702 = vmul.f32 %v628, %v640
        %v703 = vmul.f32 %v633, %v640
        %v704 = vmul.f32 %v638, %v640
        %v705 = vld [vmem:[%s1 + $0x1] sm:$0x1]
        %706 = vset.pattern.permute.xlu0 1
        %707 = vperm.xlu0 %706, %v255
        %v708 = vpop.permute.xlu0 %707
        %710 = vset.pattern.permute.xlu0 1
        %711 = vperm.xlu0 %710, %v256
        %v712 = vpop.permute.xlu0 %711
        %714 = vset.pattern.permute.xlu0 1
        %715 = vperm.xlu0 %714, %v257
        %v716 = vpop.permute.xlu0 %715
        %718 = vset.pattern.permute.xlu0 1
        %719 = vperm.xlu0 %718, %v258
        %v720 = vpop.permute.xlu0 %719
        %722 = vset.pattern.permute.xlu0 1
        %723 = vperm.xlu0 %722, %v259
        %v724 = vpop.permute.xlu0 %723
        %726 = vset.pattern.permute.xlu0 1
        %727 = vperm.xlu0 %726, %v260
        %v728 = vpop.permute.xlu0 %727
        %730 = vset.pattern.permute.xlu0 1
        %731 = vperm.xlu0 %730, %v261
        %v732 = vpop.permute.xlu0 %731
        %734 = vset.pattern.permute.xlu0 1
        %735 = vperm.xlu0 %734, %v262
        %v736 = vpop.permute.xlu0 %735
        %738 = vset.pattern.permute.xlu0 1
        %739 = vperm.xlu0 %738, %v263
        %v740 = vpop.permute.xlu0 %739
        %742 = vset.pattern.permute.xlu0 1
        %743 = vperm.xlu0 %742, %v264
        %v744 = vpop.permute.xlu0 %743
        %746 = vset.pattern.permute.xlu0 1
        %747 = vperm.xlu0 %746, %v265
        %v748 = vpop.permute.xlu0 %747
        %750 = vset.pattern.permute.xlu0 1
        %751 = vperm.xlu0 %750, %v266
        %v752 = vpop.permute.xlu0 %751
        %754 = vset.pattern.permute.xlu0 1
        %755 = vperm.xlu0 %754, %v267
        %v756 = vpop.permute.xlu0 %755
        %758 = vset.pattern.permute.xlu0 1
        %759 = vperm.xlu0 %758, %v268
        %v760 = vpop.permute.xlu0 %759
        %762 = vset.pattern.permute.xlu0 1
        %763 = vperm.xlu0 %762, %v269
        %v764 = vpop.permute.xlu0 %763
        %766 = vset.pattern.permute.xlu0 1
        %767 = vperm.xlu0 %766, %v270
        %v768 = vpop.permute.xlu0 %767
        %770 = vset.pattern.permute.xlu0 1
        %771 = vperm.xlu0 %770, %v271
        %v772 = vpop.permute.xlu0 %771
        %774 = vset.pattern.permute.xlu0 1
        %775 = vperm.xlu0 %774, %v272
        %v776 = vpop.permute.xlu0 %775
        %778 = vset.pattern.permute.xlu0 1
        %779 = vperm.xlu0 %778, %v273
        %v780 = vpop.permute.xlu0 %779
        %782 = vset.pattern.permute.xlu0 1
        %783 = vperm.xlu0 %782, %v274
        %v784 = vpop.permute.xlu0 %783
        %786 = vset.pattern.permute.xlu0 1
        %787 = vperm.xlu0 %786, %v275
        %v788 = vpop.permute.xlu0 %787
        %790 = vset.pattern.permute.xlu0 1
        %791 = vperm.xlu0 %790, %v276
        %v792 = vpop.permute.xlu0 %791
        %794 = vset.pattern.permute.xlu0 1
        %795 = vperm.xlu0 %794, %v277
        %v796 = vpop.permute.xlu0 %795
        %798 = vset.pattern.permute.xlu0 1
        %799 = vperm.xlu0 %798, %v278
        %v800 = vpop.permute.xlu0 %799
        %802 = vset.pattern.permute.xlu0 1
        %803 = vperm.xlu0 %802, %v279
        %v804 = vpop.permute.xlu0 %803
        %806 = vset.pattern.permute.xlu0 1
        %807 = vperm.xlu0 %806, %v280
        %v808 = vpop.permute.xlu0 %807
        %810 = vset.pattern.permute.xlu0 1
        %811 = vperm.xlu0 %810, %v281
        %v812 = vpop.permute.xlu0 %811
        %814 = vset.pattern.permute.xlu0 1
        %815 = vperm.xlu0 %814, %v282
        %v816 = vpop.permute.xlu0 %815
        %818 = vset.pattern.permute.xlu0 1
        %819 = vperm.xlu0 %818, %v283
        %v820 = vpop.permute.xlu0 %819
        %822 = vset.pattern.permute.xlu0 1
        %823 = vperm.xlu0 %822, %v284
        %v824 = vpop.permute.xlu0 %823
        %826 = vset.pattern.permute.xlu0 1
        %827 = vperm.xlu0 %826, %v285
        %v828 = vpop.permute.xlu0 %827
        %830 = vset.pattern.permute.xlu0 1
        %831 = vperm.xlu0 %830, %v286
        %v832 = vpop.permute.xlu0 %831
        %834 = vset.pattern.permute.xlu0 1
        %835 = vperm.xlu0 %834, %v287
        %v836 = vpop.permute.xlu0 %835
        %838 = vset.pattern.permute.xlu0 1
        %839 = vperm.xlu0 %838, %v288
        %v840 = vpop.permute.xlu0 %839
        %842 = vset.pattern.permute.xlu0 1
        %843 = vperm.xlu0 %842, %v289
        %v844 = vpop.permute.xlu0 %843
        %846 = vset.pattern.permute.xlu0 1
        %847 = vperm.xlu0 %846, %v290
        %v848 = vpop.permute.xlu0 %847
        %850 = vset.pattern.permute.xlu0 1
        %851 = vperm.xlu0 %850, %v291
        %v852 = vpop.permute.xlu0 %851
        %854 = vset.pattern.permute.xlu0 1
        %855 = vperm.xlu0 %854, %v292
        %v856 = vpop.permute.xlu0 %855
        %858 = vset.pattern.permute.xlu0 1
        %859 = vperm.xlu0 %858, %v293
        %v860 = vpop.permute.xlu0 %859
        %862 = vset.pattern.permute.xlu0 1
        %863 = vperm.xlu0 %862, %v294
        %v864 = vpop.permute.xlu0 %863
        %866 = vset.pattern.permute.xlu0 1
        %867 = vperm.xlu0 %866, %v295
        %v868 = vpop.permute.xlu0 %867
        %870 = vset.pattern.permute.xlu0 1
        %871 = vperm.xlu0 %870, %v296
        %v872 = vpop.permute.xlu0 %871
        %874 = vset.pattern.permute.xlu0 1
        %875 = vperm.xlu0 %874, %v297
        %v876 = vpop.permute.xlu0 %875
        %878 = vset.pattern.permute.xlu0 1
        %879 = vperm.xlu0 %878, %v298
        %v880 = vpop.permute.xlu0 %879
        %882 = vset.pattern.permute.xlu0 1
        %883 = vperm.xlu0 %882, %v299
        %v884 = vpop.permute.xlu0 %883
        %886 = vset.pattern.permute.xlu0 1
        %887 = vperm.xlu0 %886, %v300
        %v888 = vpop.permute.xlu0 %887
        %890 = vset.pattern.permute.xlu0 1
        %891 = vperm.xlu0 %890, %v301
        %v892 = vpop.permute.xlu0 %891
        %894 = vset.pattern.permute.xlu0 1
        %895 = vperm.xlu0 %894, %v302
        %v896 = vpop.permute.xlu0 %895
        %898 = vset.pattern.permute.xlu0 1
        %899 = vperm.xlu0 %898, %v303
        %v900 = vpop.permute.xlu0 %899
        %902 = vset.pattern.permute.xlu0 1
        %903 = vperm.xlu0 %902, %v304
        %v904 = vpop.permute.xlu0 %903
        %906 = vset.pattern.permute.xlu0 1
        %907 = vperm.xlu0 %906, %v305
        %v908 = vpop.permute.xlu0 %907
        %910 = vset.pattern.permute.xlu0 1
        %911 = vperm.xlu0 %910, %v306
        %v912 = vpop.permute.xlu0 %911
        %914 = vset.pattern.permute.xlu0 1
        %915 = vperm.xlu0 %914, %v307
        %v916 = vpop.permute.xlu0 %915
        %918 = vset.pattern.permute.xlu0 1
        %919 = vperm.xlu0 %918, %v308
        %v920 = vpop.permute.xlu0 %919
        %922 = vset.pattern.permute.xlu0 1
        %923 = vperm.xlu0 %922, %v309
        %v924 = vpop.permute.xlu0 %923
        %926 = vset.pattern.permute.xlu0 1
        %927 = vperm.xlu0 %926, %v310
        %v928 = vpop.permute.xlu0 %927
        %930 = vset.pattern.permute.xlu0 1
        %931 = vperm.xlu0 %930, %v311
        %v932 = vpop.permute.xlu0 %931
        %934 = vset.pattern.permute.xlu0 1
        %935 = vperm.xlu0 %934, %v312
        %v936 = vpop.permute.xlu0 %935
        %938 = vset.pattern.permute.xlu0 1
        %939 = vperm.xlu0 %938, %v313
        %v940 = vpop.permute.xlu0 %939
        %942 = vset.pattern.permute.xlu0 1
        %943 = vperm.xlu0 %942, %v314
        %v944 = vpop.permute.xlu0 %943
        %946 = vset.pattern.permute.xlu0 1
        %947 = vperm.xlu0 %946, %v315
        %v948 = vpop.permute.xlu0 %947
        %950 = vset.pattern.permute.xlu0 1
        %951 = vperm.xlu0 %950, %v316
        %v952 = vpop.permute.xlu0 %951
        %954 = vset.pattern.permute.xlu0 1
        %955 = vperm.xlu0 %954, %v317
        %v956 = vpop.permute.xlu0 %955
        %958 = vset.pattern.permute.xlu0 1
        %959 = vperm.xlu0 %958, %v318
        %v960 = vpop.permute.xlu0 %959
        %v962 = vperm.slane %v705, 0
        %v963 = vmul.f32 %v708, %v962
        %v964 = vmul.f32 %v712, %v962
        %v965 = vmul.f32 %v716, %v962
        %v966 = vmul.f32 %v720, %v962
        %v967 = vmul.f32 %v724, %v962
        %v968 = vmul.f32 %v728, %v962
        %v969 = vmul.f32 %v732, %v962
        %v970 = vmul.f32 %v736, %v962
        %v971 = vmul.f32 %v740, %v962
        %v972 = vmul.f32 %v744, %v962
        %v973 = vmul.f32 %v748, %v962
        %v974 = vmul.f32 %v752, %v962
        %v975 = vmul.f32 %v756, %v962
        %v976 = vmul.f32 %v760, %v962
        %v977 = vmul.f32 %v764, %v962
        %v978 = vmul.f32 %v768, %v962
        %v979 = vmul.f32 %v772, %v962
        %v980 = vmul.f32 %v776, %v962
        %v981 = vmul.f32 %v780, %v962
        %v982 = vmul.f32 %v784, %v962
        %v983 = vmul.f32 %v788, %v962
        %v984 = vmul.f32 %v792, %v962
        %v985 = vmul.f32 %v796, %v962
        %v986 = vmul.f32 %v800, %v962
        %v987 = vmul.f32 %v804, %v962
        %v988 = vmul.f32 %v808, %v962
        %v989 = vmul.f32 %v812, %v962
        %v990 = vmul.f32 %v816, %v962
        %v991 = vmul.f32 %v820, %v962
        %v992 = vmul.f32 %v824, %v962
        %v993 = vmul.f32 %v828, %v962
        %v994 = vmul.f32 %v832, %v962
        %v995 = vmul.f32 %v836, %v962
        %v996 = vmul.f32 %v840, %v962
        %v997 = vmul.f32 %v844, %v962
        %v998 = vmul.f32 %v848, %v962
        %v999 = vmul.f32 %v852, %v962
        %v1000 = vmul.f32 %v856, %v962
        %v1001 = vmul.f32 %v860, %v962
        %v1002 = vmul.f32 %v864, %v962
        %v1003 = vmul.f32 %v868, %v962
        %v1004 = vmul.f32 %v872, %v962
        %v1005 = vmul.f32 %v876, %v962
        %v1006 = vmul.f32 %v880, %v962
        %v1007 = vmul.f32 %v884, %v962
        %v1008 = vmul.f32 %v888, %v962
        %v1009 = vmul.f32 %v892, %v962
        %v1010 = vmul.f32 %v896, %v962
        %v1011 = vmul.f32 %v900, %v962
        %v1012 = vmul.f32 %v904, %v962
        %v1013 = vmul.f32 %v908, %v962
        %v1014 = vmul.f32 %v912, %v962
        %v1015 = vmul.f32 %v916, %v962
        %v1016 = vmul.f32 %v920, %v962
        %v1017 = vmul.f32 %v924, %v962
        %v1018 = vmul.f32 %v928, %v962
        %v1019 = vmul.f32 %v932, %v962
        %v1020 = vmul.f32 %v936, %v962
        %v1021 = vmul.f32 %v940, %v962
        %v1022 = vmul.f32 %v944, %v962
        %v1023 = vmul.f32 %v948, %v962
        %v1024 = vmul.f32 %v952, %v962
        %v1025 = vmul.f32 %v956, %v962
        %v1026 = vmul.f32 %v960, %v962
        %v1027 = vadd.f32 %v641, %v963
        %v1028 = vadd.f32 %v642, %v964
        %v1029 = vadd.f32 %v643, %v965
        %v1030 = vadd.f32 %v644, %v966
        %v1031 = vadd.f32 %v645, %v967
        %v1032 = vadd.f32 %v646, %v968
        %v1033 = vadd.f32 %v647, %v969
        %v1034 = vadd.f32 %v648, %v970
        %v1035 = vadd.f32 %v649, %v971
        %v1036 = vadd.f32 %v650, %v972
        %v1037 = vadd.f32 %v651, %v973
        %v1038 = vadd.f32 %v652, %v974
        %v1039 = vadd.f32 %v653, %v975
        %v1040 = vadd.f32 %v654, %v976
        %v1041 = vadd.f32 %v655, %v977
        %v1042 = vadd.f32 %v656, %v978
        %v1043 = vadd.f32 %v657, %v979
        %v1044 = vadd.f32 %v658, %v980
        %v1045 = vadd.f32 %v659, %v981
        %v1046 = vadd.f32 %v660, %v982
        %v1047 = vadd.f32 %v661, %v983
        %v1048 = vadd.f32 %v662, %v984
        %v1049 = vadd.f32 %v663, %v985
        %v1050 = vadd.f32 %v664, %v986
        %v1051 = vadd.f32 %v665, %v987
        %v1052 = vadd.f32 %v666, %v988
        %v1053 = vadd.f32 %v667, %v989
        %v1054 = vadd.f32 %v668, %v990
        %v1055 = vadd.f32 %v669, %v991
        %v1056 = vadd.f32 %v670, %v992
        %v1057 = vadd.f32 %v671, %v993
        %v1058 = vadd.f32 %v672, %v994
        %v1059 = vadd.f32 %v673, %v995
        %v1060 = vadd.f32 %v674, %v996
        %v1061 = vadd.f32 %v675, %v997
        %v1062 = vadd.f32 %v676, %v998
        %v1063 = vadd.f32 %v677, %v999
        %v1064 = vadd.f32 %v678, %v1000
        %v1065 = vadd.f32 %v679, %v1001
        %v1066 = vadd.f32 %v680, %v1002
        %v1067 = vadd.f32 %v681, %v1003
        %v1068 = vadd.f32 %v682, %v1004
        %v1069 = vadd.f32 %v683, %v1005
        %v1070 = vadd.f32 %v684, %v1006
        %v1071 = vadd.f32 %v685, %v1007
        %v1072 = vadd.f32 %v686, %v1008
        %v1073 = vadd.f32 %v687, %v1009
        %v1074 = vadd.f32 %v688, %v1010
        %v1075 = vadd.f32 %v689, %v1011
        %v1076 = vadd.f32 %v690, %v1012
        %v1077 = vadd.f32 %v691, %v1013
        %v1078 = vadd.f32 %v692, %v1014
        %v1079 = vadd.f32 %v693, %v1015
        %v1080 = vadd.f32 %v694, %v1016
        %v1081 = vadd.f32 %v695, %v1017
        %v1082 = vadd.f32 %v696, %v1018
        %v1083 = vadd.f32 %v697, %v1019
        %v1084 = vadd.f32 %v698, %v1020
        %v1085 = vadd.f32 %v699, %v1021
        %v1086 = vadd.f32 %v700, %v1022
        %v1087 = vadd.f32 %v701, %v1023
        %v1088 = vadd.f32 %v702, %v1024
        %v1089 = vadd.f32 %v703, %v1025
        %v1090 = vadd.f32 %v704, %v1026
        %v1091 = vld [vmem:[%s1 + $0x2] sm:$0x1]
        %1092 = vset.pattern.permute.xlu0 2
        %1093 = vperm.xlu0 %1092, %v255
        %v1094 = vpop.permute.xlu0 %1093
        %1096 = vset.pattern.permute.xlu0 2
        %1097 = vperm.xlu0 %1096, %v256
        %v1098 = vpop.permute.xlu0 %1097
        %1100 = vset.pattern.permute.xlu0 2
        %1101 = vperm.xlu0 %1100, %v257
        %v1102 = vpop.permute.xlu0 %1101
        %1104 = vset.pattern.permute.xlu0 2
        %1105 = vperm.xlu0 %1104, %v258
        %v1106 = vpop.permute.xlu0 %1105
        %1108 = vset.pattern.permute.xlu0 2
        %1109 = vperm.xlu0 %1108, %v259
        %v1110 = vpop.permute.xlu0 %1109
        %1112 = vset.pattern.permute.xlu0 2
        %1113 = vperm.xlu0 %1112, %v260
        %v1114 = vpop.permute.xlu0 %1113
        %1116 = vset.pattern.permute.xlu0 2
        %1117 = vperm.xlu0 %1116, %v261
        %v1118 = vpop.permute.xlu0 %1117
        %1120 = vset.pattern.permute.xlu0 2
        %1121 = vperm.xlu0 %1120, %v262
        %v1122 = vpop.permute.xlu0 %1121
        %1124 = vset.pattern.permute.xlu0 2
        %1125 = vperm.xlu0 %1124, %v263
        %v1126 = vpop.permute.xlu0 %1125
        %1128 = vset.pattern.permute.xlu0 2
        %1129 = vperm.xlu0 %1128, %v264
        %v1130 = vpop.permute.xlu0 %1129
        %1132 = vset.pattern.permute.xlu0 2
        %1133 = vperm.xlu0 %1132, %v265
        %v1134 = vpop.permute.xlu0 %1133
        %1136 = vset.pattern.permute.xlu0 2
        %1137 = vperm.xlu0 %1136, %v266
        %v1138 = vpop.permute.xlu0 %1137
        %1140 = vset.pattern.permute.xlu0 2
        %1141 = vperm.xlu0 %1140, %v267
        %v1142 = vpop.permute.xlu0 %1141
        %1144 = vset.pattern.permute.xlu0 2
        %1145 = vperm.xlu0 %1144, %v268
        %v1146 = vpop.permute.xlu0 %1145
        %1148 = vset.pattern.permute.xlu0 2
        %1149 = vperm.xlu0 %1148, %v269
        %v1150 = vpop.permute.xlu0 %1149
        %1152 = vset.pattern.permute.xlu0 2
        %1153 = vperm.xlu0 %1152, %v270
        %v1154 = vpop.permute.xlu0 %1153
        %1156 = vset.pattern.permute.xlu0 2
        %1157 = vperm.xlu0 %1156, %v271
        %v1158 = vpop.permute.xlu0 %1157
        %1160 = vset.pattern.permute.xlu0 2
        %1161 = vperm.xlu0 %1160, %v272
        %v1162 = vpop.permute.xlu0 %1161
        %1164 = vset.pattern.permute.xlu0 2
        %1165 = vperm.xlu0 %1164, %v273
        %v1166 = vpop.permute.xlu0 %1165
        %1168 = vset.pattern.permute.xlu0 2
        %1169 = vperm.xlu0 %1168, %v274
        %v1170 = vpop.permute.xlu0 %1169
        %1172 = vset.pattern.permute.xlu0 2
        %1173 = vperm.xlu0 %1172, %v275
        %v1174 = vpop.permute.xlu0 %1173
        %1176 = vset.pattern.permute.xlu0 2
        %1177 = vperm.xlu0 %1176, %v276
        %v1178 = vpop.permute.xlu0 %1177
        %1180 = vset.pattern.permute.xlu0 2
        %1181 = vperm.xlu0 %1180, %v277
        %v1182 = vpop.permute.xlu0 %1181
        %1184 = vset.pattern.permute.xlu0 2
        %1185 = vperm.xlu0 %1184, %v278
        %v1186 = vpop.permute.xlu0 %1185
        %1188 = vset.pattern.permute.xlu0 2
        %1189 = vperm.xlu0 %1188, %v279
        %v1190 = vpop.permute.xlu0 %1189
        %1192 = vset.pattern.permute.xlu0 2
        %1193 = vperm.xlu0 %1192, %v280
        %v1194 = vpop.permute.xlu0 %1193
        %1196 = vset.pattern.permute.xlu0 2
        %1197 = vperm.xlu0 %1196, %v281
        %v1198 = vpop.permute.xlu0 %1197
        %1200 = vset.pattern.permute.xlu0 2
        %1201 = vperm.xlu0 %1200, %v282
        %v1202 = vpop.permute.xlu0 %1201
        %1204 = vset.pattern.permute.xlu0 2
        %1205 = vperm.xlu0 %1204, %v283
        %v1206 = vpop.permute.xlu0 %1205
        %1208 = vset.pattern.permute.xlu0 2
        %1209 = vperm.xlu0 %1208, %v284
        %v1210 = vpop.permute.xlu0 %1209
        %1212 = vset.pattern.permute.xlu0 2
        %1213 = vperm.xlu0 %1212, %v285
        %v1214 = vpop.permute.xlu0 %1213
        %1216 = vset.pattern.permute.xlu0 2
        %1217 = vperm.xlu0 %1216, %v286
        %v1218 = vpop.permute.xlu0 %1217
        %1220 = vset.pattern.permute.xlu0 2
        %1221 = vperm.xlu0 %1220, %v287
        %v1222 = vpop.permute.xlu0 %1221
        %1224 = vset.pattern.permute.xlu0 2
        %1225 = vperm.xlu0 %1224, %v288
        %v1226 = vpop.permute.xlu0 %1225
        %1228 = vset.pattern.permute.xlu0 2
        %1229 = vperm.xlu0 %1228, %v289
        %v1230 = vpop.permute.xlu0 %1229
        %1232 = vset.pattern.permute.xlu0 2
        %1233 = vperm.xlu0 %1232, %v290
        %v1234 = vpop.permute.xlu0 %1233
        %1236 = vset.pattern.permute.xlu0 2
        %1237 = vperm.xlu0 %1236, %v291
        %v1238 = vpop.permute.xlu0 %1237
        %1240 = vset.pattern.permute.xlu0 2
        %1241 = vperm.xlu0 %1240, %v292
        %v1242 = vpop.permute.xlu0 %1241
        %1244 = vset.pattern.permute.xlu0 2
        %1245 = vperm.xlu0 %1244, %v293
        %v1246 = vpop.permute.xlu0 %1245
        %1248 = vset.pattern.permute.xlu0 2
        %1249 = vperm.xlu0 %1248, %v294
        %v1250 = vpop.permute.xlu0 %1249
        %1252 = vset.pattern.permute.xlu0 2
        %1253 = vperm.xlu0 %1252, %v295
        %v1254 = vpop.permute.xlu0 %1253
        %1256 = vset.pattern.permute.xlu0 2
        %1257 = vperm.xlu0 %1256, %v296
        %v1258 = vpop.permute.xlu0 %1257
        %1260 = vset.pattern.permute.xlu0 2
        %1261 = vperm.xlu0 %1260, %v297
        %v1262 = vpop.permute.xlu0 %1261
        %1264 = vset.pattern.permute.xlu0 2
        %1265 = vperm.xlu0 %1264, %v298
        %v1266 = vpop.permute.xlu0 %1265
        %1268 = vset.pattern.permute.xlu0 2
        %1269 = vperm.xlu0 %1268, %v299
        %v1270 = vpop.permute.xlu0 %1269
        %1272 = vset.pattern.permute.xlu0 2
        %1273 = vperm.xlu0 %1272, %v300
        %v1274 = vpop.permute.xlu0 %1273
        %1276 = vset.pattern.permute.xlu0 2
        %1277 = vperm.xlu0 %1276, %v301
        %v1278 = vpop.permute.xlu0 %1277
        %1280 = vset.pattern.permute.xlu0 2
        %1281 = vperm.xlu0 %1280, %v302
        %v1282 = vpop.permute.xlu0 %1281
        %1284 = vset.pattern.permute.xlu0 2
        %1285 = vperm.xlu0 %1284, %v303
        %v1286 = vpop.permute.xlu0 %1285
        %1288 = vset.pattern.permute.xlu0 2
        %1289 = vperm.xlu0 %1288, %v304
        %v1290 = vpop.permute.xlu0 %1289
        %1292 = vset.pattern.permute.xlu0 2
        %1293 = vperm.xlu0 %1292, %v305
        %v1294 = vpop.permute.xlu0 %1293
        %1296 = vset.pattern.permute.xlu0 2
        %1297 = vperm.xlu0 %1296, %v306
        %v1298 = vpop.permute.xlu0 %1297
        %1300 = vset.pattern.permute.xlu0 2
        %1301 = vperm.xlu0 %1300, %v307
        %v1302 = vpop.permute.xlu0 %1301
        %1304 = vset.pattern.permute.xlu0 2
        %1305 = vperm.xlu0 %1304, %v308
        %v1306 = vpop.permute.xlu0 %1305
        %1308 = vset.pattern.permute.xlu0 2
        %1309 = vperm.xlu0 %1308, %v309
        %v1310 = vpop.permute.xlu0 %1309
        %1312 = vset.pattern.permute.xlu0 2
        %1313 = vperm.xlu0 %1312, %v310
        %v1314 = vpop.permute.xlu0 %1313
        %1316 = vset.pattern.permute.xlu0 2
        %1317 = vperm.xlu0 %1316, %v311
        %v1318 = vpop.permute.xlu0 %1317
        %1320 = vset.pattern.permute.xlu0 2
        %1321 = vperm.xlu0 %1320, %v312
        %v1322 = vpop.permute.xlu0 %1321
        %1324 = vset.pattern.permute.xlu0 2
        %1325 = vperm.xlu0 %1324, %v313
        %v1326 = vpop.permute.xlu0 %1325
        %1328 = vset.pattern.permute.xlu0 2
        %1329 = vperm.xlu0 %1328, %v314
        %v1330 = vpop.permute.xlu0 %1329
        %1332 = vset.pattern.permute.xlu0 2
        %1333 = vperm.xlu0 %1332, %v315
        %v1334 = vpop.permute.xlu0 %1333
        %1336 = vset.pattern.permute.xlu0 2
        %1337 = vperm.xlu0 %1336, %v316
        %v1338 = vpop.permute.xlu0 %1337
        %1340 = vset.pattern.permute.xlu0 2
        %1341 = vperm.xlu0 %1340, %v317
        %v1342 = vpop.permute.xlu0 %1341
        %1344 = vset.pattern.permute.xlu0 2
        %1345 = vperm.xlu0 %1344, %v318
        %v1346 = vpop.permute.xlu0 %1345
        %v1348 = vperm.slane %v1091, 0
        %v1349 = vmul.f32 %v1094, %v1348
        %v1350 = vmul.f32 %v1098, %v1348
        %v1351 = vmul.f32 %v1102, %v1348
        %v1352 = vmul.f32 %v1106, %v1348
        %v1353 = vmul.f32 %v1110, %v1348
        %v1354 = vmul.f32 %v1114, %v1348
        %v1355 = vmul.f32 %v1118, %v1348
        %v1356 = vmul.f32 %v1122, %v1348
        %v1357 = vmul.f32 %v1126, %v1348
        %v1358 = vmul.f32 %v1130, %v1348
        %v1359 = vmul.f32 %v1134, %v1348
        %v1360 = vmul.f32 %v1138, %v1348
        %v1361 = vmul.f32 %v1142, %v1348
        %v1362 = vmul.f32 %v1146, %v1348
        %v1363 = vmul.f32 %v1150, %v1348
        %v1364 = vmul.f32 %v1154, %v1348
        %v1365 = vmul.f32 %v1158, %v1348
        %v1366 = vmul.f32 %v1162, %v1348
        %v1367 = vmul.f32 %v1166, %v1348
        %v1368 = vmul.f32 %v1170, %v1348
        %v1369 = vmul.f32 %v1174, %v1348
        %v1370 = vmul.f32 %v1178, %v1348
        %v1371 = vmul.f32 %v1182, %v1348
        %v1372 = vmul.f32 %v1186, %v1348
        %v1373 = vmul.f32 %v1190, %v1348
        %v1374 = vmul.f32 %v1194, %v1348
        %v1375 = vmul.f32 %v1198, %v1348
        %v1376 = vmul.f32 %v1202, %v1348
        %v1377 = vmul.f32 %v1206, %v1348
        %v1378 = vmul.f32 %v1210, %v1348
        %v1379 = vmul.f32 %v1214, %v1348
        %v1380 = vmul.f32 %v1218, %v1348
        %v1381 = vmul.f32 %v1222, %v1348
        %v1382 = vmul.f32 %v1226, %v1348
        %v1383 = vmul.f32 %v1230, %v1348
        %v1384 = vmul.f32 %v1234, %v1348
        %v1385 = vmul.f32 %v1238, %v1348
        %v1386 = vmul.f32 %v1242, %v1348
        %v1387 = vmul.f32 %v1246, %v1348
        %v1388 = vmul.f32 %v1250, %v1348
        %v1389 = vmul.f32 %v1254, %v1348
        %v1390 = vmul.f32 %v1258, %v1348
        %v1391 = vmul.f32 %v1262, %v1348
        %v1392 = vmul.f32 %v1266, %v1348
        %v1393 = vmul.f32 %v1270, %v1348
        %v1394 = vmul.f32 %v1274, %v1348
        %v1395 = vmul.f32 %v1278, %v1348
        %v1396 = vmul.f32 %v1282, %v1348
        %v1397 = vmul.f32 %v1286, %v1348
        %v1398 = vmul.f32 %v1290, %v1348
        %v1399 = vmul.f32 %v1294, %v1348
        %v1400 = vmul.f32 %v1298, %v1348
        %v1401 = vmul.f32 %v1302, %v1348
        %v1402 = vmul.f32 %v1306, %v1348
        %v1403 = vmul.f32 %v1310, %v1348
        %v1404 = vmul.f32 %v1314, %v1348
        %v1405 = vmul.f32 %v1318, %v1348
        %v1406 = vmul.f32 %v1322, %v1348
        %v1407 = vmul.f32 %v1326, %v1348
        %v1408 = vmul.f32 %v1330, %v1348
        %v1409 = vmul.f32 %v1334, %v1348
        %v1410 = vmul.f32 %v1338, %v1348
        %v1411 = vmul.f32 %v1342, %v1348
        %v1412 = vmul.f32 %v1346, %v1348
        %v1413 = vadd.f32 %v1027, %v1349
        %v1414 = vadd.f32 %v1028, %v1350
        %v1415 = vadd.f32 %v1029, %v1351
        %v1416 = vadd.f32 %v1030, %v1352
        %v1417 = vadd.f32 %v1031, %v1353
        %v1418 = vadd.f32 %v1032, %v1354
        %v1419 = vadd.f32 %v1033, %v1355
        %v1420 = vadd.f32 %v1034, %v1356
        %v1421 = vadd.f32 %v1035, %v1357
        %v1422 = vadd.f32 %v1036, %v1358
        %v1423 = vadd.f32 %v1037, %v1359
        %v1424 = vadd.f32 %v1038, %v1360
        %v1425 = vadd.f32 %v1039, %v1361
        %v1426 = vadd.f32 %v1040, %v1362
        %v1427 = vadd.f32 %v1041, %v1363
        %v1428 = vadd.f32 %v1042, %v1364
        %v1429 = vadd.f32 %v1043, %v1365
        %v1430 = vadd.f32 %v1044, %v1366
        %v1431 = vadd.f32 %v1045, %v1367
        %v1432 = vadd.f32 %v1046, %v1368
        %v1433 = vadd.f32 %v1047, %v1369
        %v1434 = vadd.f32 %v1048, %v1370
        %v1435 = vadd.f32 %v1049, %v1371
        %v1436 = vadd.f32 %v1050, %v1372
        %v1437 = vadd.f32 %v1051, %v1373
        %v1438 = vadd.f32 %v1052, %v1374
        %v1439 = vadd.f32 %v1053, %v1375
        %v1440 = vadd.f32 %v1054, %v1376
        %v1441 = vadd.f32 %v1055, %v1377
        %v1442 = vadd.f32 %v1056, %v1378
        %v1443 = vadd.f32 %v1057, %v1379
        %v1444 = vadd.f32 %v1058, %v1380
        %v1445 = vadd.f32 %v1059, %v1381
        %v1446 = vadd.f32 %v1060, %v1382
        %v1447 = vadd.f32 %v1061, %v1383
        %v1448 = vadd.f32 %v1062, %v1384
        %v1449 = vadd.f32 %v1063, %v1385
        %v1450 = vadd.f32 %v1064, %v1386
        %v1451 = vadd.f32 %v1065, %v1387
        %v1452 = vadd.f32 %v1066, %v1388
        %v1453 = vadd.f32 %v1067, %v1389
        %v1454 = vadd.f32 %v1068, %v1390
        %v1455 = vadd.f32 %v1069, %v1391
        %v1456 = vadd.f32 %v1070, %v1392
        %v1457 = vadd.f32 %v1071, %v1393
        %v1458 = vadd.f32 %v1072, %v1394
        %v1459 = vadd.f32 %v1073, %v1395
        %v1460 = vadd.f32 %v1074, %v1396
        %v1461 = vadd.f32 %v1075, %v1397
        %v1462 = vadd.f32 %v1076, %v1398
        %v1463 = vadd.f32 %v1077, %v1399
        %v1464 = vadd.f32 %v1078, %v1400
        %v1465 = vadd.f32 %v1079, %v1401
        %v1466 = vadd.f32 %v1080, %v1402
        %v1467 = vadd.f32 %v1081, %v1403
        %v1468 = vadd.f32 %v1082, %v1404
        %v1469 = vadd.f32 %v1083, %v1405
        %v1470 = vadd.f32 %v1084, %v1406
        %v1471 = vadd.f32 %v1085, %v1407
        %v1472 = vadd.f32 %v1086, %v1408
        %v1473 = vadd.f32 %v1087, %v1409
        %v1474 = vadd.f32 %v1088, %v1410
        %v1475 = vadd.f32 %v1089, %v1411
        %v1476 = vadd.f32 %v1090, %v1412
        %v1477 = vld [vmem:[%s3] sm:$0x1]
        %v1478 = vperm.slane %v1477, 0
        %v1479 = vadd.f32 %v1413, %v1478
        %v1480 = vadd.f32 %v1414, %v1478
        %v1481 = vadd.f32 %v1415, %v1478
        %v1482 = vadd.f32 %v1416, %v1478
        %v1483 = vadd.f32 %v1417, %v1478
        %v1484 = vadd.f32 %v1418, %v1478
        %v1485 = vadd.f32 %v1419, %v1478
        %v1486 = vadd.f32 %v1420, %v1478
        %v1487 = vadd.f32 %v1421, %v1478
        %v1488 = vadd.f32 %v1422, %v1478
        %v1489 = vadd.f32 %v1423, %v1478
        %v1490 = vadd.f32 %v1424, %v1478
        %v1491 = vadd.f32 %v1425, %v1478
        %v1492 = vadd.f32 %v1426, %v1478
        %v1493 = vadd.f32 %v1427, %v1478
        %v1494 = vadd.f32 %v1428, %v1478
        %v1495 = vadd.f32 %v1429, %v1478
        %v1496 = vadd.f32 %v1430, %v1478
        %v1497 = vadd.f32 %v1431, %v1478
        %v1498 = vadd.f32 %v1432, %v1478
        %v1499 = vadd.f32 %v1433, %v1478
        %v1500 = vadd.f32 %v1434, %v1478
        %v1501 = vadd.f32 %v1435, %v1478
        %v1502 = vadd.f32 %v1436, %v1478
        %v1503 = vadd.f32 %v1437, %v1478
        %v1504 = vadd.f32 %v1438, %v1478
        %v1505 = vadd.f32 %v1439, %v1478
        %v1506 = vadd.f32 %v1440, %v1478
        %v1507 = vadd.f32 %v1441, %v1478
        %v1508 = vadd.f32 %v1442, %v1478
        %v1509 = vadd.f32 %v1443, %v1478
        %v1510 = vadd.f32 %v1444, %v1478
        %v1511 = vadd.f32 %v1445, %v1478
        %v1512 = vadd.f32 %v1446, %v1478
        %v1513 = vadd.f32 %v1447, %v1478
        %v1514 = vadd.f32 %v1448, %v1478
        %v1515 = vadd.f32 %v1449, %v1478
        %v1516 = vadd.f32 %v1450, %v1478
        %v1517 = vadd.f32 %v1451, %v1478
        %v1518 = vadd.f32 %v1452, %v1478
        %v1519 = vadd.f32 %v1453, %v1478
        %v1520 = vadd.f32 %v1454, %v1478
        %v1521 = vadd.f32 %v1455, %v1478
        %v1522 = vadd.f32 %v1456, %v1478
        %v1523 = vadd.f32 %v1457, %v1478
        %v1524 = vadd.f32 %v1458, %v1478
        %v1525 = vadd.f32 %v1459, %v1478
        %v1526 = vadd.f32 %v1460, %v1478
        %v1527 = vadd.f32 %v1461, %v1478
        %v1528 = vadd.f32 %v1462, %v1478
        %v1529 = vadd.f32 %v1463, %v1478
        %v1530 = vadd.f32 %v1464, %v1478
        %v1531 = vadd.f32 %v1465, %v1478
        %v1532 = vadd.f32 %v1466, %v1478
        %v1533 = vadd.f32 %v1467, %v1478
        %v1534 = vadd.f32 %v1468, %v1478
        %v1535 = vadd.f32 %v1469, %v1478
        %v1536 = vadd.f32 %v1470, %v1478
        %v1537 = vadd.f32 %v1471, %v1478
        %v1538 = vadd.f32 %v1472, %v1478
        %v1539 = vadd.f32 %v1473, %v1478
        %v1540 = vadd.f32 %v1474, %v1478
        %v1541 = vadd.f32 %v1475, %v1478
        %v1542 = vadd.f32 %v1476, %v1478
        %v1543 = vmax.f32 %v1479, 0.0
        %v1544 = vmax.f32 %v1480, 0.0
        %v1545 = vmax.f32 %v1481, 0.0
        %v1546 = vmax.f32 %v1482, 0.0
        %v1547 = vmax.f32 %v1483, 0.0
        %v1548 = vmax.f32 %v1484, 0.0
        %v1549 = vmax.f32 %v1485, 0.0
        %v1550 = vmax.f32 %v1486, 0.0
        %v1551 = vmax.f32 %v1487, 0.0
        %v1552 = vmax.f32 %v1488, 0.0
        %v1553 = vmax.f32 %v1489, 0.0
        %v1554 = vmax.f32 %v1490, 0.0
        %v1555 = vmax.f32 %v1491, 0.0
        %v1556 = vmax.f32 %v1492, 0.0
        %v1557 = vmax.f32 %v1493, 0.0
        %v1558 = vmax.f32 %v1494, 0.0
        %v1559 = vmax.f32 %v1495, 0.0
        %v1560 = vmax.f32 %v1496, 0.0
        %v1561 = vmax.f32 %v1497, 0.0
        %v1562 = vmax.f32 %v1498, 0.0
        %v1563 = vmax.f32 %v1499, 0.0
        %v1564 = vmax.f32 %v1500, 0.0
        %v1565 = vmax.f32 %v1501, 0.0
        %v1566 = vmax.f32 %v1502, 0.0
        %v1567 = vmax.f32 %v1503, 0.0
        %v1568 = vmax.f32 %v1504, 0.0
        %v1569 = vmax.f32 %v1505, 0.0
        %v1570 = vmax.f32 %v1506, 0.0
        %v1571 = vmax.f32 %v1507, 0.0
        %v1572 = vmax.f32 %v1508, 0.0
        %v1573 = vmax.f32 %v1509, 0.0
        %v1574 = vmax.f32 %v1510, 0.0
        %v1575 = vmax.f32 %v1511, 0.0
        %v1576 = vmax.f32 %v1512, 0.0
        %v1577 = vmax.f32 %v1513, 0.0
        %v1578 = vmax.f32 %v1514, 0.0
        %v1579 = vmax.f32 %v1515, 0.0
        %v1580 = vmax.f32 %v1516, 0.0
        %v1581 = vmax.f32 %v1517, 0.0
        %v1582 = vmax.f32 %v1518, 0.0
        %v1583 = vmax.f32 %v1519, 0.0
        %v1584 = vmax.f32 %v1520, 0.0
        %v1585 = vmax.f32 %v1521, 0.0
        %v1586 = vmax.f32 %v1522, 0.0
        %v1587 = vmax.f32 %v1523, 0.0
        %v1588 = vmax.f32 %v1524, 0.0
        %v1589 = vmax.f32 %v1525, 0.0
        %v1590 = vmax.f32 %v1526, 0.0
        %v1591 = vmax.f32 %v1527, 0.0
        %v1592 = vmax.f32 %v1528, 0.0
        %v1593 = vmax.f32 %v1529, 0.0
        %v1594 = vmax.f32 %v1530, 0.0
        %v1595 = vmax.f32 %v1531, 0.0
        %v1596 = vmax.f32 %v1532, 0.0
        %v1597 = vmax.f32 %v1533, 0.0
        %v1598 = vmax.f32 %v1534, 0.0
        %v1599 = vmax.f32 %v1535, 0.0
        %v1600 = vmax.f32 %v1536, 0.0
        %v1601 = vmax.f32 %v1537, 0.0
        %v1602 = vmax.f32 %v1538, 0.0
        %v1603 = vmax.f32 %v1539, 0.0
        %v1604 = vmax.f32 %v1540, 0.0
        %v1605 = vmax.f32 %v1541, 0.0
        %v1606 = vmax.f32 %v1542, 0.0
        %v1607 = vpack.c.bf16 %v1544, %v1543
        %v1608 = vpack.c.bf16 %v1546, %v1545
        %v1609 = vpack.c.bf16 %v1548, %v1547
        %v1610 = vpack.c.bf16 %v1550, %v1549
        %v1611 = vpack.c.bf16 %v1552, %v1551
        %v1612 = vpack.c.bf16 %v1554, %v1553
        %v1613 = vpack.c.bf16 %v1556, %v1555
        %v1614 = vpack.c.bf16 %v1558, %v1557
        %v1615 = vpack.c.bf16 %v1560, %v1559
        %v1616 = vpack.c.bf16 %v1562, %v1561
        %v1617 = vpack.c.bf16 %v1564, %v1563
        %v1618 = vpack.c.bf16 %v1566, %v1565
        %v1619 = vpack.c.bf16 %v1568, %v1567
        %v1620 = vpack.c.bf16 %v1570, %v1569
        %v1621 = vpack.c.bf16 %v1572, %v1571
        %v1622 = vpack.c.bf16 %v1574, %v1573
        %v1623 = vpack.c.bf16 %v1576, %v1575
        %v1624 = vpack.c.bf16 %v1578, %v1577
        %v1625 = vpack.c.bf16 %v1580, %v1579
        %v1626 = vpack.c.bf16 %v1582, %v1581
        %v1627 = vpack.c.bf16 %v1584, %v1583
        %v1628 = vpack.c.bf16 %v1586, %v1585
        %v1629 = vpack.c.bf16 %v1588, %v1587
        %v1630 = vpack.c.bf16 %v1590, %v1589
        %v1631 = vpack.c.bf16 %v1592, %v1591
        %v1632 = vpack.c.bf16 %v1594, %v1593
        %v1633 = vpack.c.bf16 %v1596, %v1595
        %v1634 = vpack.c.bf16 %v1598, %v1597
        %v1635 = vpack.c.bf16 %v1600, %v1599
        %v1636 = vpack.c.bf16 %v1602, %v1601
        %v1637 = vpack.c.bf16 %v1604, %v1603
        %v1638 = vpack.c.bf16 %v1606, %v1605
        %v1639 = vld [vmem:[%s2] sm:$0xf]
        %v1640 = vld [vmem:[%s2 + $0x4] sm:$0xf]
        %v1641 = vld [vmem:[%s2 + $0x8] sm:$0xf]
        %v1642 = vld [vmem:[%s2 + $0xc] sm:$0xf]
        %v1643 = vld [vmem:[%s2 + $0x10] sm:$0xf]
        %v1644 = vld [vmem:[%s2 + $0x14] sm:$0xf]
        %v1645 = vld [vmem:[%s2 + $0x18] sm:$0xf]
        %v1646 = vld [vmem:[%s2 + $0x1c] sm:$0xf]
        %v1647 = vld [vmem:[%s2 + $0x20] sm:$0xf]
        %v1648 = vld [vmem:[%s2 + $0x24] sm:$0xf]
        %v1649 = vld [vmem:[%s2 + $0x28] sm:$0xf]
        %v1650 = vld [vmem:[%s2 + $0x2c] sm:$0xf]
        %v1651 = vld [vmem:[%s2 + $0x30] sm:$0xf]
        %v1652 = vld [vmem:[%s2 + $0x34] sm:$0xf]
        %v1653 = vld [vmem:[%s2 + $0x38] sm:$0xf]
        %v1654 = vld [vmem:[%s2 + $0x3c] sm:$0xf]
        %v1655 = vld [vmem:[%s3 + $0x1] sm:$0x1]
        %v1656 = vperm.slane %v1655, 0
        %v1673 = vunpack.c.l.b16 %v1639
        %v1674 = vunpack.c.l.b16 %v1640
        %v1675 = vunpack.c.l.b16 %v1641
        %v1676 = vunpack.c.l.b16 %v1642
        %v1677 = vunpack.c.l.b16 %v1643
        %v1678 = vunpack.c.l.b16 %v1644
        %v1679 = vunpack.c.l.b16 %v1645
        %v1680 = vunpack.c.l.b16 %v1646
        %v1681 = vunpack.c.l.b16 %v1647
        %v1682 = vunpack.c.l.b16 %v1648
        %v1683 = vunpack.c.l.b16 %v1649
        %v1684 = vunpack.c.l.b16 %v1650
        %v1685 = vunpack.c.l.b16 %v1651
        %v1686 = vunpack.c.l.b16 %v1652
        %v1687 = vunpack.c.l.b16 %v1653
        %v1688 = vunpack.c.l.b16 %v1654
        %v1689 = vpack.c.b16 %v1674, %v1673
        %v1690 = vpack.c.b16 %v1676, %v1675
        %v1691 = vpack.c.b16 %v1678, %v1677
        %v1692 = vpack.c.b16 %v1680, %v1679
        %v1693 = vpack.c.b16 %v1682, %v1681
        %v1694 = vpack.c.b16 %v1684, %v1683
        %v1695 = vpack.c.b16 %v1686, %v1685
        %v1696 = vpack.c.b16 %v1688, %v1687
        %1705 = vmatpush.bf16.msra.mxu0 %v1696
        %1706 = vmatpush.bf16.msra.mxu0 %v1695
        %1707 = vmatpush.bf16.msra.mxu0 %v1694
        %1708 = vmatpush.bf16.msra.mxu0 %v1693
        %1709 = vmatpush.bf16.msra.mxu0 %v1692
        %1710 = vmatpush.bf16.msra.mxu0 %v1691
        %1711 = vmatpush.bf16.msra.mxu0 %v1690
        %1712 = vmatpush.bf16.msra.mxu0 %v1689
        %1713 = vmatmul.bf16.gmra.mxu0 %v1607
        %v1714 = vpop.f32.mrf.mxu0
        %v1715 = vadd.f32 %v1656, %v1714
        %v1716 = vpop.f32.mrf.mxu0
        %v1717 = vadd.f32 %v1656, %v1716
        %1718 = vmatmul.bf16.gmra.mxu0 %v1608
        %v1719 = vpop.f32.mrf.mxu0
        %v1720 = vadd.f32 %v1656, %v1719
        %v1721 = vpop.f32.mrf.mxu0
        %v1722 = vadd.f32 %v1656, %v1721
        %1723 = vmatmul.bf16.gmra.mxu0 %v1609
        %v1724 = vpop.f32.mrf.mxu0
        %v1725 = vadd.f32 %v1656, %v1724
        %v1726 = vpop.f32.mrf.mxu0
        %v1727 = vadd.f32 %v1656, %v1726
        %1728 = vmatmul.bf16.gmra.mxu0 %v1610
        %v1729 = vpop.f32.mrf.mxu0
        %v1730 = vadd.f32 %v1656, %v1729
        %v1731 = vpop.f32.mrf.mxu0
        %v1732 = vadd.f32 %v1656, %v1731
        %1733 = vmatmul.bf16.gmra.mxu0 %v1611
        %v1734 = vpop.f32.mrf.mxu0
        %v1735 = vadd.f32 %v1656, %v1734
        %v1736 = vpop.f32.mrf.mxu0
        %v1737 = vadd.f32 %v1656, %v1736
        %1738 = vmatmul.bf16.gmra.mxu0 %v1612
        %v1739 = vpop.f32.mrf.mxu0
        %v1740 = vadd.f32 %v1656, %v1739
        %v1741 = vpop.f32.mrf.mxu0
        %v1742 = vadd.f32 %v1656, %v1741
        %1743 = vmatmul.bf16.gmra.mxu0 %v1613
        %v1744 = vpop.f32.mrf.mxu0
        %v1745 = vadd.f32 %v1656, %v1744
        %v1746 = vpop.f32.mrf.mxu0
        %v1747 = vadd.f32 %v1656, %v1746
        %1748 = vmatmul.bf16.gmra.mxu0 %v1614
        %v1749 = vpop.f32.mrf.mxu0
        %v1750 = vadd.f32 %v1656, %v1749
        %v1751 = vpop.f32.mrf.mxu0
        %v1752 = vadd.f32 %v1656, %v1751
        %1753 = vmatmul.bf16.gmra.mxu0 %v1615
        %v1754 = vpop.f32.mrf.mxu0
        %v1755 = vadd.f32 %v1656, %v1754
        %v1756 = vpop.f32.mrf.mxu0
        %v1757 = vadd.f32 %v1656, %v1756
        %1758 = vmatmul.bf16.gmra.mxu0 %v1616
        %v1759 = vpop.f32.mrf.mxu0
        %v1760 = vadd.f32 %v1656, %v1759
        %v1761 = vpop.f32.mrf.mxu0
        %v1762 = vadd.f32 %v1656, %v1761
        %1763 = vmatmul.bf16.gmra.mxu0 %v1617
        %v1764 = vpop.f32.mrf.mxu0
        %v1765 = vadd.f32 %v1656, %v1764
        %v1766 = vpop.f32.mrf.mxu0
        %v1767 = vadd.f32 %v1656, %v1766
        %1768 = vmatmul.bf16.gmra.mxu0 %v1618
        %v1769 = vpop.f32.mrf.mxu0
        %v1770 = vadd.f32 %v1656, %v1769
        %v1771 = vpop.f32.mrf.mxu0
        %v1772 = vadd.f32 %v1656, %v1771
        %1773 = vmatmul.bf16.gmra.mxu0 %v1619
        %v1774 = vpop.f32.mrf.mxu0
        %v1775 = vadd.f32 %v1656, %v1774
        %v1776 = vpop.f32.mrf.mxu0
        %v1777 = vadd.f32 %v1656, %v1776
        %1778 = vmatmul.bf16.gmra.mxu0 %v1620
        %v1779 = vpop.f32.mrf.mxu0
        %v1780 = vadd.f32 %v1656, %v1779
        %v1781 = vpop.f32.mrf.mxu0
        %v1782 = vadd.f32 %v1656, %v1781
        %1783 = vmatmul.bf16.gmra.mxu0 %v1621
        %v1784 = vpop.f32.mrf.mxu0
        %v1785 = vadd.f32 %v1656, %v1784
        %v1786 = vpop.f32.mrf.mxu0
        %v1787 = vadd.f32 %v1656, %v1786
        %1788 = vmatmul.bf16.gmra.mxu0 %v1622
        %v1789 = vpop.f32.mrf.mxu0
        %v1790 = vadd.f32 %v1656, %v1789
        %v1791 = vpop.f32.mrf.mxu0
        %v1792 = vadd.f32 %v1656, %v1791
        %1793 = vmatmul.bf16.gmra.mxu0 %v1623
        %v1794 = vpop.f32.mrf.mxu0
        %v1795 = vadd.f32 %v1656, %v1794
        %v1796 = vpop.f32.mrf.mxu0
        %v1797 = vadd.f32 %v1656, %v1796
        %1798 = vmatmul.bf16.gmra.mxu0 %v1624
        %v1799 = vpop.f32.mrf.mxu0
        %v1800 = vadd.f32 %v1656, %v1799
        %v1801 = vpop.f32.mrf.mxu0
        %v1802 = vadd.f32 %v1656, %v1801
        %1803 = vmatmul.bf16.gmra.mxu0 %v1625
        %v1804 = vpop.f32.mrf.mxu0
        %v1805 = vadd.f32 %v1656, %v1804
        %v1806 = vpop.f32.mrf.mxu0
        %v1807 = vadd.f32 %v1656, %v1806
        %1808 = vmatmul.bf16.gmra.mxu0 %v1626
        %v1809 = vpop.f32.mrf.mxu0
        %v1810 = vadd.f32 %v1656, %v1809
        %v1811 = vpop.f32.mrf.mxu0
        %v1812 = vadd.f32 %v1656, %v1811
        %1813 = vmatmul.bf16.gmra.mxu0 %v1627
        %v1814 = vpop.f32.mrf.mxu0
        %v1815 = vadd.f32 %v1656, %v1814
        %v1816 = vpop.f32.mrf.mxu0
        %v1817 = vadd.f32 %v1656, %v1816
        %1818 = vmatmul.bf16.gmra.mxu0 %v1628
        %v1819 = vpop.f32.mrf.mxu0
        %v1820 = vadd.f32 %v1656, %v1819
        %v1821 = vpop.f32.mrf.mxu0
        %v1822 = vadd.f32 %v1656, %v1821
        %1823 = vmatmul.bf16.gmra.mxu0 %v1629
        %v1824 = vpop.f32.mrf.mxu0
        %v1825 = vadd.f32 %v1656, %v1824
        %v1826 = vpop.f32.mrf.mxu0
        %v1827 = vadd.f32 %v1656, %v1826
        %1828 = vmatmul.bf16.gmra.mxu0 %v1630
        %v1829 = vpop.f32.mrf.mxu0
        %v1830 = vadd.f32 %v1656, %v1829
        %v1831 = vpop.f32.mrf.mxu0
        %v1832 = vadd.f32 %v1656, %v1831
        %1833 = vmatmul.bf16.gmra.mxu0 %v1631
        %v1834 = vpop.f32.mrf.mxu0
        %v1835 = vadd.f32 %v1656, %v1834
        %v1836 = vpop.f32.mrf.mxu0
        %v1837 = vadd.f32 %v1656, %v1836
        %1838 = vmatmul.bf16.gmra.mxu0 %v1632
        %v1839 = vpop.f32.mrf.mxu0
        %v1840 = vadd.f32 %v1656, %v1839
        %v1841 = vpop.f32.mrf.mxu0
        %v1842 = vadd.f32 %v1656, %v1841
        %1843 = vmatmul.bf16.gmra.mxu0 %v1633
        %v1844 = vpop.f32.mrf.mxu0
        %v1845 = vadd.f32 %v1656, %v1844
        %v1846 = vpop.f32.mrf.mxu0
        %v1847 = vadd.f32 %v1656, %v1846
        %1848 = vmatmul.bf16.gmra.mxu0 %v1634
        %v1849 = vpop.f32.mrf.mxu0
        %v1850 = vadd.f32 %v1656, %v1849
        %v1851 = vpop.f32.mrf.mxu0
        %v1852 = vadd.f32 %v1656, %v1851
        %1853 = vmatmul.bf16.gmra.mxu0 %v1635
        %v1854 = vpop.f32.mrf.mxu0
        %v1855 = vadd.f32 %v1656, %v1854
        %v1856 = vpop.f32.mrf.mxu0
        %v1857 = vadd.f32 %v1656, %v1856
        %1858 = vmatmul.bf16.gmra.mxu0 %v1636
        %v1859 = vpop.f32.mrf.mxu0
        %v1860 = vadd.f32 %v1656, %v1859
        %v1861 = vpop.f32.mrf.mxu0
        %v1862 = vadd.f32 %v1656, %v1861
        %1863 = vmatmul.bf16.gmra.mxu0 %v1637
        %v1864 = vpop.f32.mrf.mxu0
        %v1865 = vadd.f32 %v1656, %v1864
        %v1866 = vpop.f32.mrf.mxu0
        %v1867 = vadd.f32 %v1656, %v1866
        %1868 = vmatmul.bf16.gmra.mxu0 %v1638
        %v1869 = vpop.f32.mrf.mxu0
        %v1870 = vadd.f32 %v1656, %v1869
        %v1871 = vpop.f32.mrf.mxu0
        %v1872 = vadd.f32 %v1656, %v1871
        %1873 = vdwg.mxu0
        %v1874 = vmax.f32 %v1715, 0.0
        %v1875 = vmax.f32 %v1717, 0.0
        %v1876 = vmax.f32 %v1720, 0.0
        %v1877 = vmax.f32 %v1722, 0.0
        %v1878 = vmax.f32 %v1725, 0.0
        %v1879 = vmax.f32 %v1727, 0.0
        %v1880 = vmax.f32 %v1730, 0.0
        %v1881 = vmax.f32 %v1732, 0.0
        %v1882 = vmax.f32 %v1735, 0.0
        %v1883 = vmax.f32 %v1737, 0.0
        %v1884 = vmax.f32 %v1740, 0.0
        %v1885 = vmax.f32 %v1742, 0.0
        %v1886 = vmax.f32 %v1745, 0.0
        %v1887 = vmax.f32 %v1747, 0.0
        %v1888 = vmax.f32 %v1750, 0.0
        %v1889 = vmax.f32 %v1752, 0.0
        %v1890 = vmax.f32 %v1755, 0.0
        %v1891 = vmax.f32 %v1757, 0.0
        %v1892 = vmax.f32 %v1760, 0.0
        %v1893 = vmax.f32 %v1762, 0.0
        %v1894 = vmax.f32 %v1765, 0.0
        %v1895 = vmax.f32 %v1767, 0.0
        %v1896 = vmax.f32 %v1770, 0.0
        %v1897 = vmax.f32 %v1772, 0.0
        %v1898 = vmax.f32 %v1775, 0.0
        %v1899 = vmax.f32 %v1777, 0.0
        %v1900 = vmax.f32 %v1780, 0.0
        %v1901 = vmax.f32 %v1782, 0.0
        %v1902 = vmax.f32 %v1785, 0.0
        %v1903 = vmax.f32 %v1787, 0.0
        %v1904 = vmax.f32 %v1790, 0.0
        %v1905 = vmax.f32 %v1792, 0.0
        %v1906 = vmax.f32 %v1795, 0.0
        %v1907 = vmax.f32 %v1797, 0.0
        %v1908 = vmax.f32 %v1800, 0.0
        %v1909 = vmax.f32 %v1802, 0.0
        %v1910 = vmax.f32 %v1805, 0.0
        %v1911 = vmax.f32 %v1807, 0.0
        %v1912 = vmax.f32 %v1810, 0.0
        %v1913 = vmax.f32 %v1812, 0.0
        %v1914 = vmax.f32 %v1815, 0.0
        %v1915 = vmax.f32 %v1817, 0.0
        %v1916 = vmax.f32 %v1820, 0.0
        %v1917 = vmax.f32 %v1822, 0.0
        %v1918 = vmax.f32 %v1825, 0.0
        %v1919 = vmax.f32 %v1827, 0.0
        %v1920 = vmax.f32 %v1830, 0.0
        %v1921 = vmax.f32 %v1832, 0.0
        %v1922 = vmax.f32 %v1835, 0.0
        %v1923 = vmax.f32 %v1837, 0.0
        %v1924 = vmax.f32 %v1840, 0.0
        %v1925 = vmax.f32 %v1842, 0.0
        %v1926 = vmax.f32 %v1845, 0.0
        %v1927 = vmax.f32 %v1847, 0.0
        %v1928 = vmax.f32 %v1850, 0.0
        %v1929 = vmax.f32 %v1852, 0.0
        %v1930 = vmax.f32 %v1855, 0.0
        %v1931 = vmax.f32 %v1857, 0.0
        %v1932 = vmax.f32 %v1860, 0.0
        %v1933 = vmax.f32 %v1862, 0.0
        %v1934 = vmax.f32 %v1865, 0.0
        %v1935 = vmax.f32 %v1867, 0.0
        %v1936 = vmax.f32 %v1870, 0.0
        %v1937 = vmax.f32 %v1872, 0.0
        %v1938 = vpack.c.bf16 %v1875, %v1874
        %v1939 = vpack.c.bf16 %v1877, %v1876
        %v1940 = vpack.c.bf16 %v1879, %v1878
        %v1941 = vpack.c.bf16 %v1881, %v1880
        %v1942 = vpack.c.bf16 %v1883, %v1882
        %v1943 = vpack.c.bf16 %v1885, %v1884
        %v1944 = vpack.c.bf16 %v1887, %v1886
        %v1945 = vpack.c.bf16 %v1889, %v1888
        %v1946 = vpack.c.bf16 %v1891, %v1890
        %v1947 = vpack.c.bf16 %v1893, %v1892
        %v1948 = vpack.c.bf16 %v1895, %v1894
        %v1949 = vpack.c.bf16 %v1897, %v1896
        %v1950 = vpack.c.bf16 %v1899, %v1898
        %v1951 = vpack.c.bf16 %v1901, %v1900
        %v1952 = vpack.c.bf16 %v1903, %v1902
        %v1953 = vpack.c.bf16 %v1905, %v1904
        %v1954 = vpack.c.bf16 %v1907, %v1906
        %v1955 = vpack.c.bf16 %v1909, %v1908
        %v1956 = vpack.c.bf16 %v1911, %v1910
        %v1957 = vpack.c.bf16 %v1913, %v1912
        %v1958 = vpack.c.bf16 %v1915, %v1914
        %v1959 = vpack.c.bf16 %v1917, %v1916
        %v1960 = vpack.c.bf16 %v1919, %v1918
        %v1961 = vpack.c.bf16 %v1921, %v1920
        %v1962 = vpack.c.bf16 %v1923, %v1922
        %v1963 = vpack.c.bf16 %v1925, %v1924
        %v1964 = vpack.c.bf16 %v1927, %v1926
        %v1965 = vpack.c.bf16 %v1929, %v1928
        %v1966 = vpack.c.bf16 %v1931, %v1930
        %v1967 = vpack.c.bf16 %v1933, %v1932
        %v1968 = vpack.c.bf16 %v1935, %v1934
        %v1969 = vpack.c.bf16 %v1937, %v1936
        %s1970 = scalar_lea.vmem %s2, 64
        %v1971 = vld [vmem:[%s1970] sm:$0xf]
        %v1972 = vld [vmem:[%s1970 + $0x4] sm:$0xf]
        %v1973 = vld [vmem:[%s1970 + $0x8] sm:$0xf]
        %v1974 = vld [vmem:[%s1970 + $0xc] sm:$0xf]
        %v1975 = vld [vmem:[%s1970 + $0x10] sm:$0xf]
        %v1976 = vld [vmem:[%s1970 + $0x14] sm:$0xf]
        %v1977 = vld [vmem:[%s1970 + $0x18] sm:$0xf]
        %v1978 = vld [vmem:[%s1970 + $0x1c] sm:$0xf]
        %v1979 = vld [vmem:[%s1970 + $0x20] sm:$0xf]
        %v1980 = vld [vmem:[%s1970 + $0x24] sm:$0xf]
        %v1981 = vld [vmem:[%s1970 + $0x28] sm:$0xf]
        %v1982 = vld [vmem:[%s1970 + $0x2c] sm:$0xf]
        %v1983 = vld [vmem:[%s1970 + $0x30] sm:$0xf]
        %v1984 = vld [vmem:[%s1970 + $0x34] sm:$0xf]
        %v1985 = vld [vmem:[%s1970 + $0x38] sm:$0xf]
        %v1986 = vld [vmem:[%s1970 + $0x3c] sm:$0xf]
        %v1987 = vld [vmem:[%s3 + $0x2] sm:$0x1]
        %v1988 = vperm.slane %v1987, 0
        %v2005 = vunpack.c.l.b16 %v1971
        %v2006 = vunpack.c.l.b16 %v1972
        %v2007 = vunpack.c.l.b16 %v1973
        %v2008 = vunpack.c.l.b16 %v1974
        %v2009 = vunpack.c.l.b16 %v1975
        %v2010 = vunpack.c.l.b16 %v1976
        %v2011 = vunpack.c.l.b16 %v1977
        %v2012 = vunpack.c.l.b16 %v1978
        %v2013 = vunpack.c.l.b16 %v1979
        %v2014 = vunpack.c.l.b16 %v1980
        %v2015 = vunpack.c.l.b16 %v1981
        %v2016 = vunpack.c.l.b16 %v1982
        %v2017 = vunpack.c.l.b16 %v1983
        %v2018 = vunpack.c.l.b16 %v1984
        %v2019 = vunpack.c.l.b16 %v1985
        %v2020 = vunpack.c.l.b16 %v1986
        %v2021 = vpack.c.b16 %v2006, %v2005
        %v2022 = vpack.c.b16 %v2008, %v2007
        %v2023 = vpack.c.b16 %v2010, %v2009
        %v2024 = vpack.c.b16 %v2012, %v2011
        %v2025 = vpack.c.b16 %v2014, %v2013
        %v2026 = vpack.c.b16 %v2016, %v2015
        %v2027 = vpack.c.b16 %v2018, %v2017
        %v2028 = vpack.c.b16 %v2020, %v2019
        %2037 = vmatpush.bf16.msra.mxu0 %v2028
        %2038 = vmatpush.bf16.msra.mxu0 %v2027
        %2039 = vmatpush.bf16.msra.mxu0 %v2026
        %2040 = vmatpush.bf16.msra.mxu0 %v2025
        %2041 = vmatpush.bf16.msra.mxu0 %v2024
        %2042 = vmatpush.bf16.msra.mxu0 %v2023
        %2043 = vmatpush.bf16.msra.mxu0 %v2022
        %2044 = vmatpush.bf16.msra.mxu0 %v2021
        %2045 = vmatmul.bf16.gmra.mxu0 %v1938
        %v2046 = vpop.f32.mrf.mxu0
        %v2047 = vadd.f32 %v1988, %v2046
        %v2048 = vpop.f32.mrf.mxu0
        %v2049 = vadd.f32 %v1988, %v2048
        %2050 = vmatmul.bf16.gmra.mxu0 %v1939
        %v2051 = vpop.f32.mrf.mxu0
        %v2052 = vadd.f32 %v1988, %v2051
        %v2053 = vpop.f32.mrf.mxu0
        %v2054 = vadd.f32 %v1988, %v2053
        %2055 = vmatmul.bf16.gmra.mxu0 %v1940
        %v2056 = vpop.f32.mrf.mxu0
        %v2057 = vadd.f32 %v1988, %v2056
        %v2058 = vpop.f32.mrf.mxu0
        %v2059 = vadd.f32 %v1988, %v2058
        %2060 = vmatmul.bf16.gmra.mxu0 %v1941
        %v2061 = vpop.f32.mrf.mxu0
        %v2062 = vadd.f32 %v1988, %v2061
        %v2063 = vpop.f32.mrf.mxu0
        %v2064 = vadd.f32 %v1988, %v2063
        %2065 = vmatmul.bf16.gmra.mxu0 %v1942
        %v2066 = vpop.f32.mrf.mxu0
        %v2067 = vadd.f32 %v1988, %v2066
        %v2068 = vpop.f32.mrf.mxu0
        %v2069 = vadd.f32 %v1988, %v2068
        %2070 = vmatmul.bf16.gmra.mxu0 %v1943
        %v2071 = vpop.f32.mrf.mxu0
        %v2072 = vadd.f32 %v1988, %v2071
        %v2073 = vpop.f32.mrf.mxu0
        %v2074 = vadd.f32 %v1988, %v2073
        %2075 = vmatmul.bf16.gmra.mxu0 %v1944
        %v2076 = vpop.f32.mrf.mxu0
        %v2077 = vadd.f32 %v1988, %v2076
        %v2078 = vpop.f32.mrf.mxu0
        %v2079 = vadd.f32 %v1988, %v2078
        %2080 = vmatmul.bf16.gmra.mxu0 %v1945
        %v2081 = vpop.f32.mrf.mxu0
        %v2082 = vadd.f32 %v1988, %v2081
        %v2083 = vpop.f32.mrf.mxu0
        %v2084 = vadd.f32 %v1988, %v2083
        %2085 = vmatmul.bf16.gmra.mxu0 %v1946
        %v2086 = vpop.f32.mrf.mxu0
        %v2087 = vadd.f32 %v1988, %v2086
        %v2088 = vpop.f32.mrf.mxu0
        %v2089 = vadd.f32 %v1988, %v2088
        %2090 = vmatmul.bf16.gmra.mxu0 %v1947
        %v2091 = vpop.f32.mrf.mxu0
        %v2092 = vadd.f32 %v1988, %v2091
        %v2093 = vpop.f32.mrf.mxu0
        %v2094 = vadd.f32 %v1988, %v2093
        %2095 = vmatmul.bf16.gmra.mxu0 %v1948
        %v2096 = vpop.f32.mrf.mxu0
        %v2097 = vadd.f32 %v1988, %v2096
        %v2098 = vpop.f32.mrf.mxu0
        %v2099 = vadd.f32 %v1988, %v2098
        %2100 = vmatmul.bf16.gmra.mxu0 %v1949
        %v2101 = vpop.f32.mrf.mxu0
        %v2102 = vadd.f32 %v1988, %v2101
        %v2103 = vpop.f32.mrf.mxu0
        %v2104 = vadd.f32 %v1988, %v2103
        %2105 = vmatmul.bf16.gmra.mxu0 %v1950
        %v2106 = vpop.f32.mrf.mxu0
        %v2107 = vadd.f32 %v1988, %v2106
        %v2108 = vpop.f32.mrf.mxu0
        %v2109 = vadd.f32 %v1988, %v2108
        %2110 = vmatmul.bf16.gmra.mxu0 %v1951
        %v2111 = vpop.f32.mrf.mxu0
        %v2112 = vadd.f32 %v1988, %v2111
        %v2113 = vpop.f32.mrf.mxu0
        %v2114 = vadd.f32 %v1988, %v2113
        %2115 = vmatmul.bf16.gmra.mxu0 %v1952
        %v2116 = vpop.f32.mrf.mxu0
        %v2117 = vadd.f32 %v1988, %v2116
        %v2118 = vpop.f32.mrf.mxu0
        %v2119 = vadd.f32 %v1988, %v2118
        %2120 = vmatmul.bf16.gmra.mxu0 %v1953
        %v2121 = vpop.f32.mrf.mxu0
        %v2122 = vadd.f32 %v1988, %v2121
        %v2123 = vpop.f32.mrf.mxu0
        %v2124 = vadd.f32 %v1988, %v2123
        %2125 = vmatmul.bf16.gmra.mxu0 %v1954
        %v2126 = vpop.f32.mrf.mxu0
        %v2127 = vadd.f32 %v1988, %v2126
        %v2128 = vpop.f32.mrf.mxu0
        %v2129 = vadd.f32 %v1988, %v2128
        %2130 = vmatmul.bf16.gmra.mxu0 %v1955
        %v2131 = vpop.f32.mrf.mxu0
        %v2132 = vadd.f32 %v1988, %v2131
        %v2133 = vpop.f32.mrf.mxu0
        %v2134 = vadd.f32 %v1988, %v2133
        %2135 = vmatmul.bf16.gmra.mxu0 %v1956
        %v2136 = vpop.f32.mrf.mxu0
        %v2137 = vadd.f32 %v1988, %v2136
        %v2138 = vpop.f32.mrf.mxu0
        %v2139 = vadd.f32 %v1988, %v2138
        %2140 = vmatmul.bf16.gmra.mxu0 %v1957
        %v2141 = vpop.f32.mrf.mxu0
        %v2142 = vadd.f32 %v1988, %v2141
        %v2143 = vpop.f32.mrf.mxu0
        %v2144 = vadd.f32 %v1988, %v2143
        %2145 = vmatmul.bf16.gmra.mxu0 %v1958
        %v2146 = vpop.f32.mrf.mxu0
        %v2147 = vadd.f32 %v1988, %v2146
        %v2148 = vpop.f32.mrf.mxu0
        %v2149 = vadd.f32 %v1988, %v2148
        %2150 = vmatmul.bf16.gmra.mxu0 %v1959
        %v2151 = vpop.f32.mrf.mxu0
        %v2152 = vadd.f32 %v1988, %v2151
        %v2153 = vpop.f32.mrf.mxu0
        %v2154 = vadd.f32 %v1988, %v2153
        %2155 = vmatmul.bf16.gmra.mxu0 %v1960
        %v2156 = vpop.f32.mrf.mxu0
        %v2157 = vadd.f32 %v1988, %v2156
        %v2158 = vpop.f32.mrf.mxu0
        %v2159 = vadd.f32 %v1988, %v2158
        %2160 = vmatmul.bf16.gmra.mxu0 %v1961
        %v2161 = vpop.f32.mrf.mxu0
        %v2162 = vadd.f32 %v1988, %v2161
        %v2163 = vpop.f32.mrf.mxu0
        %v2164 = vadd.f32 %v1988, %v2163
        %2165 = vmatmul.bf16.gmra.mxu0 %v1962
        %v2166 = vpop.f32.mrf.mxu0
        %v2167 = vadd.f32 %v1988, %v2166
        %v2168 = vpop.f32.mrf.mxu0
        %v2169 = vadd.f32 %v1988, %v2168
        %2170 = vmatmul.bf16.gmra.mxu0 %v1963
        %v2171 = vpop.f32.mrf.mxu0
        %v2172 = vadd.f32 %v1988, %v2171
        %v2173 = vpop.f32.mrf.mxu0
        %v2174 = vadd.f32 %v1988, %v2173
        %2175 = vmatmul.bf16.gmra.mxu0 %v1964
        %v2176 = vpop.f32.mrf.mxu0
        %v2177 = vadd.f32 %v1988, %v2176
        %v2178 = vpop.f32.mrf.mxu0
        %v2179 = vadd.f32 %v1988, %v2178
        %2180 = vmatmul.bf16.gmra.mxu0 %v1965
        %v2181 = vpop.f32.mrf.mxu0
        %v2182 = vadd.f32 %v1988, %v2181
        %v2183 = vpop.f32.mrf.mxu0
        %v2184 = vadd.f32 %v1988, %v2183
        %2185 = vmatmul.bf16.gmra.mxu0 %v1966
        %v2186 = vpop.f32.mrf.mxu0
        %v2187 = vadd.f32 %v1988, %v2186
        %v2188 = vpop.f32.mrf.mxu0
        %v2189 = vadd.f32 %v1988, %v2188
        %2190 = vmatmul.bf16.gmra.mxu0 %v1967
        %v2191 = vpop.f32.mrf.mxu0
        %v2192 = vadd.f32 %v1988, %v2191
        %v2193 = vpop.f32.mrf.mxu0
        %v2194 = vadd.f32 %v1988, %v2193
        %2195 = vmatmul.bf16.gmra.mxu0 %v1968
        %v2196 = vpop.f32.mrf.mxu0
        %v2197 = vadd.f32 %v1988, %v2196
        %v2198 = vpop.f32.mrf.mxu0
        %v2199 = vadd.f32 %v1988, %v2198
        %2200 = vmatmul.bf16.gmra.mxu0 %v1969
        %v2201 = vpop.f32.mrf.mxu0
        %v2202 = vadd.f32 %v1988, %v2201
        %v2203 = vpop.f32.mrf.mxu0
        %v2204 = vadd.f32 %v1988, %v2203
        %2205 = vdwg.mxu0
        %v2206 = vmax.f32 %v2047, 0.0
        %v2207 = vmax.f32 %v2049, 0.0
        %v2208 = vmax.f32 %v2052, 0.0
        %v2209 = vmax.f32 %v2054, 0.0
        %v2210 = vmax.f32 %v2057, 0.0
        %v2211 = vmax.f32 %v2059, 0.0
        %v2212 = vmax.f32 %v2062, 0.0
        %v2213 = vmax.f32 %v2064, 0.0
        %v2214 = vmax.f32 %v2067, 0.0
        %v2215 = vmax.f32 %v2069, 0.0
        %v2216 = vmax.f32 %v2072, 0.0
        %v2217 = vmax.f32 %v2074, 0.0
        %v2218 = vmax.f32 %v2077, 0.0
        %v2219 = vmax.f32 %v2079, 0.0
        %v2220 = vmax.f32 %v2082, 0.0
        %v2221 = vmax.f32 %v2084, 0.0
        %v2222 = vmax.f32 %v2087, 0.0
        %v2223 = vmax.f32 %v2089, 0.0
        %v2224 = vmax.f32 %v2092, 0.0
        %v2225 = vmax.f32 %v2094, 0.0
        %v2226 = vmax.f32 %v2097, 0.0
        %v2227 = vmax.f32 %v2099, 0.0
        %v2228 = vmax.f32 %v2102, 0.0
        %v2229 = vmax.f32 %v2104, 0.0
        %v2230 = vmax.f32 %v2107, 0.0
        %v2231 = vmax.f32 %v2109, 0.0
        %v2232 = vmax.f32 %v2112, 0.0
        %v2233 = vmax.f32 %v2114, 0.0
        %v2234 = vmax.f32 %v2117, 0.0
        %v2235 = vmax.f32 %v2119, 0.0
        %v2236 = vmax.f32 %v2122, 0.0
        %v2237 = vmax.f32 %v2124, 0.0
        %v2238 = vmax.f32 %v2127, 0.0
        %v2239 = vmax.f32 %v2129, 0.0
        %v2240 = vmax.f32 %v2132, 0.0
        %v2241 = vmax.f32 %v2134, 0.0
        %v2242 = vmax.f32 %v2137, 0.0
        %v2243 = vmax.f32 %v2139, 0.0
        %v2244 = vmax.f32 %v2142, 0.0
        %v2245 = vmax.f32 %v2144, 0.0
        %v2246 = vmax.f32 %v2147, 0.0
        %v2247 = vmax.f32 %v2149, 0.0
        %v2248 = vmax.f32 %v2152, 0.0
        %v2249 = vmax.f32 %v2154, 0.0
        %v2250 = vmax.f32 %v2157, 0.0
        %v2251 = vmax.f32 %v2159, 0.0
        %v2252 = vmax.f32 %v2162, 0.0
        %v2253 = vmax.f32 %v2164, 0.0
        %v2254 = vmax.f32 %v2167, 0.0
        %v2255 = vmax.f32 %v2169, 0.0
        %v2256 = vmax.f32 %v2172, 0.0
        %v2257 = vmax.f32 %v2174, 0.0
        %v2258 = vmax.f32 %v2177, 0.0
        %v2259 = vmax.f32 %v2179, 0.0
        %v2260 = vmax.f32 %v2182, 0.0
        %v2261 = vmax.f32 %v2184, 0.0
        %v2262 = vmax.f32 %v2187, 0.0
        %v2263 = vmax.f32 %v2189, 0.0
        %v2264 = vmax.f32 %v2192, 0.0
        %v2265 = vmax.f32 %v2194, 0.0
        %v2266 = vmax.f32 %v2197, 0.0
        %v2267 = vmax.f32 %v2199, 0.0
        %v2268 = vmax.f32 %v2202, 0.0
        %v2269 = vmax.f32 %v2204, 0.0
        %v2270 = vpack.c.bf16 %v2207, %v2206
        %v2271 = vpack.c.bf16 %v2209, %v2208
        %v2272 = vpack.c.bf16 %v2211, %v2210
        %v2273 = vpack.c.bf16 %v2213, %v2212
        %v2274 = vpack.c.bf16 %v2215, %v2214
        %v2275 = vpack.c.bf16 %v2217, %v2216
        %v2276 = vpack.c.bf16 %v2219, %v2218
        %v2277 = vpack.c.bf16 %v2221, %v2220
        %v2278 = vpack.c.bf16 %v2223, %v2222
        %v2279 = vpack.c.bf16 %v2225, %v2224
        %v2280 = vpack.c.bf16 %v2227, %v2226
        %v2281 = vpack.c.bf16 %v2229, %v2228
        %v2282 = vpack.c.bf16 %v2231, %v2230
        %v2283 = vpack.c.bf16 %v2233, %v2232
        %v2284 = vpack.c.bf16 %v2235, %v2234
        %v2285 = vpack.c.bf16 %v2237, %v2236
        %v2286 = vpack.c.bf16 %v2239, %v2238
        %v2287 = vpack.c.bf16 %v2241, %v2240
        %v2288 = vpack.c.bf16 %v2243, %v2242
        %v2289 = vpack.c.bf16 %v2245, %v2244
        %v2290 = vpack.c.bf16 %v2247, %v2246
        %v2291 = vpack.c.bf16 %v2249, %v2248
        %v2292 = vpack.c.bf16 %v2251, %v2250
        %v2293 = vpack.c.bf16 %v2253, %v2252
        %v2294 = vpack.c.bf16 %v2255, %v2254
        %v2295 = vpack.c.bf16 %v2257, %v2256
        %v2296 = vpack.c.bf16 %v2259, %v2258
        %v2297 = vpack.c.bf16 %v2261, %v2260
        %v2298 = vpack.c.bf16 %v2263, %v2262
        %v2299 = vpack.c.bf16 %v2265, %v2264
        %v2300 = vpack.c.bf16 %v2267, %v2266
        %v2301 = vpack.c.bf16 %v2269, %v2268
        %s2302 = scalar_lea.vmem %s2, 128
        %v2303 = vld [vmem:[%s2302] sm:$0xf]
        %v2304 = vld [vmem:[%s2302 + $0x4] sm:$0xf]
        %v2305 = vld [vmem:[%s2302 + $0x8] sm:$0xf]
        %v2306 = vld [vmem:[%s2302 + $0xc] sm:$0xf]
        %v2307 = vld [vmem:[%s2302 + $0x10] sm:$0xf]
        %v2308 = vld [vmem:[%s2302 + $0x14] sm:$0xf]
        %v2309 = vld [vmem:[%s2302 + $0x18] sm:$0xf]
        %v2310 = vld [vmem:[%s2302 + $0x1c] sm:$0xf]
        %v2311 = vld [vmem:[%s2302 + $0x20] sm:$0xf]
        %v2312 = vld [vmem:[%s2302 + $0x24] sm:$0xf]
        %v2313 = vld [vmem:[%s2302 + $0x28] sm:$0xf]
        %v2314 = vld [vmem:[%s2302 + $0x2c] sm:$0xf]
        %v2315 = vld [vmem:[%s2302 + $0x30] sm:$0xf]
        %v2316 = vld [vmem:[%s2302 + $0x34] sm:$0xf]
        %v2317 = vld [vmem:[%s2302 + $0x38] sm:$0xf]
        %v2318 = vld [vmem:[%s2302 + $0x3c] sm:$0xf]
        %v2319 = vld [vmem:[%s3 + $0x3] sm:$0x1]
        %v2320 = vperm.slane %v2319, 0
        %v2337 = vunpack.c.l.b16 %v2303
        %v2338 = vunpack.c.l.b16 %v2304
        %v2339 = vunpack.c.l.b16 %v2305
        %v2340 = vunpack.c.l.b16 %v2306
        %v2341 = vunpack.c.l.b16 %v2307
        %v2342 = vunpack.c.l.b16 %v2308
        %v2343 = vunpack.c.l.b16 %v2309
        %v2344 = vunpack.c.l.b16 %v2310
        %v2345 = vunpack.c.l.b16 %v2311
        %v2346 = vunpack.c.l.b16 %v2312
        %v2347 = vunpack.c.l.b16 %v2313
        %v2348 = vunpack.c.l.b16 %v2314
        %v2349 = vunpack.c.l.b16 %v2315
        %v2350 = vunpack.c.l.b16 %v2316
        %v2351 = vunpack.c.l.b16 %v2317
        %v2352 = vunpack.c.l.b16 %v2318
        %v2353 = vpack.c.b16 %v2338, %v2337
        %v2354 = vpack.c.b16 %v2340, %v2339
        %v2355 = vpack.c.b16 %v2342, %v2341
        %v2356 = vpack.c.b16 %v2344, %v2343
        %v2357 = vpack.c.b16 %v2346, %v2345
        %v2358 = vpack.c.b16 %v2348, %v2347
        %v2359 = vpack.c.b16 %v2350, %v2349
        %v2360 = vpack.c.b16 %v2352, %v2351
        %2369 = vmatpush.bf16.msra.mxu0 %v2360
        %2370 = vmatpush.bf16.msra.mxu0 %v2359
        %2371 = vmatpush.bf16.msra.mxu0 %v2358
        %2372 = vmatpush.bf16.msra.mxu0 %v2357
        %2373 = vmatpush.bf16.msra.mxu0 %v2356
        %2374 = vmatpush.bf16.msra.mxu0 %v2355
        %2375 = vmatpush.bf16.msra.mxu0 %v2354
        %2376 = vmatpush.bf16.msra.mxu0 %v2353
        %2377 = vmatmul.bf16.gmra.mxu0 %v2270
        %v2378 = vpop.f32.mrf.mxu0
        %v2379 = vadd.f32 %v2320, %v2378
        %v2380 = vpop.f32.mrf.mxu0
        %v2381 = vadd.f32 %v2320, %v2380
        %2382 = vmatmul.bf16.gmra.mxu0 %v2271
        %v2383 = vpop.f32.mrf.mxu0
        %v2384 = vadd.f32 %v2320, %v2383
        %v2385 = vpop.f32.mrf.mxu0
        %v2386 = vadd.f32 %v2320, %v2385
        %2387 = vmatmul.bf16.gmra.mxu0 %v2272
        %v2388 = vpop.f32.mrf.mxu0
        %v2389 = vadd.f32 %v2320, %v2388
        %v2390 = vpop.f32.mrf.mxu0
        %v2391 = vadd.f32 %v2320, %v2390
        %2392 = vmatmul.bf16.gmra.mxu0 %v2273
        %v2393 = vpop.f32.mrf.mxu0
        %v2394 = vadd.f32 %v2320, %v2393
        %v2395 = vpop.f32.mrf.mxu0
        %v2396 = vadd.f32 %v2320, %v2395
        %2397 = vmatmul.bf16.gmra.mxu0 %v2274
        %v2398 = vpop.f32.mrf.mxu0
        %v2399 = vadd.f32 %v2320, %v2398
        %v2400 = vpop.f32.mrf.mxu0
        %v2401 = vadd.f32 %v2320, %v2400
        %2402 = vmatmul.bf16.gmra.mxu0 %v2275
        %v2403 = vpop.f32.mrf.mxu0
        %v2404 = vadd.f32 %v2320, %v2403
        %v2405 = vpop.f32.mrf.mxu0
        %v2406 = vadd.f32 %v2320, %v2405
        %2407 = vmatmul.bf16.gmra.mxu0 %v2276
        %v2408 = vpop.f32.mrf.mxu0
        %v2409 = vadd.f32 %v2320, %v2408
        %v2410 = vpop.f32.mrf.mxu0
        %v2411 = vadd.f32 %v2320, %v2410
        %2412 = vmatmul.bf16.gmra.mxu0 %v2277
        %v2413 = vpop.f32.mrf.mxu0
        %v2414 = vadd.f32 %v2320, %v2413
        %v2415 = vpop.f32.mrf.mxu0
        %v2416 = vadd.f32 %v2320, %v2415
        %2417 = vmatmul.bf16.gmra.mxu0 %v2278
        %v2418 = vpop.f32.mrf.mxu0
        %v2419 = vadd.f32 %v2320, %v2418
        %v2420 = vpop.f32.mrf.mxu0
        %v2421 = vadd.f32 %v2320, %v2420
        %2422 = vmatmul.bf16.gmra.mxu0 %v2279
        %v2423 = vpop.f32.mrf.mxu0
        %v2424 = vadd.f32 %v2320, %v2423
        %v2425 = vpop.f32.mrf.mxu0
        %v2426 = vadd.f32 %v2320, %v2425
        %2427 = vmatmul.bf16.gmra.mxu0 %v2280
        %v2428 = vpop.f32.mrf.mxu0
        %v2429 = vadd.f32 %v2320, %v2428
        %v2430 = vpop.f32.mrf.mxu0
        %v2431 = vadd.f32 %v2320, %v2430
        %2432 = vmatmul.bf16.gmra.mxu0 %v2281
        %v2433 = vpop.f32.mrf.mxu0
        %v2434 = vadd.f32 %v2320, %v2433
        %v2435 = vpop.f32.mrf.mxu0
        %v2436 = vadd.f32 %v2320, %v2435
        %2437 = vmatmul.bf16.gmra.mxu0 %v2282
        %v2438 = vpop.f32.mrf.mxu0
        %v2439 = vadd.f32 %v2320, %v2438
        %v2440 = vpop.f32.mrf.mxu0
        %v2441 = vadd.f32 %v2320, %v2440
        %2442 = vmatmul.bf16.gmra.mxu0 %v2283
        %v2443 = vpop.f32.mrf.mxu0
        %v2444 = vadd.f32 %v2320, %v2443
        %v2445 = vpop.f32.mrf.mxu0
        %v2446 = vadd.f32 %v2320, %v2445
        %2447 = vmatmul.bf16.gmra.mxu0 %v2284
        %v2448 = vpop.f32.mrf.mxu0
        %v2449 = vadd.f32 %v2320, %v2448
        %v2450 = vpop.f32.mrf.mxu0
        %v2451 = vadd.f32 %v2320, %v2450
        %2452 = vmatmul.bf16.gmra.mxu0 %v2285
        %v2453 = vpop.f32.mrf.mxu0
        %v2454 = vadd.f32 %v2320, %v2453
        %v2455 = vpop.f32.mrf.mxu0
        %v2456 = vadd.f32 %v2320, %v2455
        %2457 = vmatmul.bf16.gmra.mxu0 %v2286
        %v2458 = vpop.f32.mrf.mxu0
        %v2459 = vadd.f32 %v2320, %v2458
        %v2460 = vpop.f32.mrf.mxu0
        %v2461 = vadd.f32 %v2320, %v2460
        %2462 = vmatmul.bf16.gmra.mxu0 %v2287
        %v2463 = vpop.f32.mrf.mxu0
        %v2464 = vadd.f32 %v2320, %v2463
        %v2465 = vpop.f32.mrf.mxu0
        %v2466 = vadd.f32 %v2320, %v2465
        %2467 = vmatmul.bf16.gmra.mxu0 %v2288
        %v2468 = vpop.f32.mrf.mxu0
        %v2469 = vadd.f32 %v2320, %v2468
        %v2470 = vpop.f32.mrf.mxu0
        %v2471 = vadd.f32 %v2320, %v2470
        %2472 = vmatmul.bf16.gmra.mxu0 %v2289
        %v2473 = vpop.f32.mrf.mxu0
        %v2474 = vadd.f32 %v2320, %v2473
        %v2475 = vpop.f32.mrf.mxu0
        %v2476 = vadd.f32 %v2320, %v2475
        %2477 = vmatmul.bf16.gmra.mxu0 %v2290
        %v2478 = vpop.f32.mrf.mxu0
        %v2479 = vadd.f32 %v2320, %v2478
        %v2480 = vpop.f32.mrf.mxu0
        %v2481 = vadd.f32 %v2320, %v2480
        %2482 = vmatmul.bf16.gmra.mxu0 %v2291
        %v2483 = vpop.f32.mrf.mxu0
        %v2484 = vadd.f32 %v2320, %v2483
        %v2485 = vpop.f32.mrf.mxu0
        %v2486 = vadd.f32 %v2320, %v2485
        %2487 = vmatmul.bf16.gmra.mxu0 %v2292
        %v2488 = vpop.f32.mrf.mxu0
        %v2489 = vadd.f32 %v2320, %v2488
        %v2490 = vpop.f32.mrf.mxu0
        %v2491 = vadd.f32 %v2320, %v2490
        %2492 = vmatmul.bf16.gmra.mxu0 %v2293
        %v2493 = vpop.f32.mrf.mxu0
        %v2494 = vadd.f32 %v2320, %v2493
        %v2495 = vpop.f32.mrf.mxu0
        %v2496 = vadd.f32 %v2320, %v2495
        %2497 = vmatmul.bf16.gmra.mxu0 %v2294
        %v2498 = vpop.f32.mrf.mxu0
        %v2499 = vadd.f32 %v2320, %v2498
        %v2500 = vpop.f32.mrf.mxu0
        %v2501 = vadd.f32 %v2320, %v2500
        %2502 = vmatmul.bf16.gmra.mxu0 %v2295
        %v2503 = vpop.f32.mrf.mxu0
        %v2504 = vadd.f32 %v2320, %v2503
        %v2505 = vpop.f32.mrf.mxu0
        %v2506 = vadd.f32 %v2320, %v2505
        %2507 = vmatmul.bf16.gmra.mxu0 %v2296
        %v2508 = vpop.f32.mrf.mxu0
        %v2509 = vadd.f32 %v2320, %v2508
        %v2510 = vpop.f32.mrf.mxu0
        %v2511 = vadd.f32 %v2320, %v2510
        %2512 = vmatmul.bf16.gmra.mxu0 %v2297
        %v2513 = vpop.f32.mrf.mxu0
        %v2514 = vadd.f32 %v2320, %v2513
        %v2515 = vpop.f32.mrf.mxu0
        %v2516 = vadd.f32 %v2320, %v2515
        %2517 = vmatmul.bf16.gmra.mxu0 %v2298
        %v2518 = vpop.f32.mrf.mxu0
        %v2519 = vadd.f32 %v2320, %v2518
        %v2520 = vpop.f32.mrf.mxu0
        %v2521 = vadd.f32 %v2320, %v2520
        %2522 = vmatmul.bf16.gmra.mxu0 %v2299
        %v2523 = vpop.f32.mrf.mxu0
        %v2524 = vadd.f32 %v2320, %v2523
        %v2525 = vpop.f32.mrf.mxu0
        %v2526 = vadd.f32 %v2320, %v2525
        %2527 = vmatmul.bf16.gmra.mxu0 %v2300
        %v2528 = vpop.f32.mrf.mxu0
        %v2529 = vadd.f32 %v2320, %v2528
        %v2530 = vpop.f32.mrf.mxu0
        %v2531 = vadd.f32 %v2320, %v2530
        %2532 = vmatmul.bf16.gmra.mxu0 %v2301
        %v2533 = vpop.f32.mrf.mxu0
        %v2534 = vadd.f32 %v2320, %v2533
        %v2535 = vpop.f32.mrf.mxu0
        %v2536 = vadd.f32 %v2320, %v2535
        %2537 = vdwg.mxu0
        %v2538 = vmax.f32 %v2379, 0.0
        %v2539 = vmax.f32 %v2381, 0.0
        %v2540 = vmax.f32 %v2384, 0.0
        %v2541 = vmax.f32 %v2386, 0.0
        %v2542 = vmax.f32 %v2389, 0.0
        %v2543 = vmax.f32 %v2391, 0.0
        %v2544 = vmax.f32 %v2394, 0.0
        %v2545 = vmax.f32 %v2396, 0.0
        %v2546 = vmax.f32 %v2399, 0.0
        %v2547 = vmax.f32 %v2401, 0.0
        %v2548 = vmax.f32 %v2404, 0.0
        %v2549 = vmax.f32 %v2406, 0.0
        %v2550 = vmax.f32 %v2409, 0.0
        %v2551 = vmax.f32 %v2411, 0.0
        %v2552 = vmax.f32 %v2414, 0.0
        %v2553 = vmax.f32 %v2416, 0.0
        %v2554 = vmax.f32 %v2419, 0.0
        %v2555 = vmax.f32 %v2421, 0.0
        %v2556 = vmax.f32 %v2424, 0.0
        %v2557 = vmax.f32 %v2426, 0.0
        %v2558 = vmax.f32 %v2429, 0.0
        %v2559 = vmax.f32 %v2431, 0.0
        %v2560 = vmax.f32 %v2434, 0.0
        %v2561 = vmax.f32 %v2436, 0.0
        %v2562 = vmax.f32 %v2439, 0.0
        %v2563 = vmax.f32 %v2441, 0.0
        %v2564 = vmax.f32 %v2444, 0.0
        %v2565 = vmax.f32 %v2446, 0.0
        %v2566 = vmax.f32 %v2449, 0.0
        %v2567 = vmax.f32 %v2451, 0.0
        %v2568 = vmax.f32 %v2454, 0.0
        %v2569 = vmax.f32 %v2456, 0.0
        %v2570 = vmax.f32 %v2459, 0.0
        %v2571 = vmax.f32 %v2461, 0.0
        %v2572 = vmax.f32 %v2464, 0.0
        %v2573 = vmax.f32 %v2466, 0.0
        %v2574 = vmax.f32 %v2469, 0.0
        %v2575 = vmax.f32 %v2471, 0.0
        %v2576 = vmax.f32 %v2474, 0.0
        %v2577 = vmax.f32 %v2476, 0.0
        %v2578 = vmax.f32 %v2479, 0.0
        %v2579 = vmax.f32 %v2481, 0.0
        %v2580 = vmax.f32 %v2484, 0.0
        %v2581 = vmax.f32 %v2486, 0.0
        %v2582 = vmax.f32 %v2489, 0.0
        %v2583 = vmax.f32 %v2491, 0.0
        %v2584 = vmax.f32 %v2494, 0.0
        %v2585 = vmax.f32 %v2496, 0.0
        %v2586 = vmax.f32 %v2499, 0.0
        %v2587 = vmax.f32 %v2501, 0.0
        %v2588 = vmax.f32 %v2504, 0.0
        %v2589 = vmax.f32 %v2506, 0.0
        %v2590 = vmax.f32 %v2509, 0.0
        %v2591 = vmax.f32 %v2511, 0.0
        %v2592 = vmax.f32 %v2514, 0.0
        %v2593 = vmax.f32 %v2516, 0.0
        %v2594 = vmax.f32 %v2519, 0.0
        %v2595 = vmax.f32 %v2521, 0.0
        %v2596 = vmax.f32 %v2524, 0.0
        %v2597 = vmax.f32 %v2526, 0.0
        %v2598 = vmax.f32 %v2529, 0.0
        %v2599 = vmax.f32 %v2531, 0.0
        %v2600 = vmax.f32 %v2534, 0.0
        %v2601 = vmax.f32 %v2536, 0.0
        %v2602 = vpack.c.bf16 %v2539, %v2538
        %v2603 = vpack.c.bf16 %v2541, %v2540
        %v2604 = vpack.c.bf16 %v2543, %v2542
        %v2605 = vpack.c.bf16 %v2545, %v2544
        %v2606 = vpack.c.bf16 %v2547, %v2546
        %v2607 = vpack.c.bf16 %v2549, %v2548
        %v2608 = vpack.c.bf16 %v2551, %v2550
        %v2609 = vpack.c.bf16 %v2553, %v2552
        %v2610 = vpack.c.bf16 %v2555, %v2554
        %v2611 = vpack.c.bf16 %v2557, %v2556
        %v2612 = vpack.c.bf16 %v2559, %v2558
        %v2613 = vpack.c.bf16 %v2561, %v2560
        %v2614 = vpack.c.bf16 %v2563, %v2562
        %v2615 = vpack.c.bf16 %v2565, %v2564
        %v2616 = vpack.c.bf16 %v2567, %v2566
        %v2617 = vpack.c.bf16 %v2569, %v2568
        %v2618 = vpack.c.bf16 %v2571, %v2570
        %v2619 = vpack.c.bf16 %v2573, %v2572
        %v2620 = vpack.c.bf16 %v2575, %v2574
        %v2621 = vpack.c.bf16 %v2577, %v2576
        %v2622 = vpack.c.bf16 %v2579, %v2578
        %v2623 = vpack.c.bf16 %v2581, %v2580
        %v2624 = vpack.c.bf16 %v2583, %v2582
        %v2625 = vpack.c.bf16 %v2585, %v2584
        %v2626 = vpack.c.bf16 %v2587, %v2586
        %v2627 = vpack.c.bf16 %v2589, %v2588
        %v2628 = vpack.c.bf16 %v2591, %v2590
        %v2629 = vpack.c.bf16 %v2593, %v2592
        %v2630 = vpack.c.bf16 %v2595, %v2594
        %v2631 = vpack.c.bf16 %v2597, %v2596
        %v2632 = vpack.c.bf16 %v2599, %v2598
        %v2633 = vpack.c.bf16 %v2601, %v2600
        %s2634 = scalar_lea.vmem %s2, 192
        %v2635 = vld [vmem:[%s2634] sm:$0xf]
        %v2636 = vld [vmem:[%s2634 + $0x4] sm:$0xf]
        %v2637 = vld [vmem:[%s2634 + $0x8] sm:$0xf]
        %v2638 = vld [vmem:[%s2634 + $0xc] sm:$0xf]
        %v2639 = vld [vmem:[%s2634 + $0x10] sm:$0xf]
        %v2640 = vld [vmem:[%s2634 + $0x14] sm:$0xf]
        %v2641 = vld [vmem:[%s2634 + $0x18] sm:$0xf]
        %v2642 = vld [vmem:[%s2634 + $0x1c] sm:$0xf]
        %v2643 = vld [vmem:[%s2634 + $0x20] sm:$0xf]
        %v2644 = vld [vmem:[%s2634 + $0x24] sm:$0xf]
        %v2645 = vld [vmem:[%s2634 + $0x28] sm:$0xf]
        %v2646 = vld [vmem:[%s2634 + $0x2c] sm:$0xf]
        %v2647 = vld [vmem:[%s2634 + $0x30] sm:$0xf]
        %v2648 = vld [vmem:[%s2634 + $0x34] sm:$0xf]
        %v2649 = vld [vmem:[%s2634 + $0x38] sm:$0xf]
        %v2650 = vld [vmem:[%s2634 + $0x3c] sm:$0xf]
        %v2651 = vld [vmem:[%s3 + $0x4] sm:$0x1]
        %v2652 = vperm.slane %v2651, 0
        %v2669 = vunpack.c.l.b16 %v2635
        %v2670 = vunpack.c.l.b16 %v2636
        %v2671 = vunpack.c.l.b16 %v2637
        %v2672 = vunpack.c.l.b16 %v2638
        %v2673 = vunpack.c.l.b16 %v2639
        %v2674 = vunpack.c.l.b16 %v2640
        %v2675 = vunpack.c.l.b16 %v2641
        %v2676 = vunpack.c.l.b16 %v2642
        %v2677 = vunpack.c.l.b16 %v2643
        %v2678 = vunpack.c.l.b16 %v2644
        %v2679 = vunpack.c.l.b16 %v2645
        %v2680 = vunpack.c.l.b16 %v2646
        %v2681 = vunpack.c.l.b16 %v2647
        %v2682 = vunpack.c.l.b16 %v2648
        %v2683 = vunpack.c.l.b16 %v2649
        %v2684 = vunpack.c.l.b16 %v2650
        %v2685 = vpack.c.b16 %v2670, %v2669
        %v2686 = vpack.c.b16 %v2672, %v2671
        %v2687 = vpack.c.b16 %v2674, %v2673
        %v2688 = vpack.c.b16 %v2676, %v2675
        %v2689 = vpack.c.b16 %v2678, %v2677
        %v2690 = vpack.c.b16 %v2680, %v2679
        %v2691 = vpack.c.b16 %v2682, %v2681
        %v2692 = vpack.c.b16 %v2684, %v2683
        %2701 = vmatpush.bf16.msra.mxu0 %v2692
        %2702 = vmatpush.bf16.msra.mxu0 %v2691
        %2703 = vmatpush.bf16.msra.mxu0 %v2690
        %2704 = vmatpush.bf16.msra.mxu0 %v2689
        %2705 = vmatpush.bf16.msra.mxu0 %v2688
        %2706 = vmatpush.bf16.msra.mxu0 %v2687
        %2707 = vmatpush.bf16.msra.mxu0 %v2686
        %2708 = vmatpush.bf16.msra.mxu0 %v2685
        %2709 = vmatmul.bf16.gmra.mxu0 %v2602
        %v2710 = vpop.f32.mrf.mxu0
        %v2711 = vadd.f32 %v2652, %v2710
        %v2712 = vpop.f32.mrf.mxu0
        %v2713 = vadd.f32 %v2652, %v2712
        %2714 = vmatmul.bf16.gmra.mxu0 %v2603
        %v2715 = vpop.f32.mrf.mxu0
        %v2716 = vadd.f32 %v2652, %v2715
        %v2717 = vpop.f32.mrf.mxu0
        %v2718 = vadd.f32 %v2652, %v2717
        %2719 = vmatmul.bf16.gmra.mxu0 %v2604
        %v2720 = vpop.f32.mrf.mxu0
        %v2721 = vadd.f32 %v2652, %v2720
        %v2722 = vpop.f32.mrf.mxu0
        %v2723 = vadd.f32 %v2652, %v2722
        %2724 = vmatmul.bf16.gmra.mxu0 %v2605
        %v2725 = vpop.f32.mrf.mxu0
        %v2726 = vadd.f32 %v2652, %v2725
        %v2727 = vpop.f32.mrf.mxu0
        %v2728 = vadd.f32 %v2652, %v2727
        %2729 = vmatmul.bf16.gmra.mxu0 %v2606
        %v2730 = vpop.f32.mrf.mxu0
        %v2731 = vadd.f32 %v2652, %v2730
        %v2732 = vpop.f32.mrf.mxu0
        %v2733 = vadd.f32 %v2652, %v2732
        %2734 = vmatmul.bf16.gmra.mxu0 %v2607
        %v2735 = vpop.f32.mrf.mxu0
        %v2736 = vadd.f32 %v2652, %v2735
        %v2737 = vpop.f32.mrf.mxu0
        %v2738 = vadd.f32 %v2652, %v2737
        %2739 = vmatmul.bf16.gmra.mxu0 %v2608
        %v2740 = vpop.f32.mrf.mxu0
        %v2741 = vadd.f32 %v2652, %v2740
        %v2742 = vpop.f32.mrf.mxu0
        %v2743 = vadd.f32 %v2652, %v2742
        %2744 = vmatmul.bf16.gmra.mxu0 %v2609
        %v2745 = vpop.f32.mrf.mxu0
        %v2746 = vadd.f32 %v2652, %v2745
        %v2747 = vpop.f32.mrf.mxu0
        %v2748 = vadd.f32 %v2652, %v2747
        %2749 = vmatmul.bf16.gmra.mxu0 %v2610
        %v2750 = vpop.f32.mrf.mxu0
        %v2751 = vadd.f32 %v2652, %v2750
        %v2752 = vpop.f32.mrf.mxu0
        %v2753 = vadd.f32 %v2652, %v2752
        %2754 = vmatmul.bf16.gmra.mxu0 %v2611
        %v2755 = vpop.f32.mrf.mxu0
        %v2756 = vadd.f32 %v2652, %v2755
        %v2757 = vpop.f32.mrf.mxu0
        %v2758 = vadd.f32 %v2652, %v2757
        %2759 = vmatmul.bf16.gmra.mxu0 %v2612
        %v2760 = vpop.f32.mrf.mxu0
        %v2761 = vadd.f32 %v2652, %v2760
        %v2762 = vpop.f32.mrf.mxu0
        %v2763 = vadd.f32 %v2652, %v2762
        %2764 = vmatmul.bf16.gmra.mxu0 %v2613
        %v2765 = vpop.f32.mrf.mxu0
        %v2766 = vadd.f32 %v2652, %v2765
        %v2767 = vpop.f32.mrf.mxu0
        %v2768 = vadd.f32 %v2652, %v2767
        %2769 = vmatmul.bf16.gmra.mxu0 %v2614
        %v2770 = vpop.f32.mrf.mxu0
        %v2771 = vadd.f32 %v2652, %v2770
        %v2772 = vpop.f32.mrf.mxu0
        %v2773 = vadd.f32 %v2652, %v2772
        %2774 = vmatmul.bf16.gmra.mxu0 %v2615
        %v2775 = vpop.f32.mrf.mxu0
        %v2776 = vadd.f32 %v2652, %v2775
        %v2777 = vpop.f32.mrf.mxu0
        %v2778 = vadd.f32 %v2652, %v2777
        %2779 = vmatmul.bf16.gmra.mxu0 %v2616
        %v2780 = vpop.f32.mrf.mxu0
        %v2781 = vadd.f32 %v2652, %v2780
        %v2782 = vpop.f32.mrf.mxu0
        %v2783 = vadd.f32 %v2652, %v2782
        %2784 = vmatmul.bf16.gmra.mxu0 %v2617
        %v2785 = vpop.f32.mrf.mxu0
        %v2786 = vadd.f32 %v2652, %v2785
        %v2787 = vpop.f32.mrf.mxu0
        %v2788 = vadd.f32 %v2652, %v2787
        %2789 = vmatmul.bf16.gmra.mxu0 %v2618
        %v2790 = vpop.f32.mrf.mxu0
        %v2791 = vadd.f32 %v2652, %v2790
        %v2792 = vpop.f32.mrf.mxu0
        %v2793 = vadd.f32 %v2652, %v2792
        %2794 = vmatmul.bf16.gmra.mxu0 %v2619
        %v2795 = vpop.f32.mrf.mxu0
        %v2796 = vadd.f32 %v2652, %v2795
        %v2797 = vpop.f32.mrf.mxu0
        %v2798 = vadd.f32 %v2652, %v2797
        %2799 = vmatmul.bf16.gmra.mxu0 %v2620
        %v2800 = vpop.f32.mrf.mxu0
        %v2801 = vadd.f32 %v2652, %v2800
        %v2802 = vpop.f32.mrf.mxu0
        %v2803 = vadd.f32 %v2652, %v2802
        %2804 = vmatmul.bf16.gmra.mxu0 %v2621
        %v2805 = vpop.f32.mrf.mxu0
        %v2806 = vadd.f32 %v2652, %v2805
        %v2807 = vpop.f32.mrf.mxu0
        %v2808 = vadd.f32 %v2652, %v2807
        %2809 = vmatmul.bf16.gmra.mxu0 %v2622
        %v2810 = vpop.f32.mrf.mxu0
        %v2811 = vadd.f32 %v2652, %v2810
        %v2812 = vpop.f32.mrf.mxu0
        %v2813 = vadd.f32 %v2652, %v2812
        %2814 = vmatmul.bf16.gmra.mxu0 %v2623
        %v2815 = vpop.f32.mrf.mxu0
        %v2816 = vadd.f32 %v2652, %v2815
        %v2817 = vpop.f32.mrf.mxu0
        %v2818 = vadd.f32 %v2652, %v2817
        %2819 = vmatmul.bf16.gmra.mxu0 %v2624
        %v2820 = vpop.f32.mrf.mxu0
        %v2821 = vadd.f32 %v2652, %v2820
        %v2822 = vpop.f32.mrf.mxu0
        %v2823 = vadd.f32 %v2652, %v2822
        %2824 = vmatmul.bf16.gmra.mxu0 %v2625
        %v2825 = vpop.f32.mrf.mxu0
        %v2826 = vadd.f32 %v2652, %v2825
        %v2827 = vpop.f32.mrf.mxu0
        %v2828 = vadd.f32 %v2652, %v2827
        %2829 = vmatmul.bf16.gmra.mxu0 %v2626
        %v2830 = vpop.f32.mrf.mxu0
        %v2831 = vadd.f32 %v2652, %v2830
        %v2832 = vpop.f32.mrf.mxu0
        %v2833 = vadd.f32 %v2652, %v2832
        %2834 = vmatmul.bf16.gmra.mxu0 %v2627
        %v2835 = vpop.f32.mrf.mxu0
        %v2836 = vadd.f32 %v2652, %v2835
        %v2837 = vpop.f32.mrf.mxu0
        %v2838 = vadd.f32 %v2652, %v2837
        %2839 = vmatmul.bf16.gmra.mxu0 %v2628
        %v2840 = vpop.f32.mrf.mxu0
        %v2841 = vadd.f32 %v2652, %v2840
        %v2842 = vpop.f32.mrf.mxu0
        %v2843 = vadd.f32 %v2652, %v2842
        %2844 = vmatmul.bf16.gmra.mxu0 %v2629
        %v2845 = vpop.f32.mrf.mxu0
        %v2846 = vadd.f32 %v2652, %v2845
        %v2847 = vpop.f32.mrf.mxu0
        %v2848 = vadd.f32 %v2652, %v2847
        %2849 = vmatmul.bf16.gmra.mxu0 %v2630
        %v2850 = vpop.f32.mrf.mxu0
        %v2851 = vadd.f32 %v2652, %v2850
        %v2852 = vpop.f32.mrf.mxu0
        %v2853 = vadd.f32 %v2652, %v2852
        %2854 = vmatmul.bf16.gmra.mxu0 %v2631
        %v2855 = vpop.f32.mrf.mxu0
        %v2856 = vadd.f32 %v2652, %v2855
        %v2857 = vpop.f32.mrf.mxu0
        %v2858 = vadd.f32 %v2652, %v2857
        %2859 = vmatmul.bf16.gmra.mxu0 %v2632
        %v2860 = vpop.f32.mrf.mxu0
        %v2861 = vadd.f32 %v2652, %v2860
        %v2862 = vpop.f32.mrf.mxu0
        %v2863 = vadd.f32 %v2652, %v2862
        %2864 = vmatmul.bf16.gmra.mxu0 %v2633
        %v2865 = vpop.f32.mrf.mxu0
        %v2866 = vadd.f32 %v2652, %v2865
        %v2867 = vpop.f32.mrf.mxu0
        %v2868 = vadd.f32 %v2652, %v2867
        %2869 = vdwg.mxu0
        %v2870 = vmax.f32 %v2711, 0.0
        %v2871 = vmax.f32 %v2713, 0.0
        %v2872 = vmax.f32 %v2716, 0.0
        %v2873 = vmax.f32 %v2718, 0.0
        %v2874 = vmax.f32 %v2721, 0.0
        %v2875 = vmax.f32 %v2723, 0.0
        %v2876 = vmax.f32 %v2726, 0.0
        %v2877 = vmax.f32 %v2728, 0.0
        %v2878 = vmax.f32 %v2731, 0.0
        %v2879 = vmax.f32 %v2733, 0.0
        %v2880 = vmax.f32 %v2736, 0.0
        %v2881 = vmax.f32 %v2738, 0.0
        %v2882 = vmax.f32 %v2741, 0.0
        %v2883 = vmax.f32 %v2743, 0.0
        %v2884 = vmax.f32 %v2746, 0.0
        %v2885 = vmax.f32 %v2748, 0.0
        %v2886 = vmax.f32 %v2751, 0.0
        %v2887 = vmax.f32 %v2753, 0.0
        %v2888 = vmax.f32 %v2756, 0.0
        %v2889 = vmax.f32 %v2758, 0.0
        %v2890 = vmax.f32 %v2761, 0.0
        %v2891 = vmax.f32 %v2763, 0.0
        %v2892 = vmax.f32 %v2766, 0.0
        %v2893 = vmax.f32 %v2768, 0.0
        %v2894 = vmax.f32 %v2771, 0.0
        %v2895 = vmax.f32 %v2773, 0.0
        %v2896 = vmax.f32 %v2776, 0.0
        %v2897 = vmax.f32 %v2778, 0.0
        %v2898 = vmax.f32 %v2781, 0.0
        %v2899 = vmax.f32 %v2783, 0.0
        %v2900 = vmax.f32 %v2786, 0.0
        %v2901 = vmax.f32 %v2788, 0.0
        %v2902 = vmax.f32 %v2791, 0.0
        %v2903 = vmax.f32 %v2793, 0.0
        %v2904 = vmax.f32 %v2796, 0.0
        %v2905 = vmax.f32 %v2798, 0.0
        %v2906 = vmax.f32 %v2801, 0.0
        %v2907 = vmax.f32 %v2803, 0.0
        %v2908 = vmax.f32 %v2806, 0.0
        %v2909 = vmax.f32 %v2808, 0.0
        %v2910 = vmax.f32 %v2811, 0.0
        %v2911 = vmax.f32 %v2813, 0.0
        %v2912 = vmax.f32 %v2816, 0.0
        %v2913 = vmax.f32 %v2818, 0.0
        %v2914 = vmax.f32 %v2821, 0.0
        %v2915 = vmax.f32 %v2823, 0.0
        %v2916 = vmax.f32 %v2826, 0.0
        %v2917 = vmax.f32 %v2828, 0.0
        %v2918 = vmax.f32 %v2831, 0.0
        %v2919 = vmax.f32 %v2833, 0.0
        %v2920 = vmax.f32 %v2836, 0.0
        %v2921 = vmax.f32 %v2838, 0.0
        %v2922 = vmax.f32 %v2841, 0.0
        %v2923 = vmax.f32 %v2843, 0.0
        %v2924 = vmax.f32 %v2846, 0.0
        %v2925 = vmax.f32 %v2848, 0.0
        %v2926 = vmax.f32 %v2851, 0.0
        %v2927 = vmax.f32 %v2853, 0.0
        %v2928 = vmax.f32 %v2856, 0.0
        %v2929 = vmax.f32 %v2858, 0.0
        %v2930 = vmax.f32 %v2861, 0.0
        %v2931 = vmax.f32 %v2863, 0.0
        %v2932 = vmax.f32 %v2866, 0.0
        %v2933 = vmax.f32 %v2868, 0.0
        %v2934 = vpack.c.bf16 %v2871, %v2870
        %v2935 = vpack.c.bf16 %v2873, %v2872
        %v2936 = vpack.c.bf16 %v2875, %v2874
        %v2937 = vpack.c.bf16 %v2877, %v2876
        %v2938 = vpack.c.bf16 %v2879, %v2878
        %v2939 = vpack.c.bf16 %v2881, %v2880
        %v2940 = vpack.c.bf16 %v2883, %v2882
        %v2941 = vpack.c.bf16 %v2885, %v2884
        %v2942 = vpack.c.bf16 %v2887, %v2886
        %v2943 = vpack.c.bf16 %v2889, %v2888
        %v2944 = vpack.c.bf16 %v2891, %v2890
        %v2945 = vpack.c.bf16 %v2893, %v2892
        %v2946 = vpack.c.bf16 %v2895, %v2894
        %v2947 = vpack.c.bf16 %v2897, %v2896
        %v2948 = vpack.c.bf16 %v2899, %v2898
        %v2949 = vpack.c.bf16 %v2901, %v2900
        %v2950 = vpack.c.bf16 %v2903, %v2902
        %v2951 = vpack.c.bf16 %v2905, %v2904
        %v2952 = vpack.c.bf16 %v2907, %v2906
        %v2953 = vpack.c.bf16 %v2909, %v2908
        %v2954 = vpack.c.bf16 %v2911, %v2910
        %v2955 = vpack.c.bf16 %v2913, %v2912
        %v2956 = vpack.c.bf16 %v2915, %v2914
        %v2957 = vpack.c.bf16 %v2917, %v2916
        %v2958 = vpack.c.bf16 %v2919, %v2918
        %v2959 = vpack.c.bf16 %v2921, %v2920
        %v2960 = vpack.c.bf16 %v2923, %v2922
        %v2961 = vpack.c.bf16 %v2925, %v2924
        %v2962 = vpack.c.bf16 %v2927, %v2926
        %v2963 = vpack.c.bf16 %v2929, %v2928
        %v2964 = vpack.c.bf16 %v2931, %v2930
        %v2965 = vpack.c.bf16 %v2933, %v2932
        %s2966 = scalar_lea.vmem %s2, 256
        %v2967 = vld [vmem:[%s2966] sm:$0xf]
        %v2968 = vld [vmem:[%s2966 + $0x4] sm:$0xf]
        %v2969 = vld [vmem:[%s2966 + $0x8] sm:$0xf]
        %v2970 = vld [vmem:[%s2966 + $0xc] sm:$0xf]
        %v2971 = vld [vmem:[%s2966 + $0x10] sm:$0xf]
        %v2972 = vld [vmem:[%s2966 + $0x14] sm:$0xf]
        %v2973 = vld [vmem:[%s2966 + $0x18] sm:$0xf]
        %v2974 = vld [vmem:[%s2966 + $0x1c] sm:$0xf]
        %v2975 = vld [vmem:[%s2966 + $0x20] sm:$0xf]
        %v2976 = vld [vmem:[%s2966 + $0x24] sm:$0xf]
        %v2977 = vld [vmem:[%s2966 + $0x28] sm:$0xf]
        %v2978 = vld [vmem:[%s2966 + $0x2c] sm:$0xf]
        %v2979 = vld [vmem:[%s2966 + $0x30] sm:$0xf]
        %v2980 = vld [vmem:[%s2966 + $0x34] sm:$0xf]
        %v2981 = vld [vmem:[%s2966 + $0x38] sm:$0xf]
        %v2982 = vld [vmem:[%s2966 + $0x3c] sm:$0xf]
        %v2983 = vld [vmem:[%s3 + $0x5] sm:$0x1]
        %v2984 = vperm.slane %v2983, 0
        %v3001 = vunpack.c.l.b16 %v2967
        %v3002 = vunpack.c.l.b16 %v2968
        %v3003 = vunpack.c.l.b16 %v2969
        %v3004 = vunpack.c.l.b16 %v2970
        %v3005 = vunpack.c.l.b16 %v2971
        %v3006 = vunpack.c.l.b16 %v2972
        %v3007 = vunpack.c.l.b16 %v2973
        %v3008 = vunpack.c.l.b16 %v2974
        %v3009 = vunpack.c.l.b16 %v2975
        %v3010 = vunpack.c.l.b16 %v2976
        %v3011 = vunpack.c.l.b16 %v2977
        %v3012 = vunpack.c.l.b16 %v2978
        %v3013 = vunpack.c.l.b16 %v2979
        %v3014 = vunpack.c.l.b16 %v2980
        %v3015 = vunpack.c.l.b16 %v2981
        %v3016 = vunpack.c.l.b16 %v2982
        %v3017 = vpack.c.b16 %v3002, %v3001
        %v3018 = vpack.c.b16 %v3004, %v3003
        %v3019 = vpack.c.b16 %v3006, %v3005
        %v3020 = vpack.c.b16 %v3008, %v3007
        %v3021 = vpack.c.b16 %v3010, %v3009
        %v3022 = vpack.c.b16 %v3012, %v3011
        %v3023 = vpack.c.b16 %v3014, %v3013
        %v3024 = vpack.c.b16 %v3016, %v3015
        %3033 = vmatpush.bf16.msra.mxu0 %v3024
        %3034 = vmatpush.bf16.msra.mxu0 %v3023
        %3035 = vmatpush.bf16.msra.mxu0 %v3022
        %3036 = vmatpush.bf16.msra.mxu0 %v3021
        %3037 = vmatpush.bf16.msra.mxu0 %v3020
        %3038 = vmatpush.bf16.msra.mxu0 %v3019
        %3039 = vmatpush.bf16.msra.mxu0 %v3018
        %3040 = vmatpush.bf16.msra.mxu0 %v3017
        %3041 = vmatmul.bf16.gmra.mxu0 %v2934
        %v3042 = vpop.f32.mrf.mxu0
        %v3043 = vadd.f32 %v2984, %v3042
        %v3044 = vpop.f32.mrf.mxu0
        %v3045 = vadd.f32 %v2984, %v3044
        %3046 = vmatmul.bf16.gmra.mxu0 %v2935
        %v3047 = vpop.f32.mrf.mxu0
        %v3048 = vadd.f32 %v2984, %v3047
        %v3049 = vpop.f32.mrf.mxu0
        %v3050 = vadd.f32 %v2984, %v3049
        %3051 = vmatmul.bf16.gmra.mxu0 %v2936
        %v3052 = vpop.f32.mrf.mxu0
        %v3053 = vadd.f32 %v2984, %v3052
        %v3054 = vpop.f32.mrf.mxu0
        %v3055 = vadd.f32 %v2984, %v3054
        %3056 = vmatmul.bf16.gmra.mxu0 %v2937
        %v3057 = vpop.f32.mrf.mxu0
        %v3058 = vadd.f32 %v2984, %v3057
        %v3059 = vpop.f32.mrf.mxu0
        %v3060 = vadd.f32 %v2984, %v3059
        %3061 = vmatmul.bf16.gmra.mxu0 %v2938
        %v3062 = vpop.f32.mrf.mxu0
        %v3063 = vadd.f32 %v2984, %v3062
        %v3064 = vpop.f32.mrf.mxu0
        %v3065 = vadd.f32 %v2984, %v3064
        %3066 = vmatmul.bf16.gmra.mxu0 %v2939
        %v3067 = vpop.f32.mrf.mxu0
        %v3068 = vadd.f32 %v2984, %v3067
        %v3069 = vpop.f32.mrf.mxu0
        %v3070 = vadd.f32 %v2984, %v3069
        %3071 = vmatmul.bf16.gmra.mxu0 %v2940
        %v3072 = vpop.f32.mrf.mxu0
        %v3073 = vadd.f32 %v2984, %v3072
        %v3074 = vpop.f32.mrf.mxu0
        %v3075 = vadd.f32 %v2984, %v3074
        %3076 = vmatmul.bf16.gmra.mxu0 %v2941
        %v3077 = vpop.f32.mrf.mxu0
        %v3078 = vadd.f32 %v2984, %v3077
        %v3079 = vpop.f32.mrf.mxu0
        %v3080 = vadd.f32 %v2984, %v3079
        %3081 = vmatmul.bf16.gmra.mxu0 %v2942
        %v3082 = vpop.f32.mrf.mxu0
        %v3083 = vadd.f32 %v2984, %v3082
        %v3084 = vpop.f32.mrf.mxu0
        %v3085 = vadd.f32 %v2984, %v3084
        %3086 = vmatmul.bf16.gmra.mxu0 %v2943
        %v3087 = vpop.f32.mrf.mxu0
        %v3088 = vadd.f32 %v2984, %v3087
        %v3089 = vpop.f32.mrf.mxu0
        %v3090 = vadd.f32 %v2984, %v3089
        %3091 = vmatmul.bf16.gmra.mxu0 %v2944
        %v3092 = vpop.f32.mrf.mxu0
        %v3093 = vadd.f32 %v2984, %v3092
        %v3094 = vpop.f32.mrf.mxu0
        %v3095 = vadd.f32 %v2984, %v3094
        %3096 = vmatmul.bf16.gmra.mxu0 %v2945
        %v3097 = vpop.f32.mrf.mxu0
        %v3098 = vadd.f32 %v2984, %v3097
        %v3099 = vpop.f32.mrf.mxu0
        %v3100 = vadd.f32 %v2984, %v3099
        %3101 = vmatmul.bf16.gmra.mxu0 %v2946
        %v3102 = vpop.f32.mrf.mxu0
        %v3103 = vadd.f32 %v2984, %v3102
        %v3104 = vpop.f32.mrf.mxu0
        %v3105 = vadd.f32 %v2984, %v3104
        %3106 = vmatmul.bf16.gmra.mxu0 %v2947
        %v3107 = vpop.f32.mrf.mxu0
        %v3108 = vadd.f32 %v2984, %v3107
        %v3109 = vpop.f32.mrf.mxu0
        %v3110 = vadd.f32 %v2984, %v3109
        %3111 = vmatmul.bf16.gmra.mxu0 %v2948
        %v3112 = vpop.f32.mrf.mxu0
        %v3113 = vadd.f32 %v2984, %v3112
        %v3114 = vpop.f32.mrf.mxu0
        %v3115 = vadd.f32 %v2984, %v3114
        %3116 = vmatmul.bf16.gmra.mxu0 %v2949
        %v3117 = vpop.f32.mrf.mxu0
        %v3118 = vadd.f32 %v2984, %v3117
        %v3119 = vpop.f32.mrf.mxu0
        %v3120 = vadd.f32 %v2984, %v3119
        %3121 = vmatmul.bf16.gmra.mxu0 %v2950
        %v3122 = vpop.f32.mrf.mxu0
        %v3123 = vadd.f32 %v2984, %v3122
        %v3124 = vpop.f32.mrf.mxu0
        %v3125 = vadd.f32 %v2984, %v3124
        %3126 = vmatmul.bf16.gmra.mxu0 %v2951
        %v3127 = vpop.f32.mrf.mxu0
        %v3128 = vadd.f32 %v2984, %v3127
        %v3129 = vpop.f32.mrf.mxu0
        %v3130 = vadd.f32 %v2984, %v3129
        %3131 = vmatmul.bf16.gmra.mxu0 %v2952
        %v3132 = vpop.f32.mrf.mxu0
        %v3133 = vadd.f32 %v2984, %v3132
        %v3134 = vpop.f32.mrf.mxu0
        %v3135 = vadd.f32 %v2984, %v3134
        %3136 = vmatmul.bf16.gmra.mxu0 %v2953
        %v3137 = vpop.f32.mrf.mxu0
        %v3138 = vadd.f32 %v2984, %v3137
        %v3139 = vpop.f32.mrf.mxu0
        %v3140 = vadd.f32 %v2984, %v3139
        %3141 = vmatmul.bf16.gmra.mxu0 %v2954
        %v3142 = vpop.f32.mrf.mxu0
        %v3143 = vadd.f32 %v2984, %v3142
        %v3144 = vpop.f32.mrf.mxu0
        %v3145 = vadd.f32 %v2984, %v3144
        %3146 = vmatmul.bf16.gmra.mxu0 %v2955
        %v3147 = vpop.f32.mrf.mxu0
        %v3148 = vadd.f32 %v2984, %v3147
        %v3149 = vpop.f32.mrf.mxu0
        %v3150 = vadd.f32 %v2984, %v3149
        %3151 = vmatmul.bf16.gmra.mxu0 %v2956
        %v3152 = vpop.f32.mrf.mxu0
        %v3153 = vadd.f32 %v2984, %v3152
        %v3154 = vpop.f32.mrf.mxu0
        %v3155 = vadd.f32 %v2984, %v3154
        %3156 = vmatmul.bf16.gmra.mxu0 %v2957
        %v3157 = vpop.f32.mrf.mxu0
        %v3158 = vadd.f32 %v2984, %v3157
        %v3159 = vpop.f32.mrf.mxu0
        %v3160 = vadd.f32 %v2984, %v3159
        %3161 = vmatmul.bf16.gmra.mxu0 %v2958
        %v3162 = vpop.f32.mrf.mxu0
        %v3163 = vadd.f32 %v2984, %v3162
        %v3164 = vpop.f32.mrf.mxu0
        %v3165 = vadd.f32 %v2984, %v3164
        %3166 = vmatmul.bf16.gmra.mxu0 %v2959
        %v3167 = vpop.f32.mrf.mxu0
        %v3168 = vadd.f32 %v2984, %v3167
        %v3169 = vpop.f32.mrf.mxu0
        %v3170 = vadd.f32 %v2984, %v3169
        %3171 = vmatmul.bf16.gmra.mxu0 %v2960
        %v3172 = vpop.f32.mrf.mxu0
        %v3173 = vadd.f32 %v2984, %v3172
        %v3174 = vpop.f32.mrf.mxu0
        %v3175 = vadd.f32 %v2984, %v3174
        %3176 = vmatmul.bf16.gmra.mxu0 %v2961
        %v3177 = vpop.f32.mrf.mxu0
        %v3178 = vadd.f32 %v2984, %v3177
        %v3179 = vpop.f32.mrf.mxu0
        %v3180 = vadd.f32 %v2984, %v3179
        %3181 = vmatmul.bf16.gmra.mxu0 %v2962
        %v3182 = vpop.f32.mrf.mxu0
        %v3183 = vadd.f32 %v2984, %v3182
        %v3184 = vpop.f32.mrf.mxu0
        %v3185 = vadd.f32 %v2984, %v3184
        %3186 = vmatmul.bf16.gmra.mxu0 %v2963
        %v3187 = vpop.f32.mrf.mxu0
        %v3188 = vadd.f32 %v2984, %v3187
        %v3189 = vpop.f32.mrf.mxu0
        %v3190 = vadd.f32 %v2984, %v3189
        %3191 = vmatmul.bf16.gmra.mxu0 %v2964
        %v3192 = vpop.f32.mrf.mxu0
        %v3193 = vadd.f32 %v2984, %v3192
        %v3194 = vpop.f32.mrf.mxu0
        %v3195 = vadd.f32 %v2984, %v3194
        %3196 = vmatmul.bf16.gmra.mxu0 %v2965
        %v3197 = vpop.f32.mrf.mxu0
        %v3198 = vadd.f32 %v2984, %v3197
        %v3199 = vpop.f32.mrf.mxu0
        %v3200 = vadd.f32 %v2984, %v3199
        %3201 = vdwg.mxu0
        %v3202 = vmax.f32 %v3043, 0.0
        %v3203 = vmax.f32 %v3045, 0.0
        %v3204 = vmax.f32 %v3048, 0.0
        %v3205 = vmax.f32 %v3050, 0.0
        %v3206 = vmax.f32 %v3053, 0.0
        %v3207 = vmax.f32 %v3055, 0.0
        %v3208 = vmax.f32 %v3058, 0.0
        %v3209 = vmax.f32 %v3060, 0.0
        %v3210 = vmax.f32 %v3063, 0.0
        %v3211 = vmax.f32 %v3065, 0.0
        %v3212 = vmax.f32 %v3068, 0.0
        %v3213 = vmax.f32 %v3070, 0.0
        %v3214 = vmax.f32 %v3073, 0.0
        %v3215 = vmax.f32 %v3075, 0.0
        %v3216 = vmax.f32 %v3078, 0.0
        %v3217 = vmax.f32 %v3080, 0.0
        %v3218 = vmax.f32 %v3083, 0.0
        %v3219 = vmax.f32 %v3085, 0.0
        %v3220 = vmax.f32 %v3088, 0.0
        %v3221 = vmax.f32 %v3090, 0.0
        %v3222 = vmax.f32 %v3093, 0.0
        %v3223 = vmax.f32 %v3095, 0.0
        %v3224 = vmax.f32 %v3098, 0.0
        %v3225 = vmax.f32 %v3100, 0.0
        %v3226 = vmax.f32 %v3103, 0.0
        %v3227 = vmax.f32 %v3105, 0.0
        %v3228 = vmax.f32 %v3108, 0.0
        %v3229 = vmax.f32 %v3110, 0.0
        %v3230 = vmax.f32 %v3113, 0.0
        %v3231 = vmax.f32 %v3115, 0.0
        %v3232 = vmax.f32 %v3118, 0.0
        %v3233 = vmax.f32 %v3120, 0.0
        %v3234 = vmax.f32 %v3123, 0.0
        %v3235 = vmax.f32 %v3125, 0.0
        %v3236 = vmax.f32 %v3128, 0.0
        %v3237 = vmax.f32 %v3130, 0.0
        %v3238 = vmax.f32 %v3133, 0.0
        %v3239 = vmax.f32 %v3135, 0.0
        %v3240 = vmax.f32 %v3138, 0.0
        %v3241 = vmax.f32 %v3140, 0.0
        %v3242 = vmax.f32 %v3143, 0.0
        %v3243 = vmax.f32 %v3145, 0.0
        %v3244 = vmax.f32 %v3148, 0.0
        %v3245 = vmax.f32 %v3150, 0.0
        %v3246 = vmax.f32 %v3153, 0.0
        %v3247 = vmax.f32 %v3155, 0.0
        %v3248 = vmax.f32 %v3158, 0.0
        %v3249 = vmax.f32 %v3160, 0.0
        %v3250 = vmax.f32 %v3163, 0.0
        %v3251 = vmax.f32 %v3165, 0.0
        %v3252 = vmax.f32 %v3168, 0.0
        %v3253 = vmax.f32 %v3170, 0.0
        %v3254 = vmax.f32 %v3173, 0.0
        %v3255 = vmax.f32 %v3175, 0.0
        %v3256 = vmax.f32 %v3178, 0.0
        %v3257 = vmax.f32 %v3180, 0.0
        %v3258 = vmax.f32 %v3183, 0.0
        %v3259 = vmax.f32 %v3185, 0.0
        %v3260 = vmax.f32 %v3188, 0.0
        %v3261 = vmax.f32 %v3190, 0.0
        %v3262 = vmax.f32 %v3193, 0.0
        %v3263 = vmax.f32 %v3195, 0.0
        %v3264 = vmax.f32 %v3198, 0.0
        %v3265 = vmax.f32 %v3200, 0.0
        %v3266 = vpack.c.bf16 %v3203, %v3202
        %v3267 = vpack.c.bf16 %v3205, %v3204
        %v3268 = vpack.c.bf16 %v3207, %v3206
        %v3269 = vpack.c.bf16 %v3209, %v3208
        %v3270 = vpack.c.bf16 %v3211, %v3210
        %v3271 = vpack.c.bf16 %v3213, %v3212
        %v3272 = vpack.c.bf16 %v3215, %v3214
        %v3273 = vpack.c.bf16 %v3217, %v3216
        %v3274 = vpack.c.bf16 %v3219, %v3218
        %v3275 = vpack.c.bf16 %v3221, %v3220
        %v3276 = vpack.c.bf16 %v3223, %v3222
        %v3277 = vpack.c.bf16 %v3225, %v3224
        %v3278 = vpack.c.bf16 %v3227, %v3226
        %v3279 = vpack.c.bf16 %v3229, %v3228
        %v3280 = vpack.c.bf16 %v3231, %v3230
        %v3281 = vpack.c.bf16 %v3233, %v3232
        %v3282 = vpack.c.bf16 %v3235, %v3234
        %v3283 = vpack.c.bf16 %v3237, %v3236
        %v3284 = vpack.c.bf16 %v3239, %v3238
        %v3285 = vpack.c.bf16 %v3241, %v3240
        %v3286 = vpack.c.bf16 %v3243, %v3242
        %v3287 = vpack.c.bf16 %v3245, %v3244
        %v3288 = vpack.c.bf16 %v3247, %v3246
        %v3289 = vpack.c.bf16 %v3249, %v3248
        %v3290 = vpack.c.bf16 %v3251, %v3250
        %v3291 = vpack.c.bf16 %v3253, %v3252
        %v3292 = vpack.c.bf16 %v3255, %v3254
        %v3293 = vpack.c.bf16 %v3257, %v3256
        %v3294 = vpack.c.bf16 %v3259, %v3258
        %v3295 = vpack.c.bf16 %v3261, %v3260
        %v3296 = vpack.c.bf16 %v3263, %v3262
        %v3297 = vpack.c.bf16 %v3265, %v3264
        %s3298 = scalar_lea.vmem %s2, 320
        %v3299 = vld [vmem:[%s3298] sm:$0xf]
        %v3300 = vld [vmem:[%s3298 + $0x4] sm:$0xf]
        %v3301 = vld [vmem:[%s3298 + $0x8] sm:$0xf]
        %v3302 = vld [vmem:[%s3298 + $0xc] sm:$0xf]
        %v3303 = vld [vmem:[%s3298 + $0x10] sm:$0xf]
        %v3304 = vld [vmem:[%s3298 + $0x14] sm:$0xf]
        %v3305 = vld [vmem:[%s3298 + $0x18] sm:$0xf]
        %v3306 = vld [vmem:[%s3298 + $0x1c] sm:$0xf]
        %v3307 = vld [vmem:[%s3298 + $0x20] sm:$0xf]
        %v3308 = vld [vmem:[%s3298 + $0x24] sm:$0xf]
        %v3309 = vld [vmem:[%s3298 + $0x28] sm:$0xf]
        %v3310 = vld [vmem:[%s3298 + $0x2c] sm:$0xf]
        %v3311 = vld [vmem:[%s3298 + $0x30] sm:$0xf]
        %v3312 = vld [vmem:[%s3298 + $0x34] sm:$0xf]
        %v3313 = vld [vmem:[%s3298 + $0x38] sm:$0xf]
        %v3314 = vld [vmem:[%s3298 + $0x3c] sm:$0xf]
        %v3315 = vld [vmem:[%s3 + $0x6] sm:$0x1]
        %v3316 = vperm.slane %v3315, 0
        %v3333 = vunpack.c.l.b16 %v3299
        %v3334 = vunpack.c.l.b16 %v3300
        %v3335 = vunpack.c.l.b16 %v3301
        %v3336 = vunpack.c.l.b16 %v3302
        %v3337 = vunpack.c.l.b16 %v3303
        %v3338 = vunpack.c.l.b16 %v3304
        %v3339 = vunpack.c.l.b16 %v3305
        %v3340 = vunpack.c.l.b16 %v3306
        %v3341 = vunpack.c.l.b16 %v3307
        %v3342 = vunpack.c.l.b16 %v3308
        %v3343 = vunpack.c.l.b16 %v3309
        %v3344 = vunpack.c.l.b16 %v3310
        %v3345 = vunpack.c.l.b16 %v3311
        %v3346 = vunpack.c.l.b16 %v3312
        %v3347 = vunpack.c.l.b16 %v3313
        %v3348 = vunpack.c.l.b16 %v3314
        %v3349 = vpack.c.b16 %v3334, %v3333
        %v3350 = vpack.c.b16 %v3336, %v3335
        %v3351 = vpack.c.b16 %v3338, %v3337
        %v3352 = vpack.c.b16 %v3340, %v3339
        %v3353 = vpack.c.b16 %v3342, %v3341
        %v3354 = vpack.c.b16 %v3344, %v3343
        %v3355 = vpack.c.b16 %v3346, %v3345
        %v3356 = vpack.c.b16 %v3348, %v3347
        %3365 = vmatpush.bf16.msra.mxu0 %v3356
        %3366 = vmatpush.bf16.msra.mxu0 %v3355
        %3367 = vmatpush.bf16.msra.mxu0 %v3354
        %3368 = vmatpush.bf16.msra.mxu0 %v3353
        %3369 = vmatpush.bf16.msra.mxu0 %v3352
        %3370 = vmatpush.bf16.msra.mxu0 %v3351
        %3371 = vmatpush.bf16.msra.mxu0 %v3350
        %3372 = vmatpush.bf16.msra.mxu0 %v3349
        %3373 = vmatmul.bf16.gmra.mxu0 %v3266
        %v3374 = vpop.f32.mrf.mxu0
        %v3375 = vadd.f32 %v3316, %v3374
        %v3376 = vpop.f32.mrf.mxu0
        %v3377 = vadd.f32 %v3316, %v3376
        %3378 = vmatmul.bf16.gmra.mxu0 %v3267
        %v3379 = vpop.f32.mrf.mxu0
        %v3380 = vadd.f32 %v3316, %v3379
        %v3381 = vpop.f32.mrf.mxu0
        %v3382 = vadd.f32 %v3316, %v3381
        %3383 = vmatmul.bf16.gmra.mxu0 %v3268
        %v3384 = vpop.f32.mrf.mxu0
        %v3385 = vadd.f32 %v3316, %v3384
        %v3386 = vpop.f32.mrf.mxu0
        %v3387 = vadd.f32 %v3316, %v3386
        %3388 = vmatmul.bf16.gmra.mxu0 %v3269
        %v3389 = vpop.f32.mrf.mxu0
        %v3390 = vadd.f32 %v3316, %v3389
        %v3391 = vpop.f32.mrf.mxu0
        %v3392 = vadd.f32 %v3316, %v3391
        %3393 = vmatmul.bf16.gmra.mxu0 %v3270
        %v3394 = vpop.f32.mrf.mxu0
        %v3395 = vadd.f32 %v3316, %v3394
        %v3396 = vpop.f32.mrf.mxu0
        %v3397 = vadd.f32 %v3316, %v3396
        %3398 = vmatmul.bf16.gmra.mxu0 %v3271
        %v3399 = vpop.f32.mrf.mxu0
        %v3400 = vadd.f32 %v3316, %v3399
        %v3401 = vpop.f32.mrf.mxu0
        %v3402 = vadd.f32 %v3316, %v3401
        %3403 = vmatmul.bf16.gmra.mxu0 %v3272
        %v3404 = vpop.f32.mrf.mxu0
        %v3405 = vadd.f32 %v3316, %v3404
        %v3406 = vpop.f32.mrf.mxu0
        %v3407 = vadd.f32 %v3316, %v3406
        %3408 = vmatmul.bf16.gmra.mxu0 %v3273
        %v3409 = vpop.f32.mrf.mxu0
        %v3410 = vadd.f32 %v3316, %v3409
        %v3411 = vpop.f32.mrf.mxu0
        %v3412 = vadd.f32 %v3316, %v3411
        %3413 = vmatmul.bf16.gmra.mxu0 %v3274
        %v3414 = vpop.f32.mrf.mxu0
        %v3415 = vadd.f32 %v3316, %v3414
        %v3416 = vpop.f32.mrf.mxu0
        %v3417 = vadd.f32 %v3316, %v3416
        %3418 = vmatmul.bf16.gmra.mxu0 %v3275
        %v3419 = vpop.f32.mrf.mxu0
        %v3420 = vadd.f32 %v3316, %v3419
        %v3421 = vpop.f32.mrf.mxu0
        %v3422 = vadd.f32 %v3316, %v3421
        %3423 = vmatmul.bf16.gmra.mxu0 %v3276
        %v3424 = vpop.f32.mrf.mxu0
        %v3425 = vadd.f32 %v3316, %v3424
        %v3426 = vpop.f32.mrf.mxu0
        %v3427 = vadd.f32 %v3316, %v3426
        %3428 = vmatmul.bf16.gmra.mxu0 %v3277
        %v3429 = vpop.f32.mrf.mxu0
        %v3430 = vadd.f32 %v3316, %v3429
        %v3431 = vpop.f32.mrf.mxu0
        %v3432 = vadd.f32 %v3316, %v3431
        %3433 = vmatmul.bf16.gmra.mxu0 %v3278
        %v3434 = vpop.f32.mrf.mxu0
        %v3435 = vadd.f32 %v3316, %v3434
        %v3436 = vpop.f32.mrf.mxu0
        %v3437 = vadd.f32 %v3316, %v3436
        %3438 = vmatmul.bf16.gmra.mxu0 %v3279
        %v3439 = vpop.f32.mrf.mxu0
        %v3440 = vadd.f32 %v3316, %v3439
        %v3441 = vpop.f32.mrf.mxu0
        %v3442 = vadd.f32 %v3316, %v3441
        %3443 = vmatmul.bf16.gmra.mxu0 %v3280
        %v3444 = vpop.f32.mrf.mxu0
        %v3445 = vadd.f32 %v3316, %v3444
        %v3446 = vpop.f32.mrf.mxu0
        %v3447 = vadd.f32 %v3316, %v3446
        %3448 = vmatmul.bf16.gmra.mxu0 %v3281
        %v3449 = vpop.f32.mrf.mxu0
        %v3450 = vadd.f32 %v3316, %v3449
        %v3451 = vpop.f32.mrf.mxu0
        %v3452 = vadd.f32 %v3316, %v3451
        %3453 = vmatmul.bf16.gmra.mxu0 %v3282
        %v3454 = vpop.f32.mrf.mxu0
        %v3455 = vadd.f32 %v3316, %v3454
        %v3456 = vpop.f32.mrf.mxu0
        %v3457 = vadd.f32 %v3316, %v3456
        %3458 = vmatmul.bf16.gmra.mxu0 %v3283
        %v3459 = vpop.f32.mrf.mxu0
        %v3460 = vadd.f32 %v3316, %v3459
        %v3461 = vpop.f32.mrf.mxu0
        %v3462 = vadd.f32 %v3316, %v3461
        %3463 = vmatmul.bf16.gmra.mxu0 %v3284
        %v3464 = vpop.f32.mrf.mxu0
        %v3465 = vadd.f32 %v3316, %v3464
        %v3466 = vpop.f32.mrf.mxu0
        %v3467 = vadd.f32 %v3316, %v3466
        %3468 = vmatmul.bf16.gmra.mxu0 %v3285
        %v3469 = vpop.f32.mrf.mxu0
        %v3470 = vadd.f32 %v3316, %v3469
        %v3471 = vpop.f32.mrf.mxu0
        %v3472 = vadd.f32 %v3316, %v3471
        %3473 = vmatmul.bf16.gmra.mxu0 %v3286
        %v3474 = vpop.f32.mrf.mxu0
        %v3475 = vadd.f32 %v3316, %v3474
        %v3476 = vpop.f32.mrf.mxu0
        %v3477 = vadd.f32 %v3316, %v3476
        %3478 = vmatmul.bf16.gmra.mxu0 %v3287
        %v3479 = vpop.f32.mrf.mxu0
        %v3480 = vadd.f32 %v3316, %v3479
        %v3481 = vpop.f32.mrf.mxu0
        %v3482 = vadd.f32 %v3316, %v3481
        %3483 = vmatmul.bf16.gmra.mxu0 %v3288
        %v3484 = vpop.f32.mrf.mxu0
        %v3485 = vadd.f32 %v3316, %v3484
        %v3486 = vpop.f32.mrf.mxu0
        %v3487 = vadd.f32 %v3316, %v3486
        %3488 = vmatmul.bf16.gmra.mxu0 %v3289
        %v3489 = vpop.f32.mrf.mxu0
        %v3490 = vadd.f32 %v3316, %v3489
        %v3491 = vpop.f32.mrf.mxu0
        %v3492 = vadd.f32 %v3316, %v3491
        %3493 = vmatmul.bf16.gmra.mxu0 %v3290
        %v3494 = vpop.f32.mrf.mxu0
        %v3495 = vadd.f32 %v3316, %v3494
        %v3496 = vpop.f32.mrf.mxu0
        %v3497 = vadd.f32 %v3316, %v3496
        %3498 = vmatmul.bf16.gmra.mxu0 %v3291
        %v3499 = vpop.f32.mrf.mxu0
        %v3500 = vadd.f32 %v3316, %v3499
        %v3501 = vpop.f32.mrf.mxu0
        %v3502 = vadd.f32 %v3316, %v3501
        %3503 = vmatmul.bf16.gmra.mxu0 %v3292
        %v3504 = vpop.f32.mrf.mxu0
        %v3505 = vadd.f32 %v3316, %v3504
        %v3506 = vpop.f32.mrf.mxu0
        %v3507 = vadd.f32 %v3316, %v3506
        %3508 = vmatmul.bf16.gmra.mxu0 %v3293
        %v3509 = vpop.f32.mrf.mxu0
        %v3510 = vadd.f32 %v3316, %v3509
        %v3511 = vpop.f32.mrf.mxu0
        %v3512 = vadd.f32 %v3316, %v3511
        %3513 = vmatmul.bf16.gmra.mxu0 %v3294
        %v3514 = vpop.f32.mrf.mxu0
        %v3515 = vadd.f32 %v3316, %v3514
        %v3516 = vpop.f32.mrf.mxu0
        %v3517 = vadd.f32 %v3316, %v3516
        %3518 = vmatmul.bf16.gmra.mxu0 %v3295
        %v3519 = vpop.f32.mrf.mxu0
        %v3520 = vadd.f32 %v3316, %v3519
        %v3521 = vpop.f32.mrf.mxu0
        %v3522 = vadd.f32 %v3316, %v3521
        %3523 = vmatmul.bf16.gmra.mxu0 %v3296
        %v3524 = vpop.f32.mrf.mxu0
        %v3525 = vadd.f32 %v3316, %v3524
        %v3526 = vpop.f32.mrf.mxu0
        %v3527 = vadd.f32 %v3316, %v3526
        %3528 = vmatmul.bf16.gmra.mxu0 %v3297
        %v3529 = vpop.f32.mrf.mxu0
        %v3530 = vadd.f32 %v3316, %v3529
        %v3531 = vpop.f32.mrf.mxu0
        %v3532 = vadd.f32 %v3316, %v3531
        %3533 = vdwg.mxu0
        %v3534 = vmax.f32 %v3375, 0.0
        %v3535 = vmax.f32 %v3377, 0.0
        %v3536 = vmax.f32 %v3380, 0.0
        %v3537 = vmax.f32 %v3382, 0.0
        %v3538 = vmax.f32 %v3385, 0.0
        %v3539 = vmax.f32 %v3387, 0.0
        %v3540 = vmax.f32 %v3390, 0.0
        %v3541 = vmax.f32 %v3392, 0.0
        %v3542 = vmax.f32 %v3395, 0.0
        %v3543 = vmax.f32 %v3397, 0.0
        %v3544 = vmax.f32 %v3400, 0.0
        %v3545 = vmax.f32 %v3402, 0.0
        %v3546 = vmax.f32 %v3405, 0.0
        %v3547 = vmax.f32 %v3407, 0.0
        %v3548 = vmax.f32 %v3410, 0.0
        %v3549 = vmax.f32 %v3412, 0.0
        %v3550 = vmax.f32 %v3415, 0.0
        %v3551 = vmax.f32 %v3417, 0.0
        %v3552 = vmax.f32 %v3420, 0.0
        %v3553 = vmax.f32 %v3422, 0.0
        %v3554 = vmax.f32 %v3425, 0.0
        %v3555 = vmax.f32 %v3427, 0.0
        %v3556 = vmax.f32 %v3430, 0.0
        %v3557 = vmax.f32 %v3432, 0.0
        %v3558 = vmax.f32 %v3435, 0.0
        %v3559 = vmax.f32 %v3437, 0.0
        %v3560 = vmax.f32 %v3440, 0.0
        %v3561 = vmax.f32 %v3442, 0.0
        %v3562 = vmax.f32 %v3445, 0.0
        %v3563 = vmax.f32 %v3447, 0.0
        %v3564 = vmax.f32 %v3450, 0.0
        %v3565 = vmax.f32 %v3452, 0.0
        %v3566 = vmax.f32 %v3455, 0.0
        %v3567 = vmax.f32 %v3457, 0.0
        %v3568 = vmax.f32 %v3460, 0.0
        %v3569 = vmax.f32 %v3462, 0.0
        %v3570 = vmax.f32 %v3465, 0.0
        %v3571 = vmax.f32 %v3467, 0.0
        %v3572 = vmax.f32 %v3470, 0.0
        %v3573 = vmax.f32 %v3472, 0.0
        %v3574 = vmax.f32 %v3475, 0.0
        %v3575 = vmax.f32 %v3477, 0.0
        %v3576 = vmax.f32 %v3480, 0.0
        %v3577 = vmax.f32 %v3482, 0.0
        %v3578 = vmax.f32 %v3485, 0.0
        %v3579 = vmax.f32 %v3487, 0.0
        %v3580 = vmax.f32 %v3490, 0.0
        %v3581 = vmax.f32 %v3492, 0.0
        %v3582 = vmax.f32 %v3495, 0.0
        %v3583 = vmax.f32 %v3497, 0.0
        %v3584 = vmax.f32 %v3500, 0.0
        %v3585 = vmax.f32 %v3502, 0.0
        %v3586 = vmax.f32 %v3505, 0.0
        %v3587 = vmax.f32 %v3507, 0.0
        %v3588 = vmax.f32 %v3510, 0.0
        %v3589 = vmax.f32 %v3512, 0.0
        %v3590 = vmax.f32 %v3515, 0.0
        %v3591 = vmax.f32 %v3517, 0.0
        %v3592 = vmax.f32 %v3520, 0.0
        %v3593 = vmax.f32 %v3522, 0.0
        %v3594 = vmax.f32 %v3525, 0.0
        %v3595 = vmax.f32 %v3527, 0.0
        %v3596 = vmax.f32 %v3530, 0.0
        %v3597 = vmax.f32 %v3532, 0.0
        %v3598 = vld [vmem:[%s4] sm:$0xf]
        %v3599 = vpack.c.bf16 %v3535, %v3534
        %v3600 = vpack.c.bf16 %v3537, %v3536
        %v3601 = vpack.c.bf16 %v3539, %v3538
        %v3602 = vpack.c.bf16 %v3541, %v3540
        %v3603 = vpack.c.bf16 %v3543, %v3542
        %v3604 = vpack.c.bf16 %v3545, %v3544
        %v3605 = vpack.c.bf16 %v3547, %v3546
        %v3606 = vpack.c.bf16 %v3549, %v3548
        %v3607 = vpack.c.bf16 %v3551, %v3550
        %v3608 = vpack.c.bf16 %v3553, %v3552
        %v3609 = vpack.c.bf16 %v3555, %v3554
        %v3610 = vpack.c.bf16 %v3557, %v3556
        %v3611 = vpack.c.bf16 %v3559, %v3558
        %v3612 = vpack.c.bf16 %v3561, %v3560
        %v3613 = vpack.c.bf16 %v3563, %v3562
        %v3614 = vpack.c.bf16 %v3565, %v3564
        %v3615 = vpack.c.bf16 %v3567, %v3566
        %v3616 = vpack.c.bf16 %v3569, %v3568
        %v3617 = vpack.c.bf16 %v3571, %v3570
        %v3618 = vpack.c.bf16 %v3573, %v3572
        %v3619 = vpack.c.bf16 %v3575, %v3574
        %v3620 = vpack.c.bf16 %v3577, %v3576
        %v3621 = vpack.c.bf16 %v3579, %v3578
        %v3622 = vpack.c.bf16 %v3581, %v3580
        %v3623 = vpack.c.bf16 %v3583, %v3582
        %v3624 = vpack.c.bf16 %v3585, %v3584
        %v3625 = vpack.c.bf16 %v3587, %v3586
        %v3626 = vpack.c.bf16 %v3589, %v3588
        %v3627 = vpack.c.bf16 %v3591, %v3590
        %v3628 = vpack.c.bf16 %v3593, %v3592
        %v3629 = vpack.c.bf16 %v3595, %v3594
        %v3630 = vpack.c.bf16 %v3597, %v3596
        %3631 = vmatpush.bf16.xpose.msra.mxu0 %v3606
        %3632 = vmatpush.bf16.xpose.msra.mxu0 %v3605
        %3633 = vmatpush.bf16.xpose.msra.mxu0 %v3604
        %3634 = vmatpush.bf16.xpose.msra.mxu0 %v3603
        %3635 = vmatpush.bf16.xpose.msra.mxu0 %v3602
        %3636 = vmatpush.bf16.xpose.msra.mxu0 %v3601
        %3637 = vmatpush.bf16.xpose.msra.mxu0 %v3600
        %3638 = vmatpush.bf16.xpose.msra.mxu0 %v3599
        %3639 = vmatmul.bf16.gmra.mxu0 %v3598
        %v3640 = vpop.f32.mrf.mxu0
        %v3641 = vadd.f32 0.0, %v3640
        %v3642 = vpop.f32.mrf.mxu0
        %3643 = vdwg.mxu0
        %3644 = vmatpush.bf16.xpose.msra.mxu0 %v3614
        %3645 = vmatpush.bf16.xpose.msra.mxu0 %v3613
        %3646 = vmatpush.bf16.xpose.msra.mxu0 %v3612
        %3647 = vmatpush.bf16.xpose.msra.mxu0 %v3611
        %3648 = vmatpush.bf16.xpose.msra.mxu0 %v3610
        %3649 = vmatpush.bf16.xpose.msra.mxu0 %v3609
        %3650 = vmatpush.bf16.xpose.msra.mxu0 %v3608
        %3651 = vmatpush.bf16.xpose.msra.mxu0 %v3607
        %3652 = vmatmul.bf16.gmra.mxu0 %v3598
        %v3653 = vpop.f32.mrf.mxu0
        %v3654 = vadd.f32 0.0, %v3653
        %v3655 = vpop.f32.mrf.mxu0
        %3656 = vdwg.mxu0
        %3657 = vmatpush.bf16.xpose.msra.mxu0 %v3622
        %3658 = vmatpush.bf16.xpose.msra.mxu0 %v3621
        %3659 = vmatpush.bf16.xpose.msra.mxu0 %v3620
        %3660 = vmatpush.bf16.xpose.msra.mxu0 %v3619
        %3661 = vmatpush.bf16.xpose.msra.mxu0 %v3618
        %3662 = vmatpush.bf16.xpose.msra.mxu0 %v3617
        %3663 = vmatpush.bf16.xpose.msra.mxu0 %v3616
        %3664 = vmatpush.bf16.xpose.msra.mxu0 %v3615
        %3665 = vmatmul.bf16.gmra.mxu0 %v3598
        %v3666 = vpop.f32.mrf.mxu0
        %v3667 = vadd.f32 0.0, %v3666
        %v3668 = vpop.f32.mrf.mxu0
        %3669 = vdwg.mxu0
        %3670 = vmatpush.bf16.xpose.msra.mxu0 %v3630
        %3671 = vmatpush.bf16.xpose.msra.mxu0 %v3629
        %3672 = vmatpush.bf16.xpose.msra.mxu0 %v3628
        %3673 = vmatpush.bf16.xpose.msra.mxu0 %v3627
        %3674 = vmatpush.bf16.xpose.msra.mxu0 %v3626
        %3675 = vmatpush.bf16.xpose.msra.mxu0 %v3625
        %3676 = vmatpush.bf16.xpose.msra.mxu0 %v3624
        %3677 = vmatpush.bf16.xpose.msra.mxu0 %v3623
        %3678 = vmatmul.bf16.gmra.mxu0 %v3598
        %v3679 = vpop.f32.mrf.mxu0
        %v3680 = vadd.f32 0.0, %v3679
        %v3681 = vpop.f32.mrf.mxu0
        %3682 = vdwg.mxu0
        %v3683 = vld [vmem:[#allocation2] sm:$0x1]
        %3685 = vset.pattern.permute.xlu0 0
        %3686 = vperm.xlu0 %3685, %v3683
        %v3687 = vpop.permute.xlu0 %3686
        %v3689 = vperm.slane %v3687, 0
        %v3690 = vadd.f32 %v3641, %v3689
        %v3691 = vadd.f32 %v3654, %v3689
        %v3692 = vadd.f32 %v3667, %v3689
        %v3693 = vadd.f32 %v3680, %v3689
        %v3694 = vtanh.pop %v3690
        %v3695 = vtanh.pop %v3691
        %v3696 = vtanh.pop %v3692
        %v3697 = vtanh.pop %v3693
        %v3702 = vrot.slane %v3695, 7
        %v3703 = vrot.slane %v3696, 6
        %v3704 = vrot.slane %v3697, 5
        %vm3705 = vcmask 1040384
        %v3706 = vsel %vm3705, %v3694, %v3702
        %vm3707 = vcmask 1042434
        %v3708 = vsel %vm3707, %v3703, %v3704
        %vm3709 = vcmask 1041408
        %v3710 = vsel %vm3709, %v3706, %v3708
        %v3712 = vlaneseq
        %vm3713 = vcmp.ge.s32.totalorder %v3712, 0
        %vm3714 = vcmp.lt.s32.totalorder %v3712, 512
        %vm3715 = vmand %vm3713, %vm3714
        %3716 = vst.msk [vmem:[%s247] sm:$0xf] %vm3715, %v3710
        %s3717 = sand.u32 %s161, 1
        %s3718 = scalar_lea.sflag [#allocation4], %s3717
        %s3719 = sand.u32 %s161, 1
        %s3720 = smul.addr %s3719, 4
        %s3721 = scalar_lea.vmem [#allocation3], %s3720
        // Predicated region
        $region45: #{tpu_custom_call.1} parent=43 // pred_check
          %p3722 = pneg %p171
        $region46: #{tpu_custom_call.1} parent=43 // pred_check_branch
          %3724 = sbr.rel (%p3722) target = $region48
        $region47: #{tpu_custom_call.1} parent=43 // pred_region
          %s3725 = smul.u32 4, %s22
          %3727 = vsyncadd %s3718, 0
          %s3728 = scalar_lea.hbm %s6, %s3725
          %s3730 = sshll.u32 %s3721, 4
          %s3731 = int_to_ptr.vmem [resolvable:$true] %s3730
          %s3732 = sshll.u32 %s3728, 4
          %s3733 = int_to_ptr.hbm [resolvable:$true] %s3732
          %3735 = dma.vmem_to_hbm [thread:$0]  %s3731, 64, %s3733, %s3718
        $region48: #{tpu_custom_call.1} parent=43 // pred_fallthru
          _
      $region44: #{tpu_custom_call.1} parent=5 // pred_fallthru
        _
      %p3736 = scmp.le.s32.totalorder 2, %s17
      // Predicated region
      $region49: #{tpu_custom_call.1} parent=5 // pred_check
        %p3737 = pneg %p3736
      $region50: #{tpu_custom_call.1} parent=5 // pred_check_branch
        %3739 = sbr.rel (%p3737) target = $region52
      $region51: #{tpu_custom_call.1} parent=5 // pred_region
        %s3740 = ssub.s32 %s17, 2
        // Predicated region
        $region53: #{tpu_custom_call.1} parent=51 // pred_check
          %p3741 = pneg %p177
        $region54: #{tpu_custom_call.1} parent=51 // pred_check_branch
          %3743 = sbr.rel (%p3741) target = $region56
        $region55: #{tpu_custom_call.1} parent=51 // pred_region
          %s3744 = sand.u32 %s162, 1
          %s3745 = scalar_lea.sflag [#allocation4], %s3744
          %s3746 = sand.u32 %s162, 1
          %s3747 = smul.addr %s3746, 4
          %s3748 = scalar_lea.vmem [#allocation3], %s3747
          %3750 = dma.done %s3745, 64
        $region56: #{tpu_custom_call.1} parent=51 // pred_fallthru
          _
      $region52: #{tpu_custom_call.1} parent=5 // pred_fallthru
        _
    $region6: #{tpu_custom_call.1} parent=1 // loop_footer
      %s21 = sadd.s32 1, %s17
    $region7: #{tpu_custom_call.1} parent=1 // loop_footer_branch
      %16 = sbr.rel target = $region3
    $region8: #{tpu_custom_call.1} parent=1 // loop_exit
      _
    %3751 = vsyncpa [#allocation4], 1
    %s3752 = scalar_lea.sflag [#allocation4], 1
    %3753 = vsyncpa %s3752, 1

</llo_original>
